<compile_context>
chip_gen: v6e
topology: v6e:2x2x1
jax: 0.10.0
libtpu: 0.0.40
codegen_flags: <defaults>
</compile_context>

<pallas_src>
import jax
import jax.numpy as jnp
from jax.experimental import pallas as pl
from jax.experimental.pallas import tpu as pltpu


# --------------------------------------------------------------------------
# Kernel
# --------------------------------------------------------------------------
def ncc_kernel(hidden_ref, mask_ref, labels_ref, w_ref, b_ref,
               scores_ref, reps_ref, nll_ref,
               acc_sum_ref, acc_cnt_ref):
    s = pl.program_id(1)

    @pl.when(s == 0)
    def _init():
        acc_sum_ref[...] = jnp.zeros_like(acc_sum_ref)
        acc_cnt_ref[...] = jnp.zeros_like(acc_cnt_ref)

    hidden = hidden_ref[...]          # (TB, TS, H), input dtype
    mask_col = mask_ref[...]          # (TB, TS, 1), input dtype (0/1 values)

    # ---- masked sum over this sequence tile on the VPU -------------------
    # multiply in the input dtype (bf16 VALU on v6e/v7x), accumulate in f32.
    acc_sum_ref[...] += jnp.sum(hidden * mask_col, axis=1, dtype=jnp.float32)
    acc_cnt_ref[...] += jnp.sum(mask_col, axis=1, dtype=jnp.float32)

    @pl.when(s == pl.num_programs(1) - 1)
    def _finalize():
        # mean pooling: clamp(count, 1e-9) as in the torch reference (EUP recip)
        inv_denom = pl.reciprocal(jnp.maximum(acc_cnt_ref[...], 1e-9))
        reps = acc_sum_ref[...] * inv_denom                          # (TB, H) f32

        # F.normalize(p=2, dim=1, eps=1e-12)  (EUP rsqrt)
        sumsq = jnp.sum(reps * reps, axis=1, keepdims=True)
        reps = reps * jax.lax.rsqrt(jnp.maximum(sumsq, 1e-24))
        reps_ref[...] = reps.astype(reps_ref.dtype)

        # classifier on the MXU; padded classes carry a -1e30 bias.
        scores = jnp.dot(reps.astype(w_ref.dtype), w_ref[...],
                         preferred_element_type=jnp.float32) + b_ref[...]
        scores_ref[...] = scores                                     # (TB, C_pad)

        # per-sample cross-entropy NLL; batch mean is taken in the wrapper.
        labels = labels_ref[...]                                     # (TB, 1) i32
        onehot = (labels == jax.lax.broadcasted_iota(
            jnp.int32, scores.shape, 1)).astype(jnp.float32)
        m = jnp.max(scores, axis=1, keepdims=True)
        lse = m + jnp.log(jnp.sum(jnp.exp(scores - m), axis=1, keepdims=True))
        picked = jnp.sum(onehot * scores, axis=1, keepdims=True)
        nll_ref[...] = jnp.broadcast_to(lse - picked, nll_ref.shape)  # lane-dense


# --------------------------------------------------------------------------
# Wrapper helpers
# --------------------------------------------------------------------------
def _round_up(x, m):
    return ((x + m - 1) // m) * m


def _round_down(x, m):
    return (x // m) * m


def _vmem_budget():
    """Generation-aware scoped-VMEM budget (bytes) and compiler limit."""
    cap = 64 * 1024 * 1024                       # conservative fallback (v7x per-TC)
    try:
        info = pltpu.get_tpu_info()
        cap = int(getattr(info, "vmem_capacity_bytes", None) or cap)
    except Exception:
        pass
    budget = int(cap * 0.70)                     # what the tile sizer may use
    limit = max(32 * 1024 * 1024,
                min(int(cap * 0.85), cap - 4 * 1024 * 1024))
    return budget, limit


def _auto_tiles(B, S, H, dt_bytes, C_pad, block_b, block_s, budget):
    """Pick (tb, B_pad, ts, S_pad) under the VMEM budget, avoiding padding of
    the dominant hidden tensor whenever possible."""
    # resident classifier weights (constant-index blocks, double-buffered)
    w_resident = 2 * (H * C_pad * dt_bytes + 8 * C_pad * 4)

    def fits(tb, ts):
        tb8 = _round_up(tb, 8)
        hidden_blk = tb * ts * H * dt_bytes
        mask_blk = tb * _round_up(ts, 8) * 128 * dt_bytes        # (ts,1) lane-padded
        labels_blk = tb8 * 128 * 4
        out_blk = tb8 * (C_pad + _round_up(H, 128) + 128) * 4
        scratch = tb8 * (_round_up(H, 128) + 128) * 4
        inter = 2 * tb * ts * H * 4                              # elementwise temps
        need = (2 * (hidden_blk + mask_blk + labels_blk + out_blk)
                + scratch + w_resident + inter)
        return need <= budget

    # --- batch tile: prefer B itself or a multiple-of-8 divisor of B --------
    cap_b = max(8, min(block_b, B))
    if B <= cap_b:
        tb, B_pad = B, B
    else:
        tb = next((t for t in range(_round_down(cap_b, 8), 7, -8)
                   if B % t == 0), None)
        if tb is None:
            B_pad = _round_up(B, 8)
            tb = next(t for t in range(_round_down(cap_b, 8), 7, -8)
                      if B_pad % t == 0)
        else:
            B_pad = B

    # --- sequence tile: full S if it fits, else multiples of 128 ------------
    cap_s = S if block_s is None else max(128, min(S, _round_down(block_s, 128) or 128))
    if cap_s >= S and fits(tb, S):
        ts, S_pad = S, S
    else:
        hi = _round_down(min(cap_s, S), 128)
        divisors = [d for d in range(hi, 127, -128) if S % d == 0]
        ts = next((d for d in divisors if fits(tb, d)), None)
        if ts is None:
            ts = next((d for d in range(hi, 127, -128) if fits(tb, d)), 128)
        S_pad = _round_up(S, ts)
        # last resort: shrink the batch tile (may require padding B)
        while not fits(tb, ts) and tb > 8:
            tb = max(8, _round_down(max(8, tb // 2), 8))
            B_pad = _round_up(B, tb)
    return tb, B_pad, ts, S_pad


# --------------------------------------------------------------------------
# Forward wrapper (mirrors DenseModelforNCC.forward given last_hidden_state)
# --------------------------------------------------------------------------
def dense_ncc_forward(last_hidden_state, attention_mask, labels,
                      w_cls_t, b_cls, *, block_b=128, block_s=None):
    """Returns (loss, scores, q_reps) like DenseOutput."""
    B, S, H = last_hidden_state.shape
    Hw, C = w_cls_t.shape
    assert Hw == H
    dt = last_hidden_state.dtype
    dt_bytes = jnp.dtype(dt).itemsize

    # lane-dense padded class dimension
    C_pad = max(128, _round_up(C, 128))

    budget, vmem_limit = _vmem_budget()
    tb, B_pad, ts, S_pad = _auto_tiles(B, S, H, dt_bytes, C_pad,
                                       block_b, block_s, budget)
    nb, ns = B_pad // tb, S_pad // ts

    # ---- operand prep -----------------------------------------------------
    # The dominant (B, S, H) tensor is only copied when padding is unavoidable
    # (ragged B with no usable divisor, or a sequence split that does not
    # divide S); in the common case it is passed through untouched.
    hidden = last_hidden_state
    mask = attention_mask.astype(dt)
    if B_pad != B or S_pad != S:
        hidden = jnp.pad(hidden, ((0, B_pad - B), (0, S_pad - S), (0, 0)))
        mask = jnp.pad(mask, ((0, B_pad - B), (0, S_pad - S)))
    mask_col = mask.reshape(B_pad, S_pad, 1)        # consumed as (tb, ts, 1) blocks

    labels2 = labels.astype(jnp.int32)
    if B_pad != B:
        labels2 = jnp.pad(labels2, ((0, B_pad - B),))
    labels2 = labels2.reshape(B_pad, 1)

    w_pad = jnp.pad(w_cls_t.astype(dt), ((0, 0), (0, C_pad - C)))
    b_pad = jnp.full((1, C_pad), -1e30, dtype=jnp.float32)
    b_pad = b_pad.at[0, :C].set(b_cls.astype(jnp.float32))

    cost = pl.CostEstimate(
        flops=2 * B_pad * S_pad * H + 2 * B_pad * H * C_pad,
        transcendentals=B_pad * (C_pad + 4),
        bytes_accessed=(B_pad * S_pad * H * dt_bytes + B_pad * S_pad * dt_bytes
                        + B_pad * 4 + H * C_pad * dt_bytes + C_pad * 4
                        + B_pad * (C_pad + H + 128) * 4),
    )

    scores_pad, reps, nll = pl.pallas_call(
        ncc_kernel,
        grid=(nb, ns),
        in_specs=[
            pl.BlockSpec((tb, ts, H), lambda i, s: (i, s, 0)),   # hidden
            pl.BlockSpec((tb, ts, 1), lambda i, s: (i, s, 0)),   # mask (seq on sublanes)
            pl.BlockSpec((tb, 1), lambda i, s: (i, 0)),          # labels
            pl.BlockSpec((H, C_pad), lambda i, s: (0, 0)),       # W (resident)
            pl.BlockSpec((1, C_pad), lambda i, s: (0, 0)),       # b (resident)
        ],
        out_specs=(
            pl.BlockSpec((tb, C_pad), lambda i, s: (i, 0)),      # padded scores
            pl.BlockSpec((tb, H), lambda i, s: (i, 0)),          # q_reps
            pl.BlockSpec((tb, 128), lambda i, s: (i, 0)),        # per-sample nll
        ),
        out_shape=(
            jax.ShapeDtypeStruct((B_pad, C_pad), jnp.float32),
            jax.ShapeDtypeStruct((B_pad, H), jnp.float32),
            jax.ShapeDtypeStruct((B_pad, 128), jnp.float32),
        ),
        scratch_shapes=[
            pltpu.VMEM((tb, H), jnp.float32),                    # masked-sum acc
            pltpu.VMEM((tb, 1), jnp.float32),                    # mask-count acc
        ],
        compiler_params=pltpu.CompilerParams(
            dimension_semantics=("parallel", "arbitrary"),
            vmem_limit_bytes=vmem_limit,
        ),
        cost_estimate=cost,
    )(hidden, mask_col, labels2, w_pad, b_pad)

    loss = jnp.mean(nll[:B, 0])                  # CE mean over the real batch
    return loss, scores_pad[:B, :C], reps[:B]


# --------------------------------------------------------------------------
# Pure-JAX reference mirroring the PyTorch semantics
# --------------------------------------------------------------------------
def _reference(last_hidden_state, attention_mask, labels, w_cls_t, b_cls):
    mask = attention_mask.astype(jnp.float32)[:, :, None]
    reps = jnp.sum(last_hidden_state * mask, 1) / jnp.maximum(jnp.sum(mask, 1), 1e-9)
    reps = reps / jnp.maximum(
        jnp.sqrt(jnp.sum(reps * reps, axis=1, keepdims=True)), 1e-12)
    scores = jnp.dot(reps, w_cls_t, precision=jax.lax.Precision.HIGHEST) + b_cls
    logp = jax.nn.log_softmax(scores, axis=-1)
    loss = -jnp.mean(jnp.take_along_axis(logp, labels[:, None], axis=1))
    return loss, scores, reps


# --------------------------------------------------------------------------
# Demo / self-test
# --------------------------------------------------------------------------
if __name__ == "__main__":
    def run_case(B, S, H, C, block_b, block_s):
        key = jax.random.PRNGKey(0)
        k_h, k_l, k_w, k_b, k_len = jax.random.split(key, 5)
        hidden = jax.random.normal(k_h, (B, S, H), dtype=jnp.float32)
        valid_lens = jax.random.randint(k_len, (B,), 1, S + 1)
        attention_mask = (jnp.arange(S)[None, :] < valid_lens[:, None]).astype(jnp.int32)
        labels = jax.random.randint(k_l, (B,), 0, C, dtype=jnp.int32)
        # classifier = nn.Linear(H, C); stored transposed as (H, C)
        w_cls_t = jax.random.normal(k_w, (H, C), dtype=jnp.float32) * 0.05
        b_cls = jax.random.normal(k_b, (C,), dtype=jnp.float32) * 0.05

        out = dense_ncc_forward(hidden, attention_mask, labels, w_cls_t, b_cls,
                                block_b=block_b, block_s=block_s)
        jax.block_until_ready(out)
        ref = _reference(hidden, attention_mask, labels, w_cls_t, b_cls)
        names = ("loss", "scores", "q_reps")
        for name, got, want in zip(names, out, ref):
            assert jnp.allclose(got, want, rtol=1e-5, atol=1e-5), f"mismatch in {name}"

    # 1) multi batch-tile + split sequence axis (exercises the f32 accumulator
    #    path: grid = (2, 2), no padding of the hidden tensor anywhere).
    run_case(B=16, S=256, H=128, C=8, block_b=8, block_s=128)
    # 2) ragged batch (B not a multiple of 8) -> single pad-free batch tile,
    #    single sequence tile (init and finalize fire in the same step).
    run_case(B=10, S=128, H=64, C=12, block_b=128, block_s=None)

    print("KERNEL_OK")
</pallas_src>

<mosaic_0001>
module attributes {stable_mosaic.version = 11 : i64} {
  func.func @ncc_kernel(%arg0: i32, %arg1: i32, %arg2: memref<8x128x128xf32, #tpu.memory_space<vmem>>, %arg3: memref<8x128x1xf32, #tpu.memory_space<vmem>>, %arg4: memref<8x1xi32, #tpu.memory_space<vmem>>, %arg5: memref<128x128xf32, #tpu.memory_space<vmem>>, %arg6: memref<1x128xf32, #tpu.memory_space<vmem>>, %arg7: memref<8x128xf32, #tpu.memory_space<vmem>>, %arg8: memref<8x128xf32, #tpu.memory_space<vmem>>, %arg9: memref<8x128xf32, #tpu.memory_space<vmem>>, %arg10: memref<8x128xf32, #tpu.memory_space<vmem>>, %arg11: memref<8x1xf32, #tpu.memory_space<vmem>>) attributes {dimension_semantics = [#tpu.dimension_semantics<parallel>, #tpu.dimension_semantics<arbitrary>], iteration_bounds = array<i64: 2, 2>, scalar_prefetch = 0 : i64, scratch_operands = 2 : i64, tpu.core_type = #tpu.core_type<tc>, window_params = [{transform_indices = @transform_0, window_bounds = array<i64: 8, 128, 128>}, {transform_indices = @transform_1, window_bounds = array<i64: 8, 128, 1>}, {transform_indices = @transform_2, window_bounds = array<i64: 8, 1>}, {pipeline_mode = #tpu.pipeline_mode<synchronous>, transform_indices = @transform_3, window_bounds = array<i64: 128, 128>}, {pipeline_mode = #tpu.pipeline_mode<synchronous>, transform_indices = @transform_4, window_bounds = array<i64: 1, 128>}, {transform_indices = @transform_5, window_bounds = array<i64: 8, 128>}, {transform_indices = @transform_6, window_bounds = array<i64: 8, 128>}, {transform_indices = @transform_7, window_bounds = array<i64: 8, 128>}]} {
    %c0_i32 = arith.constant 0 : i32
    %0 = arith.cmpi eq, %arg1, %c0_i32 : i32
    %1 = arith.extui %0 : i1 to i32
    %c0_i32_0 = arith.constant 0 : i32
    %2 = arith.cmpi ne, %1, %c0_i32_0 : i32
    scf.if %2 {
      %cst_16 = arith.constant 0.000000e+00 : f32
      %18 = vector.broadcast %cst_16 : f32 to vector<8x128xf32>
      %c0_17 = arith.constant 0 : index
      %c0_18 = arith.constant 0 : index
      %19 = vector.load %arg10[%c0_17, %c0_18] : memref<8x128xf32, #tpu.memory_space<vmem>>, vector<8x128xf32>
      tpu.vector_store %arg10[%c0_17, %c0_18], %18 {strides = array<i32>} : memref<8x128xf32, #tpu.memory_space<vmem>>, vector<8x128xf32>,
      %cst_19 = arith.constant 0.000000e+00 : f32
      %20 = vector.broadcast %cst_19 : f32 to vector<8x1xf32>
      %c0_20 = arith.constant 0 : index
      %c0_21 = arith.constant 0 : index
      %21 = vector.load %arg11[%c0_20, %c0_21] : memref<8x1xf32, #tpu.memory_space<vmem>>, vector<8x1xf32>
      tpu.vector_store %arg11[%c0_20, %c0_21], %20 {strides = array<i32>} : memref<8x1xf32, #tpu.memory_space<vmem>>, vector<8x1xf32>,
    } else {
    }
    %c0 = arith.constant 0 : index
    %c0_1 = arith.constant 0 : index
    %c0_2 = arith.constant 0 : index
    %3 = vector.load %arg2[%c0, %c0_1, %c0_2] : memref<8x128x128xf32, #tpu.memory_space<vmem>>, vector<8x128x128xf32>
    %c0_3 = arith.constant 0 : index
    %c0_4 = arith.constant 0 : index
    %c0_5 = arith.constant 0 : index
    %4 = vector.load %arg3[%c0_3, %c0_4, %c0_5] : memref<8x128x1xf32, #tpu.memory_space<vmem>>, vector<8x128x1xf32>
    %c0_6 = arith.constant 0 : index
    %c0_7 = arith.constant 0 : index
    %5 = vector.load %arg10[%c0_6, %c0_7] : memref<8x128xf32, #tpu.memory_space<vmem>>, vector<8x128xf32>
    %6 = vector.broadcast %4 : vector<8x128x1xf32> to vector<8x128x128xf32>
    %7 = arith.mulf %3, %6 : vector<8x128x128xf32>
    %cst = arith.constant dense<0.000000e+00> : vector<8x128xf32>
    %8 = vector.multi_reduction <add>, %7, %cst [1] : vector<8x128x128xf32> to vector<8x128xf32>
    %9 = arith.addf %5, %8 : vector<8x128xf32>
    %c0_8 = arith.constant 0 : index
    %c0_9 = arith.constant 0 : index
    %10 = vector.load %arg10[%c0_8, %c0_9] : memref<8x128xf32, #tpu.memory_space<vmem>>, vector<8x128xf32>
    tpu.vector_store %arg10[%c0_8, %c0_9], %9 {strides = array<i32>} : memref<8x128xf32, #tpu.memory_space<vmem>>, vector<8x128xf32>,
    %c0_10 = arith.constant 0 : index
    %c0_11 = arith.constant 0 : index
    %11 = vector.load %arg11[%c0_10, %c0_11] : memref<8x1xf32, #tpu.memory_space<vmem>>, vector<8x1xf32>
    %cst_12 = arith.constant dense<0.000000e+00> : vector<8x1xf32>
    %12 = vector.multi_reduction <add>, %4, %cst_12 [1] : vector<8x128x1xf32> to vector<8x1xf32>
    %13 = arith.addf %11, %12 : vector<8x1xf32>
    %c0_13 = arith.constant 0 : index
    %c0_14 = arith.constant 0 : index
    %14 = vector.load %arg11[%c0_13, %c0_14] : memref<8x1xf32, #tpu.memory_space<vmem>>, vector<8x1xf32>
    tpu.vector_store %arg11[%c0_13, %c0_14], %13 {strides = array<i32>} : memref<8x1xf32, #tpu.memory_space<vmem>>, vector<8x1xf32>,
    %c1_i32 = arith.constant 1 : i32
    %15 = arith.cmpi eq, %arg1, %c1_i32 : i32
    %16 = arith.extui %15 : i1 to i32
    %c0_i32_15 = arith.constant 0 : i32
    %17 = arith.cmpi ne, %16, %c0_i32_15 : i32
    scf.if %17 {
      %c0_16 = arith.constant 0 : index
      %c0_17 = arith.constant 0 : index
      %18 = vector.load %arg11[%c0_16, %c0_17] : memref<8x1xf32, #tpu.memory_space<vmem>>, vector<8x1xf32>
      %cst_18 = arith.constant 9.99999971E-10 : f32
      %19 = vector.broadcast %cst_18 : f32 to vector<8x1xf32>
      %20 = arith.maximumf %18, %19 : vector<8x1xf32>
      %21 = tpu.reciprocal %20 : vector<8x1xf32> -> vector<8x1xf32>
      %c0_19 = arith.constant 0 : index
      %c0_20 = arith.constant 0 : index
      %22 = vector.load %arg10[%c0_19, %c0_20] : memref<8x128xf32, #tpu.memory_space<vmem>>, vector<8x128xf32>
      %23 = vector.broadcast %21 : vector<8x1xf32> to vector<8x128xf32>
      %24 = arith.mulf %22, %23 : vector<8x128xf32>
      %25 = arith.mulf %24, %24 : vector<8x128xf32>
      %cst_21 = arith.constant dense<0.000000e+00> : vector<8xf32>
      %26 = vector.multi_reduction <add>, %25, %cst_21 [1] : vector<8x128xf32> to vector<8xf32>
      %27 = vector.shape_cast %26 : vector<8xf32> to vector<8x1xf32>
      %cst_22 = arith.constant 1.000000e-24 : f32
      %28 = vector.broadcast %cst_22 : f32 to vector<8x1xf32>
      %29 = arith.maximumf %27, %28 : vector<8x1xf32>
      %30 = math.rsqrt %29 : vector<8x1xf32>
      %31 = vector.broadcast %30 : vector<8x1xf32> to vector<8x128xf32>
      %32 = arith.mulf %24, %31 : vector<8x128xf32>
      %c0_23 = arith.constant 0 : index
      %c0_24 = arith.constant 0 : index
      %33 = vector.load %arg8[%c0_23, %c0_24] : memref<8x128xf32, #tpu.memory_space<vmem>>, vector<8x128xf32>
      tpu.vector_store %arg8[%c0_23, %c0_24], %32 {strides = array<i32>} : memref<8x128xf32, #tpu.memory_space<vmem>>, vector<8x128xf32>,
      %c0_25 = arith.constant 0 : index
      %c0_26 = arith.constant 0 : index
      %34 = vector.load %arg5[%c0_25, %c0_26] : memref<128x128xf32, #tpu.memory_space<vmem>>, vector<128x128xf32>
      %cst_27 = arith.constant dense<0.000000e+00> : vector<8x128xf32>
      %35 = tpu.matmul %32, %34, %cst_27 {dimension_numbers = #tpu.dot_dimension_numbers<[1], [0], [0], [1], [0, 0, 1, 1], [], []>} : vector<8x128xf32>, vector<128x128xf32>, vector<8x128xf32> -> vector<8x128xf32>
      %c0_28 = arith.constant 0 : index
      %c0_29 = arith.constant 0 : index
      %36 = vector.load %arg6[%c0_28, %c0_29] : memref<1x128xf32, #tpu.memory_space<vmem>>, vector<1x128xf32>
      %37 = vector.broadcast %36 : vector<1x128xf32> to vector<8x128xf32>
      %38 = arith.addf %35, %37 : vector<8x128xf32>
      %c0_30 = arith.constant 0 : index
      %c0_31 = arith.constant 0 : index
      %39 = vector.load %arg7[%c0_30, %c0_31] : memref<8x128xf32, #tpu.memory_space<vmem>>, vector<8x128xf32>
      tpu.vector_store %arg7[%c0_30, %c0_31], %38 {strides = array<i32>} : memref<8x128xf32, #tpu.memory_space<vmem>>, vector<8x128xf32>,
      %c0_32 = arith.constant 0 : index
      %c0_33 = arith.constant 0 : index
      %40 = vector.load %arg4[%c0_32, %c0_33] : memref<8x1xi32, #tpu.memory_space<vmem>>, vector<8x1xi32>
      %41 = tpu.iota {dimensions = array<i32: 1>} : vector<8x128xi32>
      %42 = vector.broadcast %40 : vector<8x1xi32> to vector<8x128xi32>
      %43 = arith.cmpi eq, %42, %41 : vector<8x128xi32>
      %44 = arith.extui %43 : vector<8x128xi1> to vector<8x128xi32>
      %45 = arith.sitofp %44 : vector<8x128xi32> to vector<8x128xf32>
      %cst_34 = arith.constant dense<0xFF800000> : vector<8xf32>
      %46 = vector.multi_reduction <maximumf>, %38, %cst_34 [1] : vector<8x128xf32> to vector<8xf32>
      %47 = vector.shape_cast %46 : vector<8xf32> to vector<8x1xf32>
      %48 = vector.broadcast %47 : vector<8x1xf32> to vector<8x128xf32>
      %49 = arith.subf %38, %48 : vector<8x128xf32>
      %50 = math.exp %49 : vector<8x128xf32>
      %cst_35 = arith.constant dense<0.000000e+00> : vector<8xf32>
      %51 = vector.multi_reduction <add>, %50, %cst_35 [1] : vector<8x128xf32> to vector<8xf32>
      %52 = vector.shape_cast %51 : vector<8xf32> to vector<8x1xf32>
      %53 = math.log %52 : vector<8x1xf32>
      %54 = arith.addf %47, %53 : vector<8x1xf32>
      %55 = arith.mulf %45, %38 : vector<8x128xf32>
      %cst_36 = arith.constant dense<0.000000e+00> : vector<8xf32>
      %56 = vector.multi_reduction <add>, %55, %cst_36 [1] : vector<8x128xf32> to vector<8xf32>
      %57 = vector.shape_cast %56 : vector<8xf32> to vector<8x1xf32>
      %58 = arith.subf %54, %57 : vector<8x1xf32>
      %59 = vector.shape_cast %58 : vector<8x1xf32> to vector<8x1xf32>
      %60 = vector.broadcast %59 : vector<8x1xf32> to vector<8x128xf32>
      %c0_37 = arith.constant 0 : index
      %c0_38 = arith.constant 0 : index
      %61 = vector.load %arg9[%c0_37, %c0_38] : memref<8x128xf32, #tpu.memory_space<vmem>>, vector<8x128xf32>
      tpu.vector_store %arg9[%c0_37, %c0_38], %60 {strides = array<i32>} : memref<8x128xf32, #tpu.memory_space<vmem>>, vector<8x128xf32>,
    } else {
    }
    return
  }
  func.func @transform_0(%arg0: i32, %arg1: i32) -> (i32, i32, i32) {
    %c0_i32 = arith.constant 0 : i32
    %c0_i32_0 = arith.constant 0 : i32
    return %arg0, %arg1, %c0_i32 : i32, i32, i32
  }
  func.func @transform_1(%arg0: i32, %arg1: i32) -> (i32, i32, i32) {
    %c0_i32 = arith.constant 0 : i32
    %c0_i32_0 = arith.constant 0 : i32
    return %arg0, %arg1, %c0_i32 : i32, i32, i32
  }
  func.func @transform_2(%arg0: i32, %arg1: i32) -> (i32, i32) {
    %c0_i32 = arith.constant 0 : i32
    %c0_i32_0 = arith.constant 0 : i32
    return %arg0, %c0_i32 : i32, i32
  }
  func.func @transform_3(%arg0: i32, %arg1: i32) -> (i32, i32) {
    %c0_i32 = arith.constant 0 : i32
    %c0_i32_0 = arith.constant 0 : i32
    %c0_i32_1 = arith.constant 0 : i32
    return %c0_i32, %c0_i32_0 : i32, i32
  }
  func.func @transform_4(%arg0: i32, %arg1: i32) -> (i32, i32) {
    %c0_i32 = arith.constant 0 : i32
    %c0_i32_0 = arith.constant 0 : i32
    %c0_i32_1 = arith.constant 0 : i32
    return %c0_i32, %c0_i32_0 : i32, i32
  }
  func.func @transform_5(%arg0: i32, %arg1: i32) -> (i32, i32) {
    %c0_i32 = arith.constant 0 : i32
    %c0_i32_0 = arith.constant 0 : i32
    return %arg0, %c0_i32 : i32, i32
  }
  func.func @transform_6(%arg0: i32, %arg1: i32) -> (i32, i32) {
    %c0_i32 = arith.constant 0 : i32
    %c0_i32_0 = arith.constant 0 : i32
    return %arg0, %c0_i32 : i32, i32
  }
  func.func @transform_7(%arg0: i32, %arg1: i32) -> (i32, i32) {
    %c0_i32 = arith.constant 0 : i32
    %c0_i32_0 = arith.constant 0 : i32
    return %arg0, %c0_i32 : i32, i32
  }
}

</mosaic_0001>

<llo_original>
// kernel: tpu_custom_call.1
$region0: #{tpu_custom_call.1}
  #allocation0 [shape = 'u32[]', space=smem, size = 0x4, offset = 0x4, fixed_abs, tag = 'smem constant byte address 0x4 - core index']
  #allocation1 [shape = 'u32[144,128]{1,0:T(1,128)}', space=vmem, size = 0x12000, scoped, tag = 'internal scratch']
  #allocation2 [shape = 'f32[8,128]{1,0:T(8,128)}', space=vmem, size = 0x1000, scoped, tag = 'scratch operand']
  #allocation3 [shape = 'f32[8,1]{1,0:T(8,128)}', space=vmem, size = 0x1000, scoped, tag = 'scratch operand']
  %s0 = inlined_call_operand.vmem [shape: f32[16,256,128], index: 0, kind: input, shape index: {}]
  %s1 = inlined_call_operand.vmem [shape: f32[16,256,1], index: 1, kind: input, shape index: {}]
  %s2 = inlined_call_operand.vmem [shape: s32[16,1], index: 2, kind: input, shape index: {}]
  %s3 = inlined_call_operand.hbm [shape: f32[128,128], index: 3, kind: input, shape index: {}]
  %s4 = inlined_call_operand.vmem [shape: f32[1,128], index: 4, kind: input, shape index: {}]
  %s5 = inlined_call_operand.hbm [shape: f32[16,128], index: 5, kind: output, shape index: {0}]
  %s6 = inlined_call_operand.hbm [shape: f32[16,128], index: 6, kind: output, shape index: {1}]
  %s7 = inlined_call_operand.hbm [shape: f32[16,128], index: 7, kind: output, shape index: {2}]
  %8 = xla_tuple %s5, %s6, %s7
  %s9 = sld [smem:[#allocation0]]
  $region157: #{tpu_custom_call.1} parent=0
    _
  %s11 = ssub.s32 1, %s9
  %s12 = scalar_select 0, %s11, %s9
  $region1: #{tpu_custom_call.1} parent=0
    #allocation4 [shape = 'u8[1048576]{0}', space=vmem, size = 0x100000, scoped, tag = 'input window, operand 0']
    #allocation5 [shape = 'u8[1048576]{0}', space=vmem, size = 0x100000, scoped, tag = 'input window, operand 1']
    #allocation6 [shape = 'u8[65536]{0}', space=vmem, size = 0x10000, scoped, tag = 'input window, operand 3, single buffered']
    #allocation7 [shape = 's32[2]{0}', space=sflag, size = 0x8, scoped, tag = 'scoped memory for tpu_custom_call.1']
    #allocation8 [shape = 's32[2]{0}', space=sflag, size = 0x8, scoped, tag = 'scoped memory for tpu_custom_call.1']
    #allocation9 [shape = 'u8[8192]{0}', space=vmem, size = 0x2000, scoped, tag = 'output window, operand 0']
    #allocation10 [shape = 'u8[8192]{0}', space=vmem, size = 0x2000, scoped, tag = 'output window, operand 1']
    #allocation11 [shape = 's32[2]{0}', space=sflag, size = 0x8, scoped, tag = 'scoped memory for tpu_custom_call.1']
    #allocation12 [shape = 'u8[8192]{0}', space=vmem, size = 0x2000, scoped, tag = 'output window, operand 2']
    %13 = vsyncpa [#allocation7], 0
    %14 = vsyncpa [#allocation8], 0
    %s15 = scalar_lea.sflag [#allocation8], 1
    %16 = vsyncpa %s15, 0
    %17 = vsyncpa [#allocation11], 0
    %s18 = scalar_lea.sflag [#allocation11], 1
    %19 = vsyncpa %s18, 0
    loop: start=0, step=1, limit=6
    $region2: #{tpu_custom_call.1} parent=1 // loop_pre_header
      _
    $region3: #{tpu_custom_call.1} parent=1 // loop_header
      %s21 = sphi 0, %s25
      %p22 = scmp.ge.s32.totalorder %s21, 6
      %s28 = sphi 0, %s40
      %s29 = sphi 0, %s36
      %s30 = sphi 0, %s28
      %s31 = sphi 0, %s29
      %s32 = sphi 0, %s30
      %s33 = sphi 0, %s31
      %s45 = sphi 0, %s47
      %s48 = sphi 0, %s45
      %s49 = sphi 0, %s48
      %s65 = sphi 0, %s49
      %s73 = sphi 0, %s75
      %s76 = sphi 0, %s73
      %s77 = sphi 0, %s76
      %s93 = sphi 0, %s77
      %s99 = sphi 0, %s101
      %s102 = sphi 0, %s99
      %s103 = sphi 0, %s102
      %s119 = sphi 0, %s103
      %s123 = sphi 0, %s123
      %s125 = sphi 0, %s123
      %s126 = sphi 0, %s125
      %s140 = sphi 0, %s126
      %s144 = sphi 0, %s144
      %s146 = sphi 0, %s144
      %s147 = sphi 0, %s146
      %s161 = sphi 0, %s147
      %s167 = sphi 0, %s169
      %s170 = sphi 0, %s167
      %s171 = sphi 0, %s170
      %s187 = sphi 0, %s171
      %s193 = sphi 0, %s195
      %s196 = sphi 0, %s193
      %s197 = sphi 0, %s196
      %s213 = sphi 0, %s197
      %s219 = sphi 0, %s221
      %s222 = sphi 0, %s219
      %s223 = sphi 0, %s222
      %s239 = sphi 0, %s223
    $region4: #{tpu_custom_call.1} parent=1 // loop_header_branch
      %24 = sbr.rel (%p22) target = $region8
    $region5: #{tpu_custom_call.1} parent=1 // loop_body
      %s26 = ssub.s32 %s21, 1
      %s27 = ssub.s32 %s21, 2
      %s34 = sadd.s32 1, %s29
      %p35 = scmp.ge.s32.totalorder %s34, 2
      %s36 = scalar_select %p35, 0, %s34
      %s37 = sadd.s32 1, %s28
      %s38 = scalar_select %p35, %s37, %s28
      %p39 = scmp.ge.s32.totalorder %s38, 2
      %s40 = scalar_select %p39, 0, %s38
      %s41 = ssub.s32 %s28, %s40
      %s42 = ssub.s32 %s29, %s36
      %s43 = sor.u32 %s41, %s42
      %p44 = scmp.eq.s32.totalorder %s43, 0
      %s46 = sadd.s32 %s45, 1
      %s47 = scalar_select %p44, %s45, %s46
      %p50 = pneg %p44
      %p51 = scmp.eq.s32.totalorder %s21, 3
      %p52 = por %p50, %p51
      %p53 = scmp.ne.s32.totalorder %s45, %s48
      %p54 = scmp.eq.s32.totalorder %s21, 0
      %p55 = por %p53, %p54
      %p56 = scmp.ne.s32.totalorder %s45, %s48
      %p57 = scmp.eq.s32.totalorder %s26, 3
      %p58 = por %p56, %p57
      %p59 = scmp.ne.s32.totalorder %s48, %s49
      %p60 = scmp.eq.s32.totalorder %s26, 0
      %p61 = por %p59, %p60
      %p62 = scmp.ne.s32.totalorder %s48, %s49
      %p63 = scmp.eq.s32.totalorder %s27, 3
      %p64 = por %p62, %p63
      %p66 = scmp.ne.s32.totalorder %s49, %s65
      %p67 = scmp.eq.s32.totalorder %s27, 0
      %p68 = por %p66, %p67
      %s69 = ssub.s32 %s28, %s40
      %s70 = ssub.s32 %s29, %s36
      %s71 = sor.u32 %s69, %s70
      %p72 = scmp.eq.s32.totalorder %s71, 0
      %s74 = sadd.s32 %s73, 1
      %s75 = scalar_select %p72, %s73, %s74
      %p78 = pneg %p72
      %p79 = scmp.eq.s32.totalorder %s21, 3
      %p80 = por %p78, %p79
      %p81 = scmp.ne.s32.totalorder %s73, %s76
      %p82 = scmp.eq.s32.totalorder %s21, 0
      %p83 = por %p81, %p82
      %p84 = scmp.ne.s32.totalorder %s73, %s76
      %p85 = scmp.eq.s32.totalorder %s26, 3
      %p86 = por %p84, %p85
      %p87 = scmp.ne.s32.totalorder %s76, %s77
      %p88 = scmp.eq.s32.totalorder %s26, 0
      %p89 = por %p87, %p88
      %p90 = scmp.ne.s32.totalorder %s76, %s77
      %p91 = scmp.eq.s32.totalorder %s27, 3
      %p92 = por %p90, %p91
      %p94 = scmp.ne.s32.totalorder %s77, %s93
      %p95 = scmp.eq.s32.totalorder %s27, 0
      %p96 = por %p94, %p95
      %s97 = ssub.s32 %s28, %s40
      %p98 = scmp.eq.s32.totalorder %s97, 0
      %s100 = sadd.s32 %s99, 1
      %s101 = scalar_select %p98, %s99, %s100
      %p104 = pneg %p98
      %p105 = scmp.eq.s32.totalorder %s21, 3
      %p106 = por %p104, %p105
      %p107 = scmp.ne.s32.totalorder %s99, %s102
      %p108 = scmp.eq.s32.totalorder %s21, 0
      %p109 = por %p107, %p108
      %p110 = scmp.ne.s32.totalorder %s99, %s102
      %p111 = scmp.eq.s32.totalorder %s26, 3
      %p112 = por %p110, %p111
      %p113 = scmp.ne.s32.totalorder %s102, %s103
      %p114 = scmp.eq.s32.totalorder %s26, 0
      %p115 = por %p113, %p114
      %p116 = scmp.ne.s32.totalorder %s102, %s103
      %p117 = scmp.eq.s32.totalorder %s27, 3
      %p118 = por %p116, %p117
      %p120 = scmp.ne.s32.totalorder %s103, %s119
      %p121 = scmp.eq.s32.totalorder %s27, 0
      %p122 = por %p120, %p121
      %s124 = sadd.s32 %s123, 1
      %p127 = scmp.eq.s32.totalorder %s21, 3
      %p128 = scmp.ne.s32.totalorder %s123, %s125
      %p129 = scmp.eq.s32.totalorder %s21, 0
      %p130 = por %p128, %p129
      %p131 = scmp.ne.s32.totalorder %s123, %s125
      %p132 = scmp.eq.s32.totalorder %s26, 3
      %p133 = por %p131, %p132
      %p134 = scmp.ne.s32.totalorder %s125, %s126
      %p135 = scmp.eq.s32.totalorder %s26, 0
      %p136 = por %p134, %p135
      %p137 = scmp.ne.s32.totalorder %s125, %s126
      %p138 = scmp.eq.s32.totalorder %s27, 3
      %p139 = por %p137, %p138
      %p141 = scmp.ne.s32.totalorder %s126, %s140
      %p142 = scmp.eq.s32.totalorder %s27, 0
      %p143 = por %p141, %p142
      %s145 = sadd.s32 %s144, 1
      %p148 = scmp.eq.s32.totalorder %s21, 3
      %p149 = scmp.ne.s32.totalorder %s144, %s146
      %p150 = scmp.eq.s32.totalorder %s21, 0
      %p151 = por %p149, %p150
      %p152 = scmp.ne.s32.totalorder %s144, %s146
      %p153 = scmp.eq.s32.totalorder %s26, 3
      %p154 = por %p152, %p153
      %p155 = scmp.ne.s32.totalorder %s146, %s147
      %p156 = scmp.eq.s32.totalorder %s26, 0
      %p157 = por %p155, %p156
      %p158 = scmp.ne.s32.totalorder %s146, %s147
      %p159 = scmp.eq.s32.totalorder %s27, 3
      %p160 = por %p158, %p159
      %p162 = scmp.ne.s32.totalorder %s147, %s161
      %p163 = scmp.eq.s32.totalorder %s27, 0
      %p164 = por %p162, %p163
      %s165 = ssub.s32 %s28, %s40
      %p166 = scmp.eq.s32.totalorder %s165, 0
      %s168 = sadd.s32 %s167, 1
      %s169 = scalar_select %p166, %s167, %s168
      %p172 = pneg %p166
      %p173 = scmp.eq.s32.totalorder %s21, 3
      %p174 = por %p172, %p173
      %p175 = scmp.ne.s32.totalorder %s167, %s170
      %p176 = scmp.eq.s32.totalorder %s21, 0
      %p177 = por %p175, %p176
      %p178 = scmp.ne.s32.totalorder %s167, %s170
      %p179 = scmp.eq.s32.totalorder %s26, 3
      %p180 = por %p178, %p179
      %p181 = scmp.ne.s32.totalorder %s170, %s171
      %p182 = scmp.eq.s32.totalorder %s26, 0
      %p183 = por %p181, %p182
      %p184 = scmp.ne.s32.totalorder %s170, %s171
      %p185 = scmp.eq.s32.totalorder %s27, 3
      %p186 = por %p184, %p185
      %p188 = scmp.ne.s32.totalorder %s171, %s187
      %p189 = scmp.eq.s32.totalorder %s27, 0
      %p190 = por %p188, %p189
      %s191 = ssub.s32 %s28, %s40
      %p192 = scmp.eq.s32.totalorder %s191, 0
      %s194 = sadd.s32 %s193, 1
      %s195 = scalar_select %p192, %s193, %s194
      %p198 = pneg %p192
      %p199 = scmp.eq.s32.totalorder %s21, 3
      %p200 = por %p198, %p199
      %p201 = scmp.ne.s32.totalorder %s193, %s196
      %p202 = scmp.eq.s32.totalorder %s21, 0
      %p203 = por %p201, %p202
      %p204 = scmp.ne.s32.totalorder %s193, %s196
      %p205 = scmp.eq.s32.totalorder %s26, 3
      %p206 = por %p204, %p205
      %p207 = scmp.ne.s32.totalorder %s196, %s197
      %p208 = scmp.eq.s32.totalorder %s26, 0
      %p209 = por %p207, %p208
      %p210 = scmp.ne.s32.totalorder %s196, %s197
      %p211 = scmp.eq.s32.totalorder %s27, 3
      %p212 = por %p210, %p211
      %p214 = scmp.ne.s32.totalorder %s197, %s213
      %p215 = scmp.eq.s32.totalorder %s27, 0
      %p216 = por %p214, %p215
      %s217 = ssub.s32 %s28, %s40
      %p218 = scmp.eq.s32.totalorder %s217, 0
      %s220 = sadd.s32 %s219, 1
      %s221 = scalar_select %p218, %s219, %s220
      %p224 = pneg %p218
      %p225 = scmp.eq.s32.totalorder %s21, 3
      %p226 = por %p224, %p225
      %p227 = scmp.ne.s32.totalorder %s219, %s222
      %p228 = scmp.eq.s32.totalorder %s21, 0
      %p229 = por %p227, %p228
      %p230 = scmp.ne.s32.totalorder %s219, %s222
      %p231 = scmp.eq.s32.totalorder %s26, 3
      %p232 = por %p230, %p231
      %p233 = scmp.ne.s32.totalorder %s222, %s223
      %p234 = scmp.eq.s32.totalorder %s26, 0
      %p235 = por %p233, %p234
      %p236 = scmp.ne.s32.totalorder %s222, %s223
      %p237 = scmp.eq.s32.totalorder %s27, 3
      %p238 = por %p236, %p237
      %p240 = scmp.ne.s32.totalorder %s223, %s239
      %p241 = scmp.eq.s32.totalorder %s27, 0
      %p242 = por %p240, %p241
      %p243 = scmp.le.s32.totalorder 1, %s21
      %p244 = scmp.lt.s32.totalorder %s21, 5
      %p245 = pnand %p243, %p244
      %p246 = pneg %p245
      // Predicated region
      $region9: #{tpu_custom_call.1} parent=5 // pred_check
        _
      $region10: #{tpu_custom_call.1} parent=5 // pred_check_branch
        %248 = sbr.rel (%p245) target = $region12
      $region11: #{tpu_custom_call.1} parent=5 // pred_region
        %s249 = ssub.s32 %s21, 1
        // Predicated region
        $region13: #{tpu_custom_call.1} parent=11 // pred_check
          %p250 = pneg %p136
        $region14: #{tpu_custom_call.1} parent=11 // pred_check_branch
          %252 = sbr.rel (%p250) target = $region16
        $region15: #{tpu_custom_call.1} parent=11 // pred_region
          %s254 = ssub.s32 2048, 2048
          %255 = vsyncadd [#allocation7], %s254
          %s256 = sshll.u32 [#allocation6], 4
          %s257 = int_to_ptr.vmem [resolvable:$true] %s256
          %262 = dma.hbm_to_vmem [thread:$0]  %s3, 2048, %s257, [#allocation7], 128, 128, 8
        $region16: #{tpu_custom_call.1} parent=11 // pred_fallthru
          _
        // Predicated region
        $region17: #{tpu_custom_call.1} parent=11 // pred_check
          %p263 = pneg %p157
        $region18: #{tpu_custom_call.1} parent=11 // pred_check_branch
          %265 = sbr.rel (%p263) target = $region20
        $region19: #{tpu_custom_call.1} parent=11 // pred_region
          _
        $region20: #{tpu_custom_call.1} parent=11 // pred_fallthru
          _
      $region12: #{tpu_custom_call.1} parent=5 // pred_fallthru
        _
      %p266 = scmp.lt.s32.totalorder %s21, 4
      // Predicated region
      $region21: #{tpu_custom_call.1} parent=5 // pred_check
        %p267 = pneg %p266
      $region22: #{tpu_custom_call.1} parent=5 // pred_check_branch
        %269 = sbr.rel (%p267) target = $region24
      $region23: #{tpu_custom_call.1} parent=5 // pred_region
        // Predicated region
        $region25: #{tpu_custom_call.1} parent=23 // pred_check
          %p270 = pneg %p55
        $region26: #{tpu_custom_call.1} parent=23 // pred_check_branch
          %272 = sbr.rel (%p270) target = $region28
        $region27: #{tpu_custom_call.1} parent=23 // pred_region
          %s273 = sand.u32 %s45, 1
          %s274 = sand.u32 %s45, 1
          %s275 = smul.addr %s274, 1024
          %s276 = scalar_lea.vmem [#allocation4], %s275
          %s277 = smul.u32 8, %s28
          %s278 = smul.u32 16, %s29
          %s279 = smul.addr %s277, 32
          %s280 = sadd.s32 %s278, %s279
          %s281 = smul.addr %s280, 8
          %s282 = scalar_lea.vmem %s0, %s281
          // Predicated region
          $region29: #{tpu_custom_call.1} parent=27 // pred_check
            _
          $region30: #{tpu_custom_call.1} parent=27 // pred_check_branch
            %284 = sbr.rel (0) target = $region32
          $region31: #{tpu_custom_call.1} parent=27 // pred_region
            // Predicated region
            $region33: #{tpu_custom_call.1} parent=31 // pred_check
              _
            $region34: #{tpu_custom_call.1} parent=31 // pred_check_branch
              %286 = sbr.rel (0) target = $region36
            $region35: #{tpu_custom_call.1} parent=31 // pred_region
              // Predicated region
              $region48: #{tpu_custom_call.1} parent=35 // pred_check
                _
              $region49: #{tpu_custom_call.1} parent=35 // pred_check_branch
                %556 = sbr.rel (0) target = $region51
              $region50: #{tpu_custom_call.1} parent=35 // pred_region
                loop: start=0, step=1, limit=1
                $region52: #{tpu_custom_call.1} parent=50 // loop_pre_header
                  _
                $region53: #{tpu_custom_call.1} parent=50 // loop_header
                  %s558 = sphi 0, %s562
                  %p559 = scmp.ge.s32.totalorder %s558, 1
                  %s563 = sphi %s282, %s282
                  %s564 = sphi %s276, %s276
                $region54: #{tpu_custom_call.1} parent=50 // loop_header_branch
                  %561 = sbr.rel (%p559) target = $region58
                $region55: #{tpu_custom_call.1} parent=50 // loop_body
                  %v565 = vld [vmem:[%s563] sm:$0xff]
                  %566 = vst [vmem:[%s564] sm:$0xff] %v565
                  %v567 = vld [vmem:[%s563 + $0x8] sm:$0xff]
                  %568 = vst [vmem:[%s564 + $0x8] sm:$0xff] %v567
                  %v569 = vld [vmem:[%s563 + $0x10] sm:$0xff]
                  %570 = vst [vmem:[%s564 + $0x10] sm:$0xff] %v569
                  %v571 = vld [vmem:[%s563 + $0x18] sm:$0xff]
                  %572 = vst [vmem:[%s564 + $0x18] sm:$0xff] %v571
                  %v573 = vld [vmem:[%s563 + $0x20] sm:$0xff]
                  %574 = vst [vmem:[%s564 + $0x20] sm:$0xff] %v573
                  %v575 = vld [vmem:[%s563 + $0x28] sm:$0xff]
                  %576 = vst [vmem:[%s564 + $0x28] sm:$0xff] %v575
                  %v577 = vld [vmem:[%s563 + $0x30] sm:$0xff]
                  %578 = vst [vmem:[%s564 + $0x30] sm:$0xff] %v577
                  %v579 = vld [vmem:[%s563 + $0x38] sm:$0xff]
                  %580 = vst [vmem:[%s564 + $0x38] sm:$0xff] %v579
                  %v581 = vld [vmem:[%s563 + $0x40] sm:$0xff]
                  %582 = vst [vmem:[%s564 + $0x40] sm:$0xff] %v581
                  %v583 = vld [vmem:[%s563 + $0x48] sm:$0xff]
                  %584 = vst [vmem:[%s564 + $0x48] sm:$0xff] %v583
                  %v585 = vld [vmem:[%s563 + $0x50] sm:$0xff]
                  %586 = vst [vmem:[%s564 + $0x50] sm:$0xff] %v585
                  %v587 = vld [vmem:[%s563 + $0x58] sm:$0xff]
                  %588 = vst [vmem:[%s564 + $0x58] sm:$0xff] %v587
                  %v589 = vld [vmem:[%s563 + $0x60] sm:$0xff]
                  %590 = vst [vmem:[%s564 + $0x60] sm:$0xff] %v589
                  %v591 = vld [vmem:[%s563 + $0x68] sm:$0xff]
                  %592 = vst [vmem:[%s564 + $0x68] sm:$0xff] %v591
                  %v593 = vld [vmem:[%s563 + $0x70] sm:$0xff]
                  %594 = vst [vmem:[%s564 + $0x70] sm:$0xff] %v593
                  %v595 = vld [vmem:[%s563 + $0x78] sm:$0xff]
                  %596 = vst [vmem:[%s564 + $0x78] sm:$0xff] %v595
                  %v597 = vld [vmem:[%s563 + $0x100] sm:$0xff]
                  %598 = vst [vmem:[%s564 + $0x80] sm:$0xff] %v597
                  %v599 = vld [vmem:[%s563 + $0x108] sm:$0xff]
                  %600 = vst [vmem:[%s564 + $0x88] sm:$0xff] %v599
                  %v601 = vld [vmem:[%s563 + $0x110] sm:$0xff]
                  %602 = vst [vmem:[%s564 + $0x90] sm:$0xff] %v601
                  %v603 = vld [vmem:[%s563 + $0x118] sm:$0xff]
                  %604 = vst [vmem:[%s564 + $0x98] sm:$0xff] %v603
                  %v605 = vld [vmem:[%s563 + $0x120] sm:$0xff]
                  %606 = vst [vmem:[%s564 + $0xa0] sm:$0xff] %v605
                  %v607 = vld [vmem:[%s563 + $0x128] sm:$0xff]
                  %608 = vst [vmem:[%s564 + $0xa8] sm:$0xff] %v607
                  %v609 = vld [vmem:[%s563 + $0x130] sm:$0xff]
                  %610 = vst [vmem:[%s564 + $0xb0] sm:$0xff] %v609
                  %v611 = vld [vmem:[%s563 + $0x138] sm:$0xff]
                  %612 = vst [vmem:[%s564 + $0xb8] sm:$0xff] %v611
                  %v613 = vld [vmem:[%s563 + $0x140] sm:$0xff]
                  %614 = vst [vmem:[%s564 + $0xc0] sm:$0xff] %v613
                  %v615 = vld [vmem:[%s563 + $0x148] sm:$0xff]
                  %616 = vst [vmem:[%s564 + $0xc8] sm:$0xff] %v615
                  %v617 = vld [vmem:[%s563 + $0x150] sm:$0xff]
                  %618 = vst [vmem:[%s564 + $0xd0] sm:$0xff] %v617
                  %v619 = vld [vmem:[%s563 + $0x158] sm:$0xff]
                  %620 = vst [vmem:[%s564 + $0xd8] sm:$0xff] %v619
                  %v621 = vld [vmem:[%s563 + $0x160] sm:$0xff]
                  %622 = vst [vmem:[%s564 + $0xe0] sm:$0xff] %v621
                  %v623 = vld [vmem:[%s563 + $0x168] sm:$0xff]
                  %624 = vst [vmem:[%s564 + $0xe8] sm:$0xff] %v623
                  %v625 = vld [vmem:[%s563 + $0x170] sm:$0xff]
                  %626 = vst [vmem:[%s564 + $0xf0] sm:$0xff] %v625
                  %v627 = vld [vmem:[%s563 + $0x178] sm:$0xff]
                  %628 = vst [vmem:[%s564 + $0xf8] sm:$0xff] %v627
                  %v629 = vld [vmem:[%s563 + $0x200] sm:$0xff]
                  %630 = vst [vmem:[%s564 + $0x100] sm:$0xff] %v629
                  %v631 = vld [vmem:[%s563 + $0x208] sm:$0xff]
                  %632 = vst [vmem:[%s564 + $0x108] sm:$0xff] %v631
                  %v633 = vld [vmem:[%s563 + $0x210] sm:$0xff]
                  %634 = vst [vmem:[%s564 + $0x110] sm:$0xff] %v633
                  %v635 = vld [vmem:[%s563 + $0x218] sm:$0xff]
                  %636 = vst [vmem:[%s564 + $0x118] sm:$0xff] %v635
                  %v637 = vld [vmem:[%s563 + $0x220] sm:$0xff]
                  %638 = vst [vmem:[%s564 + $0x120] sm:$0xff] %v637
                  %v639 = vld [vmem:[%s563 + $0x228] sm:$0xff]
                  %640 = vst [vmem:[%s564 + $0x128] sm:$0xff] %v639
                  %v641 = vld [vmem:[%s563 + $0x230] sm:$0xff]
                  %642 = vst [vmem:[%s564 + $0x130] sm:$0xff] %v641
                  %v643 = vld [vmem:[%s563 + $0x238] sm:$0xff]
                  %644 = vst [vmem:[%s564 + $0x138] sm:$0xff] %v643
                  %v645 = vld [vmem:[%s563 + $0x240] sm:$0xff]
                  %646 = vst [vmem:[%s564 + $0x140] sm:$0xff] %v645
                  %v647 = vld [vmem:[%s563 + $0x248] sm:$0xff]
                  %648 = vst [vmem:[%s564 + $0x148] sm:$0xff] %v647
                  %v649 = vld [vmem:[%s563 + $0x250] sm:$0xff]
                  %650 = vst [vmem:[%s564 + $0x150] sm:$0xff] %v649
                  %v651 = vld [vmem:[%s563 + $0x258] sm:$0xff]
                  %652 = vst [vmem:[%s564 + $0x158] sm:$0xff] %v651
                  %v653 = vld [vmem:[%s563 + $0x260] sm:$0xff]
                  %654 = vst [vmem:[%s564 + $0x160] sm:$0xff] %v653
                  %v655 = vld [vmem:[%s563 + $0x268] sm:$0xff]
                  %656 = vst [vmem:[%s564 + $0x168] sm:$0xff] %v655
                  %v657 = vld [vmem:[%s563 + $0x270] sm:$0xff]
                  %658 = vst [vmem:[%s564 + $0x170] sm:$0xff] %v657
                  %v659 = vld [vmem:[%s563 + $0x278] sm:$0xff]
                  %660 = vst [vmem:[%s564 + $0x178] sm:$0xff] %v659
                  %v661 = vld [vmem:[%s563 + $0x300] sm:$0xff]
                  %662 = vst [vmem:[%s564 + $0x180] sm:$0xff] %v661
                  %v663 = vld [vmem:[%s563 + $0x308] sm:$0xff]
                  %664 = vst [vmem:[%s564 + $0x188] sm:$0xff] %v663
                  %v665 = vld [vmem:[%s563 + $0x310] sm:$0xff]
                  %666 = vst [vmem:[%s564 + $0x190] sm:$0xff] %v665
                  %v667 = vld [vmem:[%s563 + $0x318] sm:$0xff]
                  %668 = vst [vmem:[%s564 + $0x198] sm:$0xff] %v667
                  %v669 = vld [vmem:[%s563 + $0x320] sm:$0xff]
                  %670 = vst [vmem:[%s564 + $0x1a0] sm:$0xff] %v669
                  %v671 = vld [vmem:[%s563 + $0x328] sm:$0xff]
                  %672 = vst [vmem:[%s564 + $0x1a8] sm:$0xff] %v671
                  %v673 = vld [vmem:[%s563 + $0x330] sm:$0xff]
                  %674 = vst [vmem:[%s564 + $0x1b0] sm:$0xff] %v673
                  %v675 = vld [vmem:[%s563 + $0x338] sm:$0xff]
                  %676 = vst [vmem:[%s564 + $0x1b8] sm:$0xff] %v675
                  %v677 = vld [vmem:[%s563 + $0x340] sm:$0xff]
                  %678 = vst [vmem:[%s564 + $0x1c0] sm:$0xff] %v677
                  %v679 = vld [vmem:[%s563 + $0x348] sm:$0xff]
                  %680 = vst [vmem:[%s564 + $0x1c8] sm:$0xff] %v679
                  %v681 = vld [vmem:[%s563 + $0x350] sm:$0xff]
                  %682 = vst [vmem:[%s564 + $0x1d0] sm:$0xff] %v681
                  %v683 = vld [vmem:[%s563 + $0x358] sm:$0xff]
                  %684 = vst [vmem:[%s564 + $0x1d8] sm:$0xff] %v683
                  %v685 = vld [vmem:[%s563 + $0x360] sm:$0xff]
                  %686 = vst [vmem:[%s564 + $0x1e0] sm:$0xff] %v685
                  %v687 = vld [vmem:[%s563 + $0x368] sm:$0xff]
                  %688 = vst [vmem:[%s564 + $0x1e8] sm:$0xff] %v687
                  %v689 = vld [vmem:[%s563 + $0x370] sm:$0xff]
                  %690 = vst [vmem:[%s564 + $0x1f0] sm:$0xff] %v689
                  %v691 = vld [vmem:[%s563 + $0x378] sm:$0xff]
                  %692 = vst [vmem:[%s564 + $0x1f8] sm:$0xff] %v691
                  %v693 = vld [vmem:[%s563 + $0x400] sm:$0xff]
                  %694 = vst [vmem:[%s564 + $0x200] sm:$0xff] %v693
                  %v695 = vld [vmem:[%s563 + $0x408] sm:$0xff]
                  %696 = vst [vmem:[%s564 + $0x208] sm:$0xff] %v695
                  %v697 = vld [vmem:[%s563 + $0x410] sm:$0xff]
                  %698 = vst [vmem:[%s564 + $0x210] sm:$0xff] %v697
                  %v699 = vld [vmem:[%s563 + $0x418] sm:$0xff]
                  %700 = vst [vmem:[%s564 + $0x218] sm:$0xff] %v699
                  %v701 = vld [vmem:[%s563 + $0x420] sm:$0xff]
                  %702 = vst [vmem:[%s564 + $0x220] sm:$0xff] %v701
                  %v703 = vld [vmem:[%s563 + $0x428] sm:$0xff]
                  %704 = vst [vmem:[%s564 + $0x228] sm:$0xff] %v703
                  %v705 = vld [vmem:[%s563 + $0x430] sm:$0xff]
                  %706 = vst [vmem:[%s564 + $0x230] sm:$0xff] %v705
                  %v707 = vld [vmem:[%s563 + $0x438] sm:$0xff]
                  %708 = vst [vmem:[%s564 + $0x238] sm:$0xff] %v707
                  %v709 = vld [vmem:[%s563 + $0x440] sm:$0xff]
                  %710 = vst [vmem:[%s564 + $0x240] sm:$0xff] %v709
                  %v711 = vld [vmem:[%s563 + $0x448] sm:$0xff]
                  %712 = vst [vmem:[%s564 + $0x248] sm:$0xff] %v711
                  %v713 = vld [vmem:[%s563 + $0x450] sm:$0xff]
                  %714 = vst [vmem:[%s564 + $0x250] sm:$0xff] %v713
                  %v715 = vld [vmem:[%s563 + $0x458] sm:$0xff]
                  %716 = vst [vmem:[%s564 + $0x258] sm:$0xff] %v715
                  %v717 = vld [vmem:[%s563 + $0x460] sm:$0xff]
                  %718 = vst [vmem:[%s564 + $0x260] sm:$0xff] %v717
                  %v719 = vld [vmem:[%s563 + $0x468] sm:$0xff]
                  %720 = vst [vmem:[%s564 + $0x268] sm:$0xff] %v719
                  %v721 = vld [vmem:[%s563 + $0x470] sm:$0xff]
                  %722 = vst [vmem:[%s564 + $0x270] sm:$0xff] %v721
                  %v723 = vld [vmem:[%s563 + $0x478] sm:$0xff]
                  %724 = vst [vmem:[%s564 + $0x278] sm:$0xff] %v723
                  %v725 = vld [vmem:[%s563 + $0x500] sm:$0xff]
                  %726 = vst [vmem:[%s564 + $0x280] sm:$0xff] %v725
                  %v727 = vld [vmem:[%s563 + $0x508] sm:$0xff]
                  %728 = vst [vmem:[%s564 + $0x288] sm:$0xff] %v727
                  %v729 = vld [vmem:[%s563 + $0x510] sm:$0xff]
                  %730 = vst [vmem:[%s564 + $0x290] sm:$0xff] %v729
                  %v731 = vld [vmem:[%s563 + $0x518] sm:$0xff]
                  %732 = vst [vmem:[%s564 + $0x298] sm:$0xff] %v731
                  %v733 = vld [vmem:[%s563 + $0x520] sm:$0xff]
                  %734 = vst [vmem:[%s564 + $0x2a0] sm:$0xff] %v733
                  %v735 = vld [vmem:[%s563 + $0x528] sm:$0xff]
                  %736 = vst [vmem:[%s564 + $0x2a8] sm:$0xff] %v735
                  %v737 = vld [vmem:[%s563 + $0x530] sm:$0xff]
                  %738 = vst [vmem:[%s564 + $0x2b0] sm:$0xff] %v737
                  %v739 = vld [vmem:[%s563 + $0x538] sm:$0xff]
                  %740 = vst [vmem:[%s564 + $0x2b8] sm:$0xff] %v739
                  %v741 = vld [vmem:[%s563 + $0x540] sm:$0xff]
                  %742 = vst [vmem:[%s564 + $0x2c0] sm:$0xff] %v741
                  %v743 = vld [vmem:[%s563 + $0x548] sm:$0xff]
                  %744 = vst [vmem:[%s564 + $0x2c8] sm:$0xff] %v743
                  %v745 = vld [vmem:[%s563 + $0x550] sm:$0xff]
                  %746 = vst [vmem:[%s564 + $0x2d0] sm:$0xff] %v745
                  %v747 = vld [vmem:[%s563 + $0x558] sm:$0xff]
                  %748 = vst [vmem:[%s564 + $0x2d8] sm:$0xff] %v747
                  %v749 = vld [vmem:[%s563 + $0x560] sm:$0xff]
                  %750 = vst [vmem:[%s564 + $0x2e0] sm:$0xff] %v749
                  %v751 = vld [vmem:[%s563 + $0x568] sm:$0xff]
                  %752 = vst [vmem:[%s564 + $0x2e8] sm:$0xff] %v751
                  %v753 = vld [vmem:[%s563 + $0x570] sm:$0xff]
                  %754 = vst [vmem:[%s564 + $0x2f0] sm:$0xff] %v753
                  %v755 = vld [vmem:[%s563 + $0x578] sm:$0xff]
                  %756 = vst [vmem:[%s564 + $0x2f8] sm:$0xff] %v755
                  %v757 = vld [vmem:[%s563 + $0x600] sm:$0xff]
                  %758 = vst [vmem:[%s564 + $0x300] sm:$0xff] %v757
                  %v759 = vld [vmem:[%s563 + $0x608] sm:$0xff]
                  %760 = vst [vmem:[%s564 + $0x308] sm:$0xff] %v759
                  %v761 = vld [vmem:[%s563 + $0x610] sm:$0xff]
                  %762 = vst [vmem:[%s564 + $0x310] sm:$0xff] %v761
                  %v763 = vld [vmem:[%s563 + $0x618] sm:$0xff]
                  %764 = vst [vmem:[%s564 + $0x318] sm:$0xff] %v763
                  %v765 = vld [vmem:[%s563 + $0x620] sm:$0xff]
                  %766 = vst [vmem:[%s564 + $0x320] sm:$0xff] %v765
                  %v767 = vld [vmem:[%s563 + $0x628] sm:$0xff]
                  %768 = vst [vmem:[%s564 + $0x328] sm:$0xff] %v767
                  %v769 = vld [vmem:[%s563 + $0x630] sm:$0xff]
                  %770 = vst [vmem:[%s564 + $0x330] sm:$0xff] %v769
                  %v771 = vld [vmem:[%s563 + $0x638] sm:$0xff]
                  %772 = vst [vmem:[%s564 + $0x338] sm:$0xff] %v771
                  %v773 = vld [vmem:[%s563 + $0x640] sm:$0xff]
                  %774 = vst [vmem:[%s564 + $0x340] sm:$0xff] %v773
                  %v775 = vld [vmem:[%s563 + $0x648] sm:$0xff]
                  %776 = vst [vmem:[%s564 + $0x348] sm:$0xff] %v775
                  %v777 = vld [vmem:[%s563 + $0x650] sm:$0xff]
                  %778 = vst [vmem:[%s564 + $0x350] sm:$0xff] %v777
                  %v779 = vld [vmem:[%s563 + $0x658] sm:$0xff]
                  %780 = vst [vmem:[%s564 + $0x358] sm:$0xff] %v779
                  %v781 = vld [vmem:[%s563 + $0x660] sm:$0xff]
                  %782 = vst [vmem:[%s564 + $0x360] sm:$0xff] %v781
                  %v783 = vld [vmem:[%s563 + $0x668] sm:$0xff]
                  %784 = vst [vmem:[%s564 + $0x368] sm:$0xff] %v783
                  %v785 = vld [vmem:[%s563 + $0x670] sm:$0xff]
                  %786 = vst [vmem:[%s564 + $0x370] sm:$0xff] %v785
                  %v787 = vld [vmem:[%s563 + $0x678] sm:$0xff]
                  %788 = vst [vmem:[%s564 + $0x378] sm:$0xff] %v787
                  %v789 = vld [vmem:[%s563 + $0x700] sm:$0xff]
                  %790 = vst [vmem:[%s564 + $0x380] sm:$0xff] %v789
                  %v791 = vld [vmem:[%s563 + $0x708] sm:$0xff]
                  %792 = vst [vmem:[%s564 + $0x388] sm:$0xff] %v791
                  %v793 = vld [vmem:[%s563 + $0x710] sm:$0xff]
                  %794 = vst [vmem:[%s564 + $0x390] sm:$0xff] %v793
                  %v795 = vld [vmem:[%s563 + $0x718] sm:$0xff]
                  %796 = vst [vmem:[%s564 + $0x398] sm:$0xff] %v795
                  %v797 = vld [vmem:[%s563 + $0x720] sm:$0xff]
                  %798 = vst [vmem:[%s564 + $0x3a0] sm:$0xff] %v797
                  %v799 = vld [vmem:[%s563 + $0x728] sm:$0xff]
                  %800 = vst [vmem:[%s564 + $0x3a8] sm:$0xff] %v799
                  %v801 = vld [vmem:[%s563 + $0x730] sm:$0xff]
                  %802 = vst [vmem:[%s564 + $0x3b0] sm:$0xff] %v801
                  %v803 = vld [vmem:[%s563 + $0x738] sm:$0xff]
                  %804 = vst [vmem:[%s564 + $0x3b8] sm:$0xff] %v803
                  %v805 = vld [vmem:[%s563 + $0x740] sm:$0xff]
                  %806 = vst [vmem:[%s564 + $0x3c0] sm:$0xff] %v805
                  %v807 = vld [vmem:[%s563 + $0x748] sm:$0xff]
                  %808 = vst [vmem:[%s564 + $0x3c8] sm:$0xff] %v807
                  %v809 = vld [vmem:[%s563 + $0x750] sm:$0xff]
                  %810 = vst [vmem:[%s564 + $0x3d0] sm:$0xff] %v809
                  %v811 = vld [vmem:[%s563 + $0x758] sm:$0xff]
                  %812 = vst [vmem:[%s564 + $0x3d8] sm:$0xff] %v811
                  %v813 = vld [vmem:[%s563 + $0x760] sm:$0xff]
                  %814 = vst [vmem:[%s564 + $0x3e0] sm:$0xff] %v813
                  %v815 = vld [vmem:[%s563 + $0x768] sm:$0xff]
                  %816 = vst [vmem:[%s564 + $0x3e8] sm:$0xff] %v815
                  %v817 = vld [vmem:[%s563 + $0x770] sm:$0xff]
                  %818 = vst [vmem:[%s564 + $0x3f0] sm:$0xff] %v817
                  %v819 = vld [vmem:[%s563 + $0x778] sm:$0xff]
                  %820 = vst [vmem:[%s564 + $0x3f8] sm:$0xff] %v819
                $region56: #{tpu_custom_call.1} parent=50 // loop_footer
                  %s562 = sadd.s32 1, %s558
                $region57: #{tpu_custom_call.1} parent=50 // loop_footer_branch
                  %557 = sbr.rel target = $region53
                $region58: #{tpu_custom_call.1} parent=50 // loop_exit
                  _
              $region51: #{tpu_custom_call.1} parent=35 // pred_fallthru
                _
              // Predicated region
              $region59: #{tpu_custom_call.1} parent=35 // pred_check
                _
              $region60: #{tpu_custom_call.1} parent=35 // pred_check_branch
                %822 = sbr.rel target = $region62
              $region61: #{tpu_custom_call.1} parent=35 // pred_region
                _
              $region62: #{tpu_custom_call.1} parent=35 // pred_fallthru
                _
            $region36: #{tpu_custom_call.1} parent=31 // pred_fallthru
              _
            // Predicated region
            $region37: #{tpu_custom_call.1} parent=31 // pred_check
              _
            $region38: #{tpu_custom_call.1} parent=31 // pred_check_branch
              %288 = sbr.rel target = $region40
            $region39: #{tpu_custom_call.1} parent=31 // pred_region
              %s290 = ssub.s32 256, 1
              loop: start=0, step=1, limit=1
              $region41: #{tpu_custom_call.1} parent=39 // loop_pre_header
                _
              $region42: #{tpu_custom_call.1} parent=39 // loop_header
                %s292 = sphi 0, %s296
                %p293 = scmp.ge.s32.totalorder %s292, 1
                %s297 = sphi %s282, %s282
                %s298 = sphi %s276, %s276
              $region43: #{tpu_custom_call.1} parent=39 // loop_header_branch
                %295 = sbr.rel (%p293) target = $region47
              $region44: #{tpu_custom_call.1} parent=39 // loop_body
                %v299 = vld [vmem:[%s297] sm:%s290]
                %300 = vst [vmem:[%s298] sm:%s290] %v299
                %v301 = vld [vmem:[%s297 + $0x8] sm:%s290]
                %302 = vst [vmem:[%s298 + $0x8] sm:%s290] %v301
                %v303 = vld [vmem:[%s297 + $0x10] sm:%s290]
                %304 = vst [vmem:[%s298 + $0x10] sm:%s290] %v303
                %v305 = vld [vmem:[%s297 + $0x18] sm:%s290]
                %306 = vst [vmem:[%s298 + $0x18] sm:%s290] %v305
                %v307 = vld [vmem:[%s297 + $0x20] sm:%s290]
                %308 = vst [vmem:[%s298 + $0x20] sm:%s290] %v307
                %v309 = vld [vmem:[%s297 + $0x28] sm:%s290]
                %310 = vst [vmem:[%s298 + $0x28] sm:%s290] %v309
                %v311 = vld [vmem:[%s297 + $0x30] sm:%s290]
                %312 = vst [vmem:[%s298 + $0x30] sm:%s290] %v311
                %v313 = vld [vmem:[%s297 + $0x38] sm:%s290]
                %314 = vst [vmem:[%s298 + $0x38] sm:%s290] %v313
                %v315 = vld [vmem:[%s297 + $0x40] sm:%s290]
                %316 = vst [vmem:[%s298 + $0x40] sm:%s290] %v315
                %v317 = vld [vmem:[%s297 + $0x48] sm:%s290]
                %318 = vst [vmem:[%s298 + $0x48] sm:%s290] %v317
                %v319 = vld [vmem:[%s297 + $0x50] sm:%s290]
                %320 = vst [vmem:[%s298 + $0x50] sm:%s290] %v319
                %v321 = vld [vmem:[%s297 + $0x58] sm:%s290]
                %322 = vst [vmem:[%s298 + $0x58] sm:%s290] %v321
                %v323 = vld [vmem:[%s297 + $0x60] sm:%s290]
                %324 = vst [vmem:[%s298 + $0x60] sm:%s290] %v323
                %v325 = vld [vmem:[%s297 + $0x68] sm:%s290]
                %326 = vst [vmem:[%s298 + $0x68] sm:%s290] %v325
                %v327 = vld [vmem:[%s297 + $0x70] sm:%s290]
                %328 = vst [vmem:[%s298 + $0x70] sm:%s290] %v327
                %v329 = vld [vmem:[%s297 + $0x78] sm:%s290]
                %330 = vst [vmem:[%s298 + $0x78] sm:%s290] %v329
                %v331 = vld [vmem:[%s297 + $0x100] sm:%s290]
                %332 = vst [vmem:[%s298 + $0x80] sm:%s290] %v331
                %v333 = vld [vmem:[%s297 + $0x108] sm:%s290]
                %334 = vst [vmem:[%s298 + $0x88] sm:%s290] %v333
                %v335 = vld [vmem:[%s297 + $0x110] sm:%s290]
                %336 = vst [vmem:[%s298 + $0x90] sm:%s290] %v335
                %v337 = vld [vmem:[%s297 + $0x118] sm:%s290]
                %338 = vst [vmem:[%s298 + $0x98] sm:%s290] %v337
                %v339 = vld [vmem:[%s297 + $0x120] sm:%s290]
                %340 = vst [vmem:[%s298 + $0xa0] sm:%s290] %v339
                %v341 = vld [vmem:[%s297 + $0x128] sm:%s290]
                %342 = vst [vmem:[%s298 + $0xa8] sm:%s290] %v341
                %v343 = vld [vmem:[%s297 + $0x130] sm:%s290]
                %344 = vst [vmem:[%s298 + $0xb0] sm:%s290] %v343
                %v345 = vld [vmem:[%s297 + $0x138] sm:%s290]
                %346 = vst [vmem:[%s298 + $0xb8] sm:%s290] %v345
                %v347 = vld [vmem:[%s297 + $0x140] sm:%s290]
                %348 = vst [vmem:[%s298 + $0xc0] sm:%s290] %v347
                %v349 = vld [vmem:[%s297 + $0x148] sm:%s290]
                %350 = vst [vmem:[%s298 + $0xc8] sm:%s290] %v349
                %v351 = vld [vmem:[%s297 + $0x150] sm:%s290]
                %352 = vst [vmem:[%s298 + $0xd0] sm:%s290] %v351
                %v353 = vld [vmem:[%s297 + $0x158] sm:%s290]
                %354 = vst [vmem:[%s298 + $0xd8] sm:%s290] %v353
                %v355 = vld [vmem:[%s297 + $0x160] sm:%s290]
                %356 = vst [vmem:[%s298 + $0xe0] sm:%s290] %v355
                %v357 = vld [vmem:[%s297 + $0x168] sm:%s290]
                %358 = vst [vmem:[%s298 + $0xe8] sm:%s290] %v357
                %v359 = vld [vmem:[%s297 + $0x170] sm:%s290]
                %360 = vst [vmem:[%s298 + $0xf0] sm:%s290] %v359
                %v361 = vld [vmem:[%s297 + $0x178] sm:%s290]
                %362 = vst [vmem:[%s298 + $0xf8] sm:%s290] %v361
                %v363 = vld [vmem:[%s297 + $0x200] sm:%s290]
                %364 = vst [vmem:[%s298 + $0x100] sm:%s290] %v363
                %v365 = vld [vmem:[%s297 + $0x208] sm:%s290]
                %366 = vst [vmem:[%s298 + $0x108] sm:%s290] %v365
                %v367 = vld [vmem:[%s297 + $0x210] sm:%s290]
                %368 = vst [vmem:[%s298 + $0x110] sm:%s290] %v367
                %v369 = vld [vmem:[%s297 + $0x218] sm:%s290]
                %370 = vst [vmem:[%s298 + $0x118] sm:%s290] %v369
                %v371 = vld [vmem:[%s297 + $0x220] sm:%s290]
                %372 = vst [vmem:[%s298 + $0x120] sm:%s290] %v371
                %v373 = vld [vmem:[%s297 + $0x228] sm:%s290]
                %374 = vst [vmem:[%s298 + $0x128] sm:%s290] %v373
                %v375 = vld [vmem:[%s297 + $0x230] sm:%s290]
                %376 = vst [vmem:[%s298 + $0x130] sm:%s290] %v375
                %v377 = vld [vmem:[%s297 + $0x238] sm:%s290]
                %378 = vst [vmem:[%s298 + $0x138] sm:%s290] %v377
                %v379 = vld [vmem:[%s297 + $0x240] sm:%s290]
                %380 = vst [vmem:[%s298 + $0x140] sm:%s290] %v379
                %v381 = vld [vmem:[%s297 + $0x248] sm:%s290]
                %382 = vst [vmem:[%s298 + $0x148] sm:%s290] %v381
                %v383 = vld [vmem:[%s297 + $0x250] sm:%s290]
                %384 = vst [vmem:[%s298 + $0x150] sm:%s290] %v383
                %v385 = vld [vmem:[%s297 + $0x258] sm:%s290]
                %386 = vst [vmem:[%s298 + $0x158] sm:%s290] %v385
                %v387 = vld [vmem:[%s297 + $0x260] sm:%s290]
                %388 = vst [vmem:[%s298 + $0x160] sm:%s290] %v387
                %v389 = vld [vmem:[%s297 + $0x268] sm:%s290]
                %390 = vst [vmem:[%s298 + $0x168] sm:%s290] %v389
                %v391 = vld [vmem:[%s297 + $0x270] sm:%s290]
                %392 = vst [vmem:[%s298 + $0x170] sm:%s290] %v391
                %v393 = vld [vmem:[%s297 + $0x278] sm:%s290]
                %394 = vst [vmem:[%s298 + $0x178] sm:%s290] %v393
                %v395 = vld [vmem:[%s297 + $0x300] sm:%s290]
                %396 = vst [vmem:[%s298 + $0x180] sm:%s290] %v395
                %v397 = vld [vmem:[%s297 + $0x308] sm:%s290]
                %398 = vst [vmem:[%s298 + $0x188] sm:%s290] %v397
                %v399 = vld [vmem:[%s297 + $0x310] sm:%s290]
                %400 = vst [vmem:[%s298 + $0x190] sm:%s290] %v399
                %v401 = vld [vmem:[%s297 + $0x318] sm:%s290]
                %402 = vst [vmem:[%s298 + $0x198] sm:%s290] %v401
                %v403 = vld [vmem:[%s297 + $0x320] sm:%s290]
                %404 = vst [vmem:[%s298 + $0x1a0] sm:%s290] %v403
                %v405 = vld [vmem:[%s297 + $0x328] sm:%s290]
                %406 = vst [vmem:[%s298 + $0x1a8] sm:%s290] %v405
                %v407 = vld [vmem:[%s297 + $0x330] sm:%s290]
                %408 = vst [vmem:[%s298 + $0x1b0] sm:%s290] %v407
                %v409 = vld [vmem:[%s297 + $0x338] sm:%s290]
                %410 = vst [vmem:[%s298 + $0x1b8] sm:%s290] %v409
                %v411 = vld [vmem:[%s297 + $0x340] sm:%s290]
                %412 = vst [vmem:[%s298 + $0x1c0] sm:%s290] %v411
                %v413 = vld [vmem:[%s297 + $0x348] sm:%s290]
                %414 = vst [vmem:[%s298 + $0x1c8] sm:%s290] %v413
                %v415 = vld [vmem:[%s297 + $0x350] sm:%s290]
                %416 = vst [vmem:[%s298 + $0x1d0] sm:%s290] %v415
                %v417 = vld [vmem:[%s297 + $0x358] sm:%s290]
                %418 = vst [vmem:[%s298 + $0x1d8] sm:%s290] %v417
                %v419 = vld [vmem:[%s297 + $0x360] sm:%s290]
                %420 = vst [vmem:[%s298 + $0x1e0] sm:%s290] %v419
                %v421 = vld [vmem:[%s297 + $0x368] sm:%s290]
                %422 = vst [vmem:[%s298 + $0x1e8] sm:%s290] %v421
                %v423 = vld [vmem:[%s297 + $0x370] sm:%s290]
                %424 = vst [vmem:[%s298 + $0x1f0] sm:%s290] %v423
                %v425 = vld [vmem:[%s297 + $0x378] sm:%s290]
                %426 = vst [vmem:[%s298 + $0x1f8] sm:%s290] %v425
                %v427 = vld [vmem:[%s297 + $0x400] sm:%s290]
                %428 = vst [vmem:[%s298 + $0x200] sm:%s290] %v427
                %v429 = vld [vmem:[%s297 + $0x408] sm:%s290]
                %430 = vst [vmem:[%s298 + $0x208] sm:%s290] %v429
                %v431 = vld [vmem:[%s297 + $0x410] sm:%s290]
                %432 = vst [vmem:[%s298 + $0x210] sm:%s290] %v431
                %v433 = vld [vmem:[%s297 + $0x418] sm:%s290]
                %434 = vst [vmem:[%s298 + $0x218] sm:%s290] %v433
                %v435 = vld [vmem:[%s297 + $0x420] sm:%s290]
                %436 = vst [vmem:[%s298 + $0x220] sm:%s290] %v435
                %v437 = vld [vmem:[%s297 + $0x428] sm:%s290]
                %438 = vst [vmem:[%s298 + $0x228] sm:%s290] %v437
                %v439 = vld [vmem:[%s297 + $0x430] sm:%s290]
                %440 = vst [vmem:[%s298 + $0x230] sm:%s290] %v439
                %v441 = vld [vmem:[%s297 + $0x438] sm:%s290]
                %442 = vst [vmem:[%s298 + $0x238] sm:%s290] %v441
                %v443 = vld [vmem:[%s297 + $0x440] sm:%s290]
                %444 = vst [vmem:[%s298 + $0x240] sm:%s290] %v443
                %v445 = vld [vmem:[%s297 + $0x448] sm:%s290]
                %446 = vst [vmem:[%s298 + $0x248] sm:%s290] %v445
                %v447 = vld [vmem:[%s297 + $0x450] sm:%s290]
                %448 = vst [vmem:[%s298 + $0x250] sm:%s290] %v447
                %v449 = vld [vmem:[%s297 + $0x458] sm:%s290]
                %450 = vst [vmem:[%s298 + $0x258] sm:%s290] %v449
                %v451 = vld [vmem:[%s297 + $0x460] sm:%s290]
                %452 = vst [vmem:[%s298 + $0x260] sm:%s290] %v451
                %v453 = vld [vmem:[%s297 + $0x468] sm:%s290]
                %454 = vst [vmem:[%s298 + $0x268] sm:%s290] %v453
                %v455 = vld [vmem:[%s297 + $0x470] sm:%s290]
                %456 = vst [vmem:[%s298 + $0x270] sm:%s290] %v455
                %v457 = vld [vmem:[%s297 + $0x478] sm:%s290]
                %458 = vst [vmem:[%s298 + $0x278] sm:%s290] %v457
                %v459 = vld [vmem:[%s297 + $0x500] sm:%s290]
                %460 = vst [vmem:[%s298 + $0x280] sm:%s290] %v459
                %v461 = vld [vmem:[%s297 + $0x508] sm:%s290]
                %462 = vst [vmem:[%s298 + $0x288] sm:%s290] %v461
                %v463 = vld [vmem:[%s297 + $0x510] sm:%s290]
                %464 = vst [vmem:[%s298 + $0x290] sm:%s290] %v463
                %v465 = vld [vmem:[%s297 + $0x518] sm:%s290]
                %466 = vst [vmem:[%s298 + $0x298] sm:%s290] %v465
                %v467 = vld [vmem:[%s297 + $0x520] sm:%s290]
                %468 = vst [vmem:[%s298 + $0x2a0] sm:%s290] %v467
                %v469 = vld [vmem:[%s297 + $0x528] sm:%s290]
                %470 = vst [vmem:[%s298 + $0x2a8] sm:%s290] %v469
                %v471 = vld [vmem:[%s297 + $0x530] sm:%s290]
                %472 = vst [vmem:[%s298 + $0x2b0] sm:%s290] %v471
                %v473 = vld [vmem:[%s297 + $0x538] sm:%s290]
                %474 = vst [vmem:[%s298 + $0x2b8] sm:%s290] %v473
                %v475 = vld [vmem:[%s297 + $0x540] sm:%s290]
                %476 = vst [vmem:[%s298 + $0x2c0] sm:%s290] %v475
                %v477 = vld [vmem:[%s297 + $0x548] sm:%s290]
                %478 = vst [vmem:[%s298 + $0x2c8] sm:%s290] %v477
                %v479 = vld [vmem:[%s297 + $0x550] sm:%s290]
                %480 = vst [vmem:[%s298 + $0x2d0] sm:%s290] %v479
                %v481 = vld [vmem:[%s297 + $0x558] sm:%s290]
                %482 = vst [vmem:[%s298 + $0x2d8] sm:%s290] %v481
                %v483 = vld [vmem:[%s297 + $0x560] sm:%s290]
                %484 = vst [vmem:[%s298 + $0x2e0] sm:%s290] %v483
                %v485 = vld [vmem:[%s297 + $0x568] sm:%s290]
                %486 = vst [vmem:[%s298 + $0x2e8] sm:%s290] %v485
                %v487 = vld [vmem:[%s297 + $0x570] sm:%s290]
                %488 = vst [vmem:[%s298 + $0x2f0] sm:%s290] %v487
                %v489 = vld [vmem:[%s297 + $0x578] sm:%s290]
                %490 = vst [vmem:[%s298 + $0x2f8] sm:%s290] %v489
                %v491 = vld [vmem:[%s297 + $0x600] sm:%s290]
                %492 = vst [vmem:[%s298 + $0x300] sm:%s290] %v491
                %v493 = vld [vmem:[%s297 + $0x608] sm:%s290]
                %494 = vst [vmem:[%s298 + $0x308] sm:%s290] %v493
                %v495 = vld [vmem:[%s297 + $0x610] sm:%s290]
                %496 = vst [vmem:[%s298 + $0x310] sm:%s290] %v495
                %v497 = vld [vmem:[%s297 + $0x618] sm:%s290]
                %498 = vst [vmem:[%s298 + $0x318] sm:%s290] %v497
                %v499 = vld [vmem:[%s297 + $0x620] sm:%s290]
                %500 = vst [vmem:[%s298 + $0x320] sm:%s290] %v499
                %v501 = vld [vmem:[%s297 + $0x628] sm:%s290]
                %502 = vst [vmem:[%s298 + $0x328] sm:%s290] %v501
                %v503 = vld [vmem:[%s297 + $0x630] sm:%s290]
                %504 = vst [vmem:[%s298 + $0x330] sm:%s290] %v503
                %v505 = vld [vmem:[%s297 + $0x638] sm:%s290]
                %506 = vst [vmem:[%s298 + $0x338] sm:%s290] %v505
                %v507 = vld [vmem:[%s297 + $0x640] sm:%s290]
                %508 = vst [vmem:[%s298 + $0x340] sm:%s290] %v507
                %v509 = vld [vmem:[%s297 + $0x648] sm:%s290]
                %510 = vst [vmem:[%s298 + $0x348] sm:%s290] %v509
                %v511 = vld [vmem:[%s297 + $0x650] sm:%s290]
                %512 = vst [vmem:[%s298 + $0x350] sm:%s290] %v511
                %v513 = vld [vmem:[%s297 + $0x658] sm:%s290]
                %514 = vst [vmem:[%s298 + $0x358] sm:%s290] %v513
                %v515 = vld [vmem:[%s297 + $0x660] sm:%s290]
                %516 = vst [vmem:[%s298 + $0x360] sm:%s290] %v515
                %v517 = vld [vmem:[%s297 + $0x668] sm:%s290]
                %518 = vst [vmem:[%s298 + $0x368] sm:%s290] %v517
                %v519 = vld [vmem:[%s297 + $0x670] sm:%s290]
                %520 = vst [vmem:[%s298 + $0x370] sm:%s290] %v519
                %v521 = vld [vmem:[%s297 + $0x678] sm:%s290]
                %522 = vst [vmem:[%s298 + $0x378] sm:%s290] %v521
                %v523 = vld [vmem:[%s297 + $0x700] sm:%s290]
                %524 = vst [vmem:[%s298 + $0x380] sm:%s290] %v523
                %v525 = vld [vmem:[%s297 + $0x708] sm:%s290]
                %526 = vst [vmem:[%s298 + $0x388] sm:%s290] %v525
                %v527 = vld [vmem:[%s297 + $0x710] sm:%s290]
                %528 = vst [vmem:[%s298 + $0x390] sm:%s290] %v527
                %v529 = vld [vmem:[%s297 + $0x718] sm:%s290]
                %530 = vst [vmem:[%s298 + $0x398] sm:%s290] %v529
                %v531 = vld [vmem:[%s297 + $0x720] sm:%s290]
                %532 = vst [vmem:[%s298 + $0x3a0] sm:%s290] %v531
                %v533 = vld [vmem:[%s297 + $0x728] sm:%s290]
                %534 = vst [vmem:[%s298 + $0x3a8] sm:%s290] %v533
                %v535 = vld [vmem:[%s297 + $0x730] sm:%s290]
                %536 = vst [vmem:[%s298 + $0x3b0] sm:%s290] %v535
                %v537 = vld [vmem:[%s297 + $0x738] sm:%s290]
                %538 = vst [vmem:[%s298 + $0x3b8] sm:%s290] %v537
                %v539 = vld [vmem:[%s297 + $0x740] sm:%s290]
                %540 = vst [vmem:[%s298 + $0x3c0] sm:%s290] %v539
                %v541 = vld [vmem:[%s297 + $0x748] sm:%s290]
                %542 = vst [vmem:[%s298 + $0x3c8] sm:%s290] %v541
                %v543 = vld [vmem:[%s297 + $0x750] sm:%s290]
                %544 = vst [vmem:[%s298 + $0x3d0] sm:%s290] %v543
                %v545 = vld [vmem:[%s297 + $0x758] sm:%s290]
                %546 = vst [vmem:[%s298 + $0x3d8] sm:%s290] %v545
                %v547 = vld [vmem:[%s297 + $0x760] sm:%s290]
                %548 = vst [vmem:[%s298 + $0x3e0] sm:%s290] %v547
                %v549 = vld [vmem:[%s297 + $0x768] sm:%s290]
                %550 = vst [vmem:[%s298 + $0x3e8] sm:%s290] %v549
                %v551 = vld [vmem:[%s297 + $0x770] sm:%s290]
                %552 = vst [vmem:[%s298 + $0x3f0] sm:%s290] %v551
                %v553 = vld [vmem:[%s297 + $0x778] sm:%s290]
                %554 = vst [vmem:[%s298 + $0x3f8] sm:%s290] %v553
              $region45: #{tpu_custom_call.1} parent=39 // loop_footer
                %s296 = sadd.s32 1, %s292
              $region46: #{tpu_custom_call.1} parent=39 // loop_footer_branch
                %291 = sbr.rel target = $region42
              $region47: #{tpu_custom_call.1} parent=39 // loop_exit
                _
            $region40: #{tpu_custom_call.1} parent=31 // pred_fallthru
              _
          $region32: #{tpu_custom_call.1} parent=27 // pred_fallthru
            _
          %823 = vnop
        $region28: #{tpu_custom_call.1} parent=23 // pred_fallthru
          _
        // Predicated region
        $region63: #{tpu_custom_call.1} parent=23 // pred_check
          %p824 = pneg %p83
        $region64: #{tpu_custom_call.1} parent=23 // pred_check_branch
          %826 = sbr.rel (%p824) target = $region66
        $region65: #{tpu_custom_call.1} parent=23 // pred_region
          %s827 = sand.u32 %s73, 1
          %s828 = sand.u32 %s73, 1
          %s829 = smul.addr %s828, 1024
          %s830 = scalar_lea.vmem [#allocation5], %s829
          %s831 = smul.u32 8, %s28
          %s832 = smul.u32 16, %s29
          %s833 = smul.addr %s831, 32
          %s834 = sadd.s32 %s832, %s833
          %s835 = smul.addr %s834, 8
          %s836 = scalar_lea.vmem %s1, %s835
          // Predicated region
          $region67: #{tpu_custom_call.1} parent=65 // pred_check
            _
          $region68: #{tpu_custom_call.1} parent=65 // pred_check_branch
            %838 = sbr.rel (0) target = $region70
          $region69: #{tpu_custom_call.1} parent=65 // pred_region
            // Predicated region
            $region71: #{tpu_custom_call.1} parent=69 // pred_check
              _
            $region72: #{tpu_custom_call.1} parent=69 // pred_check_branch
              %840 = sbr.rel (0) target = $region74
            $region73: #{tpu_custom_call.1} parent=69 // pred_region
              // Predicated region
              $region86: #{tpu_custom_call.1} parent=73 // pred_check
                _
              $region87: #{tpu_custom_call.1} parent=73 // pred_check_branch
                %1110 = sbr.rel (0) target = $region89
              $region88: #{tpu_custom_call.1} parent=73 // pred_region
                loop: start=0, step=1, limit=1
                $region90: #{tpu_custom_call.1} parent=88 // loop_pre_header
                  _
                $region91: #{tpu_custom_call.1} parent=88 // loop_header
                  %s1112 = sphi 0, %s1116
                  %p1113 = scmp.ge.s32.totalorder %s1112, 1
                  %s1117 = sphi %s836, %s836
                  %s1118 = sphi %s830, %s830
                $region92: #{tpu_custom_call.1} parent=88 // loop_header_branch
                  %1115 = sbr.rel (%p1113) target = $region96
                $region93: #{tpu_custom_call.1} parent=88 // loop_body
                  %v1119 = vld [vmem:[%s1117] sm:$0xff]
                  %1120 = vst [vmem:[%s1118] sm:$0xff] %v1119
                  %v1121 = vld [vmem:[%s1117 + $0x8] sm:$0xff]
                  %1122 = vst [vmem:[%s1118 + $0x8] sm:$0xff] %v1121
                  %v1123 = vld [vmem:[%s1117 + $0x10] sm:$0xff]
                  %1124 = vst [vmem:[%s1118 + $0x10] sm:$0xff] %v1123
                  %v1125 = vld [vmem:[%s1117 + $0x18] sm:$0xff]
                  %1126 = vst [vmem:[%s1118 + $0x18] sm:$0xff] %v1125
                  %v1127 = vld [vmem:[%s1117 + $0x20] sm:$0xff]
                  %1128 = vst [vmem:[%s1118 + $0x20] sm:$0xff] %v1127
                  %v1129 = vld [vmem:[%s1117 + $0x28] sm:$0xff]
                  %1130 = vst [vmem:[%s1118 + $0x28] sm:$0xff] %v1129
                  %v1131 = vld [vmem:[%s1117 + $0x30] sm:$0xff]
                  %1132 = vst [vmem:[%s1118 + $0x30] sm:$0xff] %v1131
                  %v1133 = vld [vmem:[%s1117 + $0x38] sm:$0xff]
                  %1134 = vst [vmem:[%s1118 + $0x38] sm:$0xff] %v1133
                  %v1135 = vld [vmem:[%s1117 + $0x40] sm:$0xff]
                  %1136 = vst [vmem:[%s1118 + $0x40] sm:$0xff] %v1135
                  %v1137 = vld [vmem:[%s1117 + $0x48] sm:$0xff]
                  %1138 = vst [vmem:[%s1118 + $0x48] sm:$0xff] %v1137
                  %v1139 = vld [vmem:[%s1117 + $0x50] sm:$0xff]
                  %1140 = vst [vmem:[%s1118 + $0x50] sm:$0xff] %v1139
                  %v1141 = vld [vmem:[%s1117 + $0x58] sm:$0xff]
                  %1142 = vst [vmem:[%s1118 + $0x58] sm:$0xff] %v1141
                  %v1143 = vld [vmem:[%s1117 + $0x60] sm:$0xff]
                  %1144 = vst [vmem:[%s1118 + $0x60] sm:$0xff] %v1143
                  %v1145 = vld [vmem:[%s1117 + $0x68] sm:$0xff]
                  %1146 = vst [vmem:[%s1118 + $0x68] sm:$0xff] %v1145
                  %v1147 = vld [vmem:[%s1117 + $0x70] sm:$0xff]
                  %1148 = vst [vmem:[%s1118 + $0x70] sm:$0xff] %v1147
                  %v1149 = vld [vmem:[%s1117 + $0x78] sm:$0xff]
                  %1150 = vst [vmem:[%s1118 + $0x78] sm:$0xff] %v1149
                  %v1151 = vld [vmem:[%s1117 + $0x100] sm:$0xff]
                  %1152 = vst [vmem:[%s1118 + $0x80] sm:$0xff] %v1151
                  %v1153 = vld [vmem:[%s1117 + $0x108] sm:$0xff]
                  %1154 = vst [vmem:[%s1118 + $0x88] sm:$0xff] %v1153
                  %v1155 = vld [vmem:[%s1117 + $0x110] sm:$0xff]
                  %1156 = vst [vmem:[%s1118 + $0x90] sm:$0xff] %v1155
                  %v1157 = vld [vmem:[%s1117 + $0x118] sm:$0xff]
                  %1158 = vst [vmem:[%s1118 + $0x98] sm:$0xff] %v1157
                  %v1159 = vld [vmem:[%s1117 + $0x120] sm:$0xff]
                  %1160 = vst [vmem:[%s1118 + $0xa0] sm:$0xff] %v1159
                  %v1161 = vld [vmem:[%s1117 + $0x128] sm:$0xff]
                  %1162 = vst [vmem:[%s1118 + $0xa8] sm:$0xff] %v1161
                  %v1163 = vld [vmem:[%s1117 + $0x130] sm:$0xff]
                  %1164 = vst [vmem:[%s1118 + $0xb0] sm:$0xff] %v1163
                  %v1165 = vld [vmem:[%s1117 + $0x138] sm:$0xff]
                  %1166 = vst [vmem:[%s1118 + $0xb8] sm:$0xff] %v1165
                  %v1167 = vld [vmem:[%s1117 + $0x140] sm:$0xff]
                  %1168 = vst [vmem:[%s1118 + $0xc0] sm:$0xff] %v1167
                  %v1169 = vld [vmem:[%s1117 + $0x148] sm:$0xff]
                  %1170 = vst [vmem:[%s1118 + $0xc8] sm:$0xff] %v1169
                  %v1171 = vld [vmem:[%s1117 + $0x150] sm:$0xff]
                  %1172 = vst [vmem:[%s1118 + $0xd0] sm:$0xff] %v1171
                  %v1173 = vld [vmem:[%s1117 + $0x158] sm:$0xff]
                  %1174 = vst [vmem:[%s1118 + $0xd8] sm:$0xff] %v1173
                  %v1175 = vld [vmem:[%s1117 + $0x160] sm:$0xff]
                  %1176 = vst [vmem:[%s1118 + $0xe0] sm:$0xff] %v1175
                  %v1177 = vld [vmem:[%s1117 + $0x168] sm:$0xff]
                  %1178 = vst [vmem:[%s1118 + $0xe8] sm:$0xff] %v1177
                  %v1179 = vld [vmem:[%s1117 + $0x170] sm:$0xff]
                  %1180 = vst [vmem:[%s1118 + $0xf0] sm:$0xff] %v1179
                  %v1181 = vld [vmem:[%s1117 + $0x178] sm:$0xff]
                  %1182 = vst [vmem:[%s1118 + $0xf8] sm:$0xff] %v1181
                  %v1183 = vld [vmem:[%s1117 + $0x200] sm:$0xff]
                  %1184 = vst [vmem:[%s1118 + $0x100] sm:$0xff] %v1183
                  %v1185 = vld [vmem:[%s1117 + $0x208] sm:$0xff]
                  %1186 = vst [vmem:[%s1118 + $0x108] sm:$0xff] %v1185
                  %v1187 = vld [vmem:[%s1117 + $0x210] sm:$0xff]
                  %1188 = vst [vmem:[%s1118 + $0x110] sm:$0xff] %v1187
                  %v1189 = vld [vmem:[%s1117 + $0x218] sm:$0xff]
                  %1190 = vst [vmem:[%s1118 + $0x118] sm:$0xff] %v1189
                  %v1191 = vld [vmem:[%s1117 + $0x220] sm:$0xff]
                  %1192 = vst [vmem:[%s1118 + $0x120] sm:$0xff] %v1191
                  %v1193 = vld [vmem:[%s1117 + $0x228] sm:$0xff]
                  %1194 = vst [vmem:[%s1118 + $0x128] sm:$0xff] %v1193
                  %v1195 = vld [vmem:[%s1117 + $0x230] sm:$0xff]
                  %1196 = vst [vmem:[%s1118 + $0x130] sm:$0xff] %v1195
                  %v1197 = vld [vmem:[%s1117 + $0x238] sm:$0xff]
                  %1198 = vst [vmem:[%s1118 + $0x138] sm:$0xff] %v1197
                  %v1199 = vld [vmem:[%s1117 + $0x240] sm:$0xff]
                  %1200 = vst [vmem:[%s1118 + $0x140] sm:$0xff] %v1199
                  %v1201 = vld [vmem:[%s1117 + $0x248] sm:$0xff]
                  %1202 = vst [vmem:[%s1118 + $0x148] sm:$0xff] %v1201
                  %v1203 = vld [vmem:[%s1117 + $0x250] sm:$0xff]
                  %1204 = vst [vmem:[%s1118 + $0x150] sm:$0xff] %v1203
                  %v1205 = vld [vmem:[%s1117 + $0x258] sm:$0xff]
                  %1206 = vst [vmem:[%s1118 + $0x158] sm:$0xff] %v1205
                  %v1207 = vld [vmem:[%s1117 + $0x260] sm:$0xff]
                  %1208 = vst [vmem:[%s1118 + $0x160] sm:$0xff] %v1207
                  %v1209 = vld [vmem:[%s1117 + $0x268] sm:$0xff]
                  %1210 = vst [vmem:[%s1118 + $0x168] sm:$0xff] %v1209
                  %v1211 = vld [vmem:[%s1117 + $0x270] sm:$0xff]
                  %1212 = vst [vmem:[%s1118 + $0x170] sm:$0xff] %v1211
                  %v1213 = vld [vmem:[%s1117 + $0x278] sm:$0xff]
                  %1214 = vst [vmem:[%s1118 + $0x178] sm:$0xff] %v1213
                  %v1215 = vld [vmem:[%s1117 + $0x300] sm:$0xff]
                  %1216 = vst [vmem:[%s1118 + $0x180] sm:$0xff] %v1215
                  %v1217 = vld [vmem:[%s1117 + $0x308] sm:$0xff]
                  %1218 = vst [vmem:[%s1118 + $0x188] sm:$0xff] %v1217
                  %v1219 = vld [vmem:[%s1117 + $0x310] sm:$0xff]
                  %1220 = vst [vmem:[%s1118 + $0x190] sm:$0xff] %v1219
                  %v1221 = vld [vmem:[%s1117 + $0x318] sm:$0xff]
                  %1222 = vst [vmem:[%s1118 + $0x198] sm:$0xff] %v1221
                  %v1223 = vld [vmem:[%s1117 + $0x320] sm:$0xff]
                  %1224 = vst [vmem:[%s1118 + $0x1a0] sm:$0xff] %v1223
                  %v1225 = vld [vmem:[%s1117 + $0x328] sm:$0xff]
                  %1226 = vst [vmem:[%s1118 + $0x1a8] sm:$0xff] %v1225
                  %v1227 = vld [vmem:[%s1117 + $0x330] sm:$0xff]
                  %1228 = vst [vmem:[%s1118 + $0x1b0] sm:$0xff] %v1227
                  %v1229 = vld [vmem:[%s1117 + $0x338] sm:$0xff]
                  %1230 = vst [vmem:[%s1118 + $0x1b8] sm:$0xff] %v1229
                  %v1231 = vld [vmem:[%s1117 + $0x340] sm:$0xff]
                  %1232 = vst [vmem:[%s1118 + $0x1c0] sm:$0xff] %v1231
                  %v1233 = vld [vmem:[%s1117 + $0x348] sm:$0xff]
                  %1234 = vst [vmem:[%s1118 + $0x1c8] sm:$0xff] %v1233
                  %v1235 = vld [vmem:[%s1117 + $0x350] sm:$0xff]
                  %1236 = vst [vmem:[%s1118 + $0x1d0] sm:$0xff] %v1235
                  %v1237 = vld [vmem:[%s1117 + $0x358] sm:$0xff]
                  %1238 = vst [vmem:[%s1118 + $0x1d8] sm:$0xff] %v1237
                  %v1239 = vld [vmem:[%s1117 + $0x360] sm:$0xff]
                  %1240 = vst [vmem:[%s1118 + $0x1e0] sm:$0xff] %v1239
                  %v1241 = vld [vmem:[%s1117 + $0x368] sm:$0xff]
                  %1242 = vst [vmem:[%s1118 + $0x1e8] sm:$0xff] %v1241
                  %v1243 = vld [vmem:[%s1117 + $0x370] sm:$0xff]
                  %1244 = vst [vmem:[%s1118 + $0x1f0] sm:$0xff] %v1243
                  %v1245 = vld [vmem:[%s1117 + $0x378] sm:$0xff]
                  %1246 = vst [vmem:[%s1118 + $0x1f8] sm:$0xff] %v1245
                  %v1247 = vld [vmem:[%s1117 + $0x400] sm:$0xff]
                  %1248 = vst [vmem:[%s1118 + $0x200] sm:$0xff] %v1247
                  %v1249 = vld [vmem:[%s1117 + $0x408] sm:$0xff]
                  %1250 = vst [vmem:[%s1118 + $0x208] sm:$0xff] %v1249
                  %v1251 = vld [vmem:[%s1117 + $0x410] sm:$0xff]
                  %1252 = vst [vmem:[%s1118 + $0x210] sm:$0xff] %v1251
                  %v1253 = vld [vmem:[%s1117 + $0x418] sm:$0xff]
                  %1254 = vst [vmem:[%s1118 + $0x218] sm:$0xff] %v1253
                  %v1255 = vld [vmem:[%s1117 + $0x420] sm:$0xff]
                  %1256 = vst [vmem:[%s1118 + $0x220] sm:$0xff] %v1255
                  %v1257 = vld [vmem:[%s1117 + $0x428] sm:$0xff]
                  %1258 = vst [vmem:[%s1118 + $0x228] sm:$0xff] %v1257
                  %v1259 = vld [vmem:[%s1117 + $0x430] sm:$0xff]
                  %1260 = vst [vmem:[%s1118 + $0x230] sm:$0xff] %v1259
                  %v1261 = vld [vmem:[%s1117 + $0x438] sm:$0xff]
                  %1262 = vst [vmem:[%s1118 + $0x238] sm:$0xff] %v1261
                  %v1263 = vld [vmem:[%s1117 + $0x440] sm:$0xff]
                  %1264 = vst [vmem:[%s1118 + $0x240] sm:$0xff] %v1263
                  %v1265 = vld [vmem:[%s1117 + $0x448] sm:$0xff]
                  %1266 = vst [vmem:[%s1118 + $0x248] sm:$0xff] %v1265
                  %v1267 = vld [vmem:[%s1117 + $0x450] sm:$0xff]
                  %1268 = vst [vmem:[%s1118 + $0x250] sm:$0xff] %v1267
                  %v1269 = vld [vmem:[%s1117 + $0x458] sm:$0xff]
                  %1270 = vst [vmem:[%s1118 + $0x258] sm:$0xff] %v1269
                  %v1271 = vld [vmem:[%s1117 + $0x460] sm:$0xff]
                  %1272 = vst [vmem:[%s1118 + $0x260] sm:$0xff] %v1271
                  %v1273 = vld [vmem:[%s1117 + $0x468] sm:$0xff]
                  %1274 = vst [vmem:[%s1118 + $0x268] sm:$0xff] %v1273
                  %v1275 = vld [vmem:[%s1117 + $0x470] sm:$0xff]
                  %1276 = vst [vmem:[%s1118 + $0x270] sm:$0xff] %v1275
                  %v1277 = vld [vmem:[%s1117 + $0x478] sm:$0xff]
                  %1278 = vst [vmem:[%s1118 + $0x278] sm:$0xff] %v1277
                  %v1279 = vld [vmem:[%s1117 + $0x500] sm:$0xff]
                  %1280 = vst [vmem:[%s1118 + $0x280] sm:$0xff] %v1279
                  %v1281 = vld [vmem:[%s1117 + $0x508] sm:$0xff]
                  %1282 = vst [vmem:[%s1118 + $0x288] sm:$0xff] %v1281
                  %v1283 = vld [vmem:[%s1117 + $0x510] sm:$0xff]
                  %1284 = vst [vmem:[%s1118 + $0x290] sm:$0xff] %v1283
                  %v1285 = vld [vmem:[%s1117 + $0x518] sm:$0xff]
                  %1286 = vst [vmem:[%s1118 + $0x298] sm:$0xff] %v1285
                  %v1287 = vld [vmem:[%s1117 + $0x520] sm:$0xff]
                  %1288 = vst [vmem:[%s1118 + $0x2a0] sm:$0xff] %v1287
                  %v1289 = vld [vmem:[%s1117 + $0x528] sm:$0xff]
                  %1290 = vst [vmem:[%s1118 + $0x2a8] sm:$0xff] %v1289
                  %v1291 = vld [vmem:[%s1117 + $0x530] sm:$0xff]
                  %1292 = vst [vmem:[%s1118 + $0x2b0] sm:$0xff] %v1291
                  %v1293 = vld [vmem:[%s1117 + $0x538] sm:$0xff]
                  %1294 = vst [vmem:[%s1118 + $0x2b8] sm:$0xff] %v1293
                  %v1295 = vld [vmem:[%s1117 + $0x540] sm:$0xff]
                  %1296 = vst [vmem:[%s1118 + $0x2c0] sm:$0xff] %v1295
                  %v1297 = vld [vmem:[%s1117 + $0x548] sm:$0xff]
                  %1298 = vst [vmem:[%s1118 + $0x2c8] sm:$0xff] %v1297
                  %v1299 = vld [vmem:[%s1117 + $0x550] sm:$0xff]
                  %1300 = vst [vmem:[%s1118 + $0x2d0] sm:$0xff] %v1299
                  %v1301 = vld [vmem:[%s1117 + $0x558] sm:$0xff]
                  %1302 = vst [vmem:[%s1118 + $0x2d8] sm:$0xff] %v1301
                  %v1303 = vld [vmem:[%s1117 + $0x560] sm:$0xff]
                  %1304 = vst [vmem:[%s1118 + $0x2e0] sm:$0xff] %v1303
                  %v1305 = vld [vmem:[%s1117 + $0x568] sm:$0xff]
                  %1306 = vst [vmem:[%s1118 + $0x2e8] sm:$0xff] %v1305
                  %v1307 = vld [vmem:[%s1117 + $0x570] sm:$0xff]
                  %1308 = vst [vmem:[%s1118 + $0x2f0] sm:$0xff] %v1307
                  %v1309 = vld [vmem:[%s1117 + $0x578] sm:$0xff]
                  %1310 = vst [vmem:[%s1118 + $0x2f8] sm:$0xff] %v1309
                  %v1311 = vld [vmem:[%s1117 + $0x600] sm:$0xff]
                  %1312 = vst [vmem:[%s1118 + $0x300] sm:$0xff] %v1311
                  %v1313 = vld [vmem:[%s1117 + $0x608] sm:$0xff]
                  %1314 = vst [vmem:[%s1118 + $0x308] sm:$0xff] %v1313
                  %v1315 = vld [vmem:[%s1117 + $0x610] sm:$0xff]
                  %1316 = vst [vmem:[%s1118 + $0x310] sm:$0xff] %v1315
                  %v1317 = vld [vmem:[%s1117 + $0x618] sm:$0xff]
                  %1318 = vst [vmem:[%s1118 + $0x318] sm:$0xff] %v1317
                  %v1319 = vld [vmem:[%s1117 + $0x620] sm:$0xff]
                  %1320 = vst [vmem:[%s1118 + $0x320] sm:$0xff] %v1319
                  %v1321 = vld [vmem:[%s1117 + $0x628] sm:$0xff]
                  %1322 = vst [vmem:[%s1118 + $0x328] sm:$0xff] %v1321
                  %v1323 = vld [vmem:[%s1117 + $0x630] sm:$0xff]
                  %1324 = vst [vmem:[%s1118 + $0x330] sm:$0xff] %v1323
                  %v1325 = vld [vmem:[%s1117 + $0x638] sm:$0xff]
                  %1326 = vst [vmem:[%s1118 + $0x338] sm:$0xff] %v1325
                  %v1327 = vld [vmem:[%s1117 + $0x640] sm:$0xff]
                  %1328 = vst [vmem:[%s1118 + $0x340] sm:$0xff] %v1327
                  %v1329 = vld [vmem:[%s1117 + $0x648] sm:$0xff]
                  %1330 = vst [vmem:[%s1118 + $0x348] sm:$0xff] %v1329
                  %v1331 = vld [vmem:[%s1117 + $0x650] sm:$0xff]
                  %1332 = vst [vmem:[%s1118 + $0x350] sm:$0xff] %v1331
                  %v1333 = vld [vmem:[%s1117 + $0x658] sm:$0xff]
                  %1334 = vst [vmem:[%s1118 + $0x358] sm:$0xff] %v1333
                  %v1335 = vld [vmem:[%s1117 + $0x660] sm:$0xff]
                  %1336 = vst [vmem:[%s1118 + $0x360] sm:$0xff] %v1335
                  %v1337 = vld [vmem:[%s1117 + $0x668] sm:$0xff]
                  %1338 = vst [vmem:[%s1118 + $0x368] sm:$0xff] %v1337
                  %v1339 = vld [vmem:[%s1117 + $0x670] sm:$0xff]
                  %1340 = vst [vmem:[%s1118 + $0x370] sm:$0xff] %v1339
                  %v1341 = vld [vmem:[%s1117 + $0x678] sm:$0xff]
                  %1342 = vst [vmem:[%s1118 + $0x378] sm:$0xff] %v1341
                  %v1343 = vld [vmem:[%s1117 + $0x700] sm:$0xff]
                  %1344 = vst [vmem:[%s1118 + $0x380] sm:$0xff] %v1343
                  %v1345 = vld [vmem:[%s1117 + $0x708] sm:$0xff]
                  %1346 = vst [vmem:[%s1118 + $0x388] sm:$0xff] %v1345
                  %v1347 = vld [vmem:[%s1117 + $0x710] sm:$0xff]
                  %1348 = vst [vmem:[%s1118 + $0x390] sm:$0xff] %v1347
                  %v1349 = vld [vmem:[%s1117 + $0x718] sm:$0xff]
                  %1350 = vst [vmem:[%s1118 + $0x398] sm:$0xff] %v1349
                  %v1351 = vld [vmem:[%s1117 + $0x720] sm:$0xff]
                  %1352 = vst [vmem:[%s1118 + $0x3a0] sm:$0xff] %v1351
                  %v1353 = vld [vmem:[%s1117 + $0x728] sm:$0xff]
                  %1354 = vst [vmem:[%s1118 + $0x3a8] sm:$0xff] %v1353
                  %v1355 = vld [vmem:[%s1117 + $0x730] sm:$0xff]
                  %1356 = vst [vmem:[%s1118 + $0x3b0] sm:$0xff] %v1355
                  %v1357 = vld [vmem:[%s1117 + $0x738] sm:$0xff]
                  %1358 = vst [vmem:[%s1118 + $0x3b8] sm:$0xff] %v1357
                  %v1359 = vld [vmem:[%s1117 + $0x740] sm:$0xff]
                  %1360 = vst [vmem:[%s1118 + $0x3c0] sm:$0xff] %v1359
                  %v1361 = vld [vmem:[%s1117 + $0x748] sm:$0xff]
                  %1362 = vst [vmem:[%s1118 + $0x3c8] sm:$0xff] %v1361
                  %v1363 = vld [vmem:[%s1117 + $0x750] sm:$0xff]
                  %1364 = vst [vmem:[%s1118 + $0x3d0] sm:$0xff] %v1363
                  %v1365 = vld [vmem:[%s1117 + $0x758] sm:$0xff]
                  %1366 = vst [vmem:[%s1118 + $0x3d8] sm:$0xff] %v1365
                  %v1367 = vld [vmem:[%s1117 + $0x760] sm:$0xff]
                  %1368 = vst [vmem:[%s1118 + $0x3e0] sm:$0xff] %v1367
                  %v1369 = vld [vmem:[%s1117 + $0x768] sm:$0xff]
                  %1370 = vst [vmem:[%s1118 + $0x3e8] sm:$0xff] %v1369
                  %v1371 = vld [vmem:[%s1117 + $0x770] sm:$0xff]
                  %1372 = vst [vmem:[%s1118 + $0x3f0] sm:$0xff] %v1371
                  %v1373 = vld [vmem:[%s1117 + $0x778] sm:$0xff]
                  %1374 = vst [vmem:[%s1118 + $0x3f8] sm:$0xff] %v1373
                $region94: #{tpu_custom_call.1} parent=88 // loop_footer
                  %s1116 = sadd.s32 1, %s1112
                $region95: #{tpu_custom_call.1} parent=88 // loop_footer_branch
                  %1111 = sbr.rel target = $region91
                $region96: #{tpu_custom_call.1} parent=88 // loop_exit
                  _
              $region89: #{tpu_custom_call.1} parent=73 // pred_fallthru
                _
              // Predicated region
              $region97: #{tpu_custom_call.1} parent=73 // pred_check
                _
              $region98: #{tpu_custom_call.1} parent=73 // pred_check_branch
                %1376 = sbr.rel target = $region100
              $region99: #{tpu_custom_call.1} parent=73 // pred_region
                _
              $region100: #{tpu_custom_call.1} parent=73 // pred_fallthru
                _
            $region74: #{tpu_custom_call.1} parent=69 // pred_fallthru
              _
            // Predicated region
            $region75: #{tpu_custom_call.1} parent=69 // pred_check
              _
            $region76: #{tpu_custom_call.1} parent=69 // pred_check_branch
              %842 = sbr.rel target = $region78
            $region77: #{tpu_custom_call.1} parent=69 // pred_region
              %s844 = ssub.s32 256, 1
              loop: start=0, step=1, limit=1
              $region79: #{tpu_custom_call.1} parent=77 // loop_pre_header
                _
              $region80: #{tpu_custom_call.1} parent=77 // loop_header
                %s846 = sphi 0, %s850
                %p847 = scmp.ge.s32.totalorder %s846, 1
                %s851 = sphi %s836, %s836
                %s852 = sphi %s830, %s830
              $region81: #{tpu_custom_call.1} parent=77 // loop_header_branch
                %849 = sbr.rel (%p847) target = $region85
              $region82: #{tpu_custom_call.1} parent=77 // loop_body
                %v853 = vld [vmem:[%s851] sm:%s844]
                %854 = vst [vmem:[%s852] sm:%s844] %v853
                %v855 = vld [vmem:[%s851 + $0x8] sm:%s844]
                %856 = vst [vmem:[%s852 + $0x8] sm:%s844] %v855
                %v857 = vld [vmem:[%s851 + $0x10] sm:%s844]
                %858 = vst [vmem:[%s852 + $0x10] sm:%s844] %v857
                %v859 = vld [vmem:[%s851 + $0x18] sm:%s844]
                %860 = vst [vmem:[%s852 + $0x18] sm:%s844] %v859
                %v861 = vld [vmem:[%s851 + $0x20] sm:%s844]
                %862 = vst [vmem:[%s852 + $0x20] sm:%s844] %v861
                %v863 = vld [vmem:[%s851 + $0x28] sm:%s844]
                %864 = vst [vmem:[%s852 + $0x28] sm:%s844] %v863
                %v865 = vld [vmem:[%s851 + $0x30] sm:%s844]
                %866 = vst [vmem:[%s852 + $0x30] sm:%s844] %v865
                %v867 = vld [vmem:[%s851 + $0x38] sm:%s844]
                %868 = vst [vmem:[%s852 + $0x38] sm:%s844] %v867
                %v869 = vld [vmem:[%s851 + $0x40] sm:%s844]
                %870 = vst [vmem:[%s852 + $0x40] sm:%s844] %v869
                %v871 = vld [vmem:[%s851 + $0x48] sm:%s844]
                %872 = vst [vmem:[%s852 + $0x48] sm:%s844] %v871
                %v873 = vld [vmem:[%s851 + $0x50] sm:%s844]
                %874 = vst [vmem:[%s852 + $0x50] sm:%s844] %v873
                %v875 = vld [vmem:[%s851 + $0x58] sm:%s844]
                %876 = vst [vmem:[%s852 + $0x58] sm:%s844] %v875
                %v877 = vld [vmem:[%s851 + $0x60] sm:%s844]
                %878 = vst [vmem:[%s852 + $0x60] sm:%s844] %v877
                %v879 = vld [vmem:[%s851 + $0x68] sm:%s844]
                %880 = vst [vmem:[%s852 + $0x68] sm:%s844] %v879
                %v881 = vld [vmem:[%s851 + $0x70] sm:%s844]
                %882 = vst [vmem:[%s852 + $0x70] sm:%s844] %v881
                %v883 = vld [vmem:[%s851 + $0x78] sm:%s844]
                %884 = vst [vmem:[%s852 + $0x78] sm:%s844] %v883
                %v885 = vld [vmem:[%s851 + $0x100] sm:%s844]
                %886 = vst [vmem:[%s852 + $0x80] sm:%s844] %v885
                %v887 = vld [vmem:[%s851 + $0x108] sm:%s844]
                %888 = vst [vmem:[%s852 + $0x88] sm:%s844] %v887
                %v889 = vld [vmem:[%s851 + $0x110] sm:%s844]
                %890 = vst [vmem:[%s852 + $0x90] sm:%s844] %v889
                %v891 = vld [vmem:[%s851 + $0x118] sm:%s844]
                %892 = vst [vmem:[%s852 + $0x98] sm:%s844] %v891
                %v893 = vld [vmem:[%s851 + $0x120] sm:%s844]
                %894 = vst [vmem:[%s852 + $0xa0] sm:%s844] %v893
                %v895 = vld [vmem:[%s851 + $0x128] sm:%s844]
                %896 = vst [vmem:[%s852 + $0xa8] sm:%s844] %v895
                %v897 = vld [vmem:[%s851 + $0x130] sm:%s844]
                %898 = vst [vmem:[%s852 + $0xb0] sm:%s844] %v897
                %v899 = vld [vmem:[%s851 + $0x138] sm:%s844]
                %900 = vst [vmem:[%s852 + $0xb8] sm:%s844] %v899
                %v901 = vld [vmem:[%s851 + $0x140] sm:%s844]
                %902 = vst [vmem:[%s852 + $0xc0] sm:%s844] %v901
                %v903 = vld [vmem:[%s851 + $0x148] sm:%s844]
                %904 = vst [vmem:[%s852 + $0xc8] sm:%s844] %v903
                %v905 = vld [vmem:[%s851 + $0x150] sm:%s844]
                %906 = vst [vmem:[%s852 + $0xd0] sm:%s844] %v905
                %v907 = vld [vmem:[%s851 + $0x158] sm:%s844]
                %908 = vst [vmem:[%s852 + $0xd8] sm:%s844] %v907
                %v909 = vld [vmem:[%s851 + $0x160] sm:%s844]
                %910 = vst [vmem:[%s852 + $0xe0] sm:%s844] %v909
                %v911 = vld [vmem:[%s851 + $0x168] sm:%s844]
                %912 = vst [vmem:[%s852 + $0xe8] sm:%s844] %v911
                %v913 = vld [vmem:[%s851 + $0x170] sm:%s844]
                %914 = vst [vmem:[%s852 + $0xf0] sm:%s844] %v913
                %v915 = vld [vmem:[%s851 + $0x178] sm:%s844]
                %916 = vst [vmem:[%s852 + $0xf8] sm:%s844] %v915
                %v917 = vld [vmem:[%s851 + $0x200] sm:%s844]
                %918 = vst [vmem:[%s852 + $0x100] sm:%s844] %v917
                %v919 = vld [vmem:[%s851 + $0x208] sm:%s844]
                %920 = vst [vmem:[%s852 + $0x108] sm:%s844] %v919
                %v921 = vld [vmem:[%s851 + $0x210] sm:%s844]
                %922 = vst [vmem:[%s852 + $0x110] sm:%s844] %v921
                %v923 = vld [vmem:[%s851 + $0x218] sm:%s844]
                %924 = vst [vmem:[%s852 + $0x118] sm:%s844] %v923
                %v925 = vld [vmem:[%s851 + $0x220] sm:%s844]
                %926 = vst [vmem:[%s852 + $0x120] sm:%s844] %v925
                %v927 = vld [vmem:[%s851 + $0x228] sm:%s844]
                %928 = vst [vmem:[%s852 + $0x128] sm:%s844] %v927
                %v929 = vld [vmem:[%s851 + $0x230] sm:%s844]
                %930 = vst [vmem:[%s852 + $0x130] sm:%s844] %v929
                %v931 = vld [vmem:[%s851 + $0x238] sm:%s844]
                %932 = vst [vmem:[%s852 + $0x138] sm:%s844] %v931
                %v933 = vld [vmem:[%s851 + $0x240] sm:%s844]
                %934 = vst [vmem:[%s852 + $0x140] sm:%s844] %v933
                %v935 = vld [vmem:[%s851 + $0x248] sm:%s844]
                %936 = vst [vmem:[%s852 + $0x148] sm:%s844] %v935
                %v937 = vld [vmem:[%s851 + $0x250] sm:%s844]
                %938 = vst [vmem:[%s852 + $0x150] sm:%s844] %v937
                %v939 = vld [vmem:[%s851 + $0x258] sm:%s844]
                %940 = vst [vmem:[%s852 + $0x158] sm:%s844] %v939
                %v941 = vld [vmem:[%s851 + $0x260] sm:%s844]
                %942 = vst [vmem:[%s852 + $0x160] sm:%s844] %v941
                %v943 = vld [vmem:[%s851 + $0x268] sm:%s844]
                %944 = vst [vmem:[%s852 + $0x168] sm:%s844] %v943
                %v945 = vld [vmem:[%s851 + $0x270] sm:%s844]
                %946 = vst [vmem:[%s852 + $0x170] sm:%s844] %v945
                %v947 = vld [vmem:[%s851 + $0x278] sm:%s844]
                %948 = vst [vmem:[%s852 + $0x178] sm:%s844] %v947
                %v949 = vld [vmem:[%s851 + $0x300] sm:%s844]
                %950 = vst [vmem:[%s852 + $0x180] sm:%s844] %v949
                %v951 = vld [vmem:[%s851 + $0x308] sm:%s844]
                %952 = vst [vmem:[%s852 + $0x188] sm:%s844] %v951
                %v953 = vld [vmem:[%s851 + $0x310] sm:%s844]
                %954 = vst [vmem:[%s852 + $0x190] sm:%s844] %v953
                %v955 = vld [vmem:[%s851 + $0x318] sm:%s844]
                %956 = vst [vmem:[%s852 + $0x198] sm:%s844] %v955
                %v957 = vld [vmem:[%s851 + $0x320] sm:%s844]
                %958 = vst [vmem:[%s852 + $0x1a0] sm:%s844] %v957
                %v959 = vld [vmem:[%s851 + $0x328] sm:%s844]
                %960 = vst [vmem:[%s852 + $0x1a8] sm:%s844] %v959
                %v961 = vld [vmem:[%s851 + $0x330] sm:%s844]
                %962 = vst [vmem:[%s852 + $0x1b0] sm:%s844] %v961
                %v963 = vld [vmem:[%s851 + $0x338] sm:%s844]
                %964 = vst [vmem:[%s852 + $0x1b8] sm:%s844] %v963
                %v965 = vld [vmem:[%s851 + $0x340] sm:%s844]
                %966 = vst [vmem:[%s852 + $0x1c0] sm:%s844] %v965
                %v967 = vld [vmem:[%s851 + $0x348] sm:%s844]
                %968 = vst [vmem:[%s852 + $0x1c8] sm:%s844] %v967
                %v969 = vld [vmem:[%s851 + $0x350] sm:%s844]
                %970 = vst [vmem:[%s852 + $0x1d0] sm:%s844] %v969
                %v971 = vld [vmem:[%s851 + $0x358] sm:%s844]
                %972 = vst [vmem:[%s852 + $0x1d8] sm:%s844] %v971
                %v973 = vld [vmem:[%s851 + $0x360] sm:%s844]
                %974 = vst [vmem:[%s852 + $0x1e0] sm:%s844] %v973
                %v975 = vld [vmem:[%s851 + $0x368] sm:%s844]
                %976 = vst [vmem:[%s852 + $0x1e8] sm:%s844] %v975
                %v977 = vld [vmem:[%s851 + $0x370] sm:%s844]
                %978 = vst [vmem:[%s852 + $0x1f0] sm:%s844] %v977
                %v979 = vld [vmem:[%s851 + $0x378] sm:%s844]
                %980 = vst [vmem:[%s852 + $0x1f8] sm:%s844] %v979
                %v981 = vld [vmem:[%s851 + $0x400] sm:%s844]
                %982 = vst [vmem:[%s852 + $0x200] sm:%s844] %v981
                %v983 = vld [vmem:[%s851 + $0x408] sm:%s844]
                %984 = vst [vmem:[%s852 + $0x208] sm:%s844] %v983
                %v985 = vld [vmem:[%s851 + $0x410] sm:%s844]
                %986 = vst [vmem:[%s852 + $0x210] sm:%s844] %v985
                %v987 = vld [vmem:[%s851 + $0x418] sm:%s844]
                %988 = vst [vmem:[%s852 + $0x218] sm:%s844] %v987
                %v989 = vld [vmem:[%s851 + $0x420] sm:%s844]
                %990 = vst [vmem:[%s852 + $0x220] sm:%s844] %v989
                %v991 = vld [vmem:[%s851 + $0x428] sm:%s844]
                %992 = vst [vmem:[%s852 + $0x228] sm:%s844] %v991
                %v993 = vld [vmem:[%s851 + $0x430] sm:%s844]
                %994 = vst [vmem:[%s852 + $0x230] sm:%s844] %v993
                %v995 = vld [vmem:[%s851 + $0x438] sm:%s844]
                %996 = vst [vmem:[%s852 + $0x238] sm:%s844] %v995
                %v997 = vld [vmem:[%s851 + $0x440] sm:%s844]
                %998 = vst [vmem:[%s852 + $0x240] sm:%s844] %v997
                %v999 = vld [vmem:[%s851 + $0x448] sm:%s844]
                %1000 = vst [vmem:[%s852 + $0x248] sm:%s844] %v999
                %v1001 = vld [vmem:[%s851 + $0x450] sm:%s844]
                %1002 = vst [vmem:[%s852 + $0x250] sm:%s844] %v1001
                %v1003 = vld [vmem:[%s851 + $0x458] sm:%s844]
                %1004 = vst [vmem:[%s852 + $0x258] sm:%s844] %v1003
                %v1005 = vld [vmem:[%s851 + $0x460] sm:%s844]
                %1006 = vst [vmem:[%s852 + $0x260] sm:%s844] %v1005
                %v1007 = vld [vmem:[%s851 + $0x468] sm:%s844]
                %1008 = vst [vmem:[%s852 + $0x268] sm:%s844] %v1007
                %v1009 = vld [vmem:[%s851 + $0x470] sm:%s844]
                %1010 = vst [vmem:[%s852 + $0x270] sm:%s844] %v1009
                %v1011 = vld [vmem:[%s851 + $0x478] sm:%s844]
                %1012 = vst [vmem:[%s852 + $0x278] sm:%s844] %v1011
                %v1013 = vld [vmem:[%s851 + $0x500] sm:%s844]
                %1014 = vst [vmem:[%s852 + $0x280] sm:%s844] %v1013
                %v1015 = vld [vmem:[%s851 + $0x508] sm:%s844]
                %1016 = vst [vmem:[%s852 + $0x288] sm:%s844] %v1015
                %v1017 = vld [vmem:[%s851 + $0x510] sm:%s844]
                %1018 = vst [vmem:[%s852 + $0x290] sm:%s844] %v1017
                %v1019 = vld [vmem:[%s851 + $0x518] sm:%s844]
                %1020 = vst [vmem:[%s852 + $0x298] sm:%s844] %v1019
                %v1021 = vld [vmem:[%s851 + $0x520] sm:%s844]
                %1022 = vst [vmem:[%s852 + $0x2a0] sm:%s844] %v1021
                %v1023 = vld [vmem:[%s851 + $0x528] sm:%s844]
                %1024 = vst [vmem:[%s852 + $0x2a8] sm:%s844] %v1023
                %v1025 = vld [vmem:[%s851 + $0x530] sm:%s844]
                %1026 = vst [vmem:[%s852 + $0x2b0] sm:%s844] %v1025
                %v1027 = vld [vmem:[%s851 + $0x538] sm:%s844]
                %1028 = vst [vmem:[%s852 + $0x2b8] sm:%s844] %v1027
                %v1029 = vld [vmem:[%s851 + $0x540] sm:%s844]
                %1030 = vst [vmem:[%s852 + $0x2c0] sm:%s844] %v1029
                %v1031 = vld [vmem:[%s851 + $0x548] sm:%s844]
                %1032 = vst [vmem:[%s852 + $0x2c8] sm:%s844] %v1031
                %v1033 = vld [vmem:[%s851 + $0x550] sm:%s844]
                %1034 = vst [vmem:[%s852 + $0x2d0] sm:%s844] %v1033
                %v1035 = vld [vmem:[%s851 + $0x558] sm:%s844]
                %1036 = vst [vmem:[%s852 + $0x2d8] sm:%s844] %v1035
                %v1037 = vld [vmem:[%s851 + $0x560] sm:%s844]
                %1038 = vst [vmem:[%s852 + $0x2e0] sm:%s844] %v1037
                %v1039 = vld [vmem:[%s851 + $0x568] sm:%s844]
                %1040 = vst [vmem:[%s852 + $0x2e8] sm:%s844] %v1039
                %v1041 = vld [vmem:[%s851 + $0x570] sm:%s844]
                %1042 = vst [vmem:[%s852 + $0x2f0] sm:%s844] %v1041
                %v1043 = vld [vmem:[%s851 + $0x578] sm:%s844]
                %1044 = vst [vmem:[%s852 + $0x2f8] sm:%s844] %v1043
                %v1045 = vld [vmem:[%s851 + $0x600] sm:%s844]
                %1046 = vst [vmem:[%s852 + $0x300] sm:%s844] %v1045
                %v1047 = vld [vmem:[%s851 + $0x608] sm:%s844]
                %1048 = vst [vmem:[%s852 + $0x308] sm:%s844] %v1047
                %v1049 = vld [vmem:[%s851 + $0x610] sm:%s844]
                %1050 = vst [vmem:[%s852 + $0x310] sm:%s844] %v1049
                %v1051 = vld [vmem:[%s851 + $0x618] sm:%s844]
                %1052 = vst [vmem:[%s852 + $0x318] sm:%s844] %v1051
                %v1053 = vld [vmem:[%s851 + $0x620] sm:%s844]
                %1054 = vst [vmem:[%s852 + $0x320] sm:%s844] %v1053
                %v1055 = vld [vmem:[%s851 + $0x628] sm:%s844]
                %1056 = vst [vmem:[%s852 + $0x328] sm:%s844] %v1055
                %v1057 = vld [vmem:[%s851 + $0x630] sm:%s844]
                %1058 = vst [vmem:[%s852 + $0x330] sm:%s844] %v1057
                %v1059 = vld [vmem:[%s851 + $0x638] sm:%s844]
                %1060 = vst [vmem:[%s852 + $0x338] sm:%s844] %v1059
                %v1061 = vld [vmem:[%s851 + $0x640] sm:%s844]
                %1062 = vst [vmem:[%s852 + $0x340] sm:%s844] %v1061
                %v1063 = vld [vmem:[%s851 + $0x648] sm:%s844]
                %1064 = vst [vmem:[%s852 + $0x348] sm:%s844] %v1063
                %v1065 = vld [vmem:[%s851 + $0x650] sm:%s844]
                %1066 = vst [vmem:[%s852 + $0x350] sm:%s844] %v1065
                %v1067 = vld [vmem:[%s851 + $0x658] sm:%s844]
                %1068 = vst [vmem:[%s852 + $0x358] sm:%s844] %v1067
                %v1069 = vld [vmem:[%s851 + $0x660] sm:%s844]
                %1070 = vst [vmem:[%s852 + $0x360] sm:%s844] %v1069
                %v1071 = vld [vmem:[%s851 + $0x668] sm:%s844]
                %1072 = vst [vmem:[%s852 + $0x368] sm:%s844] %v1071
                %v1073 = vld [vmem:[%s851 + $0x670] sm:%s844]
                %1074 = vst [vmem:[%s852 + $0x370] sm:%s844] %v1073
                %v1075 = vld [vmem:[%s851 + $0x678] sm:%s844]
                %1076 = vst [vmem:[%s852 + $0x378] sm:%s844] %v1075
                %v1077 = vld [vmem:[%s851 + $0x700] sm:%s844]
                %1078 = vst [vmem:[%s852 + $0x380] sm:%s844] %v1077
                %v1079 = vld [vmem:[%s851 + $0x708] sm:%s844]
                %1080 = vst [vmem:[%s852 + $0x388] sm:%s844] %v1079
                %v1081 = vld [vmem:[%s851 + $0x710] sm:%s844]
                %1082 = vst [vmem:[%s852 + $0x390] sm:%s844] %v1081
                %v1083 = vld [vmem:[%s851 + $0x718] sm:%s844]
                %1084 = vst [vmem:[%s852 + $0x398] sm:%s844] %v1083
                %v1085 = vld [vmem:[%s851 + $0x720] sm:%s844]
                %1086 = vst [vmem:[%s852 + $0x3a0] sm:%s844] %v1085
                %v1087 = vld [vmem:[%s851 + $0x728] sm:%s844]
                %1088 = vst [vmem:[%s852 + $0x3a8] sm:%s844] %v1087
                %v1089 = vld [vmem:[%s851 + $0x730] sm:%s844]
                %1090 = vst [vmem:[%s852 + $0x3b0] sm:%s844] %v1089
                %v1091 = vld [vmem:[%s851 + $0x738] sm:%s844]
                %1092 = vst [vmem:[%s852 + $0x3b8] sm:%s844] %v1091
                %v1093 = vld [vmem:[%s851 + $0x740] sm:%s844]
                %1094 = vst [vmem:[%s852 + $0x3c0] sm:%s844] %v1093
                %v1095 = vld [vmem:[%s851 + $0x748] sm:%s844]
                %1096 = vst [vmem:[%s852 + $0x3c8] sm:%s844] %v1095
                %v1097 = vld [vmem:[%s851 + $0x750] sm:%s844]
                %1098 = vst [vmem:[%s852 + $0x3d0] sm:%s844] %v1097
                %v1099 = vld [vmem:[%s851 + $0x758] sm:%s844]
                %1100 = vst [vmem:[%s852 + $0x3d8] sm:%s844] %v1099
                %v1101 = vld [vmem:[%s851 + $0x760] sm:%s844]
                %1102 = vst [vmem:[%s852 + $0x3e0] sm:%s844] %v1101
                %v1103 = vld [vmem:[%s851 + $0x768] sm:%s844]
                %1104 = vst [vmem:[%s852 + $0x3e8] sm:%s844] %v1103
                %v1105 = vld [vmem:[%s851 + $0x770] sm:%s844]
                %1106 = vst [vmem:[%s852 + $0x3f0] sm:%s844] %v1105
                %v1107 = vld [vmem:[%s851 + $0x778] sm:%s844]
                %1108 = vst [vmem:[%s852 + $0x3f8] sm:%s844] %v1107
              $region83: #{tpu_custom_call.1} parent=77 // loop_footer
                %s850 = sadd.s32 1, %s846
              $region84: #{tpu_custom_call.1} parent=77 // loop_footer_branch
                %845 = sbr.rel target = $region80
              $region85: #{tpu_custom_call.1} parent=77 // loop_exit
                _
            $region78: #{tpu_custom_call.1} parent=69 // pred_fallthru
              _
          $region70: #{tpu_custom_call.1} parent=65 // pred_fallthru
            _
          %1377 = vnop
        $region66: #{tpu_custom_call.1} parent=23 // pred_fallthru
          _
        // Predicated region
        $region101: #{tpu_custom_call.1} parent=23 // pred_check
          %p1378 = pneg %p109
        $region102: #{tpu_custom_call.1} parent=23 // pred_check_branch
          %1380 = sbr.rel (%p1378) target = $region104
        $region103: #{tpu_custom_call.1} parent=23 // pred_region
          %p1381 = scmp.lt.s32.totalorder %s28, 1
          %s1382 = scalar_select %p1381, %s28, 1
          %s1383 = smul.addr %s1382, 8
          %s1384 = scalar_lea.vmem %s2, %s1383
        $region104: #{tpu_custom_call.1} parent=23 // pred_fallthru
          _
      $region24: #{tpu_custom_call.1} parent=5 // pred_fallthru
        _
      %p1385 = scmp.le.s32.totalorder 1, %s21
      %p1386 = scmp.lt.s32.totalorder %s21, 5
      %p1387 = pnand %p1385, %p1386
      %p1388 = pneg %p1387
      // Predicated region
      $region105: #{tpu_custom_call.1} parent=5 // pred_check
        _
      $region106: #{tpu_custom_call.1} parent=5 // pred_check_branch
        %1390 = sbr.rel (%p1387) target = $region108
      $region107: #{tpu_custom_call.1} parent=5 // pred_region
        %s1391 = ssub.s32 %s21, 1
        %s1392 = sand.u32 %s48, 1
        %s1393 = sand.u32 %s48, 1
        %s1394 = smul.addr %s1393, 1024
        %s1395 = scalar_lea.vmem [#allocation4], %s1394
        // Predicated region
        $region109: #{tpu_custom_call.1} parent=107 // pred_check
          %p1396 = pneg %p61
        $region110: #{tpu_custom_call.1} parent=107 // pred_check_branch
          %1398 = sbr.rel (%p1396) target = $region112
        $region111: #{tpu_custom_call.1} parent=107 // pred_region
          _
        $region112: #{tpu_custom_call.1} parent=107 // pred_fallthru
          _
        %s1399 = sand.u32 %s76, 1
        %s1400 = sand.u32 %s76, 1
        %s1401 = smul.addr %s1400, 1024
        %s1402 = scalar_lea.vmem [#allocation5], %s1401
        // Predicated region
        $region113: #{tpu_custom_call.1} parent=107 // pred_check
          %p1403 = pneg %p89
        $region114: #{tpu_custom_call.1} parent=107 // pred_check_branch
          %1405 = sbr.rel (%p1403) target = $region116
        $region115: #{tpu_custom_call.1} parent=107 // pred_region
          _
        $region116: #{tpu_custom_call.1} parent=107 // pred_fallthru
          _
        // Predicated region
        $region117: #{tpu_custom_call.1} parent=107 // pred_check
          %p1406 = pneg %p136
        $region118: #{tpu_custom_call.1} parent=107 // pred_check_branch
          %1408 = sbr.rel (%p1406) target = $region120
        $region119: #{tpu_custom_call.1} parent=107 // pred_region
          %1409 = dma.done [#allocation7], 2048
        $region120: #{tpu_custom_call.1} parent=107 // pred_fallthru
          _
        %s1410 = sand.u32 %s48, 1
        %s1411 = sand.u32 %s48, 1
        %s1412 = smul.addr %s1411, 1024
        %s1413 = scalar_lea.vmem [#allocation4], %s1412
        %p1414 = pneg %p61
        %p1415 = pneg %p58
        %s1416 = sand.u32 %s76, 1
        %s1417 = sand.u32 %s76, 1
        %s1418 = smul.addr %s1417, 1024
        %s1419 = scalar_lea.vmem [#allocation5], %s1418
        %p1420 = pneg %p89
        %p1421 = pneg %p86
        %p1422 = scmp.lt.s32.totalorder %s30, 1
        %s1423 = scalar_select %p1422, %s30, 1
        %s1424 = smul.addr %s1423, 8
        %s1425 = scalar_lea.vmem %s2, %s1424
        %p1426 = pneg %p115
        %p1427 = pneg %p112
        %p1428 = pneg %p136
        %p1429 = pneg %p133
        %p1430 = pneg %p157
        %p1431 = pneg %p154
        %p1432 = pneg %p183
        %p1433 = pneg %p180
        %s1434 = sand.u32 %s170, 1
        %s1435 = scalar_lea.sflag [#allocation8], %s1434
        %s1436 = sand.u32 %s170, 1
        %s1437 = smul.addr %s1436, 8
        %s1438 = scalar_lea.vmem [#allocation9], %s1437
        %p1439 = pneg %p209
        %p1440 = pneg %p206
        %s1441 = sand.u32 %s26, 1
        %s1442 = scalar_lea.sflag [#allocation11], %s1441
        %s1443 = sand.u32 %s196, 1
        %s1444 = smul.addr %s1443, 8
        %s1445 = scalar_lea.vmem [#allocation10], %s1444
        %p1446 = pneg %p235
        %p1447 = pneg %p232
        %s1448 = sand.u32 %s26, 1
        %s1449 = scalar_lea.sflag [#allocation11], %s1448
        %s1450 = sand.u32 %s222, 1
        %s1451 = smul.addr %s1450, 8
        %s1452 = scalar_lea.vmem [#allocation12], %s1451
        %s1453 = smul.u32 8, %s30
        %s1454 = smul.u32 16, %s31
        %s1455 = smul.u32 8, %s30
        %s1456 = smul.u32 16, %s31
        %p1457 = scmp.lt.s32.totalorder %s30, 1
        %s1458 = scalar_select %p1457, %s30, 1
        %s1459 = smul.addr %s1458, 8
        %s1460 = scalar_lea.vmem %s2, %s1459
        %p1461 = scmp.eq.s32.totalorder %s31, 0
        // Predicated region
        $region121: #{tpu_custom_call.1} parent=107 // pred_check
          %p1462 = pneg %p1461
        $region122: #{tpu_custom_call.1} parent=107 // pred_check_branch
          %1464 = sbr.rel (%p1462) target = $region124
        $region123: #{tpu_custom_call.1} parent=107 // pred_region
          %1465 = vst [vmem:[#allocation2] sm:$0xff] 0.0
          %vm1466 = vcmask 7168
          %1467 = vst.msk [vmem:[#allocation3] sm:$0xff] %vm1466, 0.0
        $region124: #{tpu_custom_call.1} parent=107 // pred_fallthru
          _
        %v1468 = vld [vmem:[%s1395] sm:$0xff]
        %v1469 = vld [vmem:[%s1395 + $0x8] sm:$0xff]
        %v1470 = vld [vmem:[%s1395 + $0x10] sm:$0xff]
        %v1471 = vld [vmem:[%s1395 + $0x18] sm:$0xff]
        %v1472 = vld [vmem:[%s1395 + $0x20] sm:$0xff]
        %v1473 = vld [vmem:[%s1395 + $0x28] sm:$0xff]
        %v1474 = vld [vmem:[%s1395 + $0x30] sm:$0xff]
        %v1475 = vld [vmem:[%s1395 + $0x38] sm:$0xff]
        %v1476 = vld [vmem:[%s1395 + $0x40] sm:$0xff]
        %v1477 = vld [vmem:[%s1395 + $0x48] sm:$0xff]
        %v1478 = vld [vmem:[%s1395 + $0x50] sm:$0xff]
        %v1479 = vld [vmem:[%s1395 + $0x58] sm:$0xff]
        %v1480 = vld [vmem:[%s1395 + $0x60] sm:$0xff]
        %v1481 = vld [vmem:[%s1395 + $0x68] sm:$0xff]
        %v1482 = vld [vmem:[%s1395 + $0x70] sm:$0xff]
        %v1483 = vld [vmem:[%s1395 + $0x78] sm:$0xff]
        %v1484 = vld [vmem:[%s1395 + $0x80] sm:$0xff]
        %v1485 = vld [vmem:[%s1395 + $0x88] sm:$0xff]
        %v1486 = vld [vmem:[%s1395 + $0x90] sm:$0xff]
        %v1487 = vld [vmem:[%s1395 + $0x98] sm:$0xff]
        %v1488 = vld [vmem:[%s1395 + $0xa0] sm:$0xff]
        %v1489 = vld [vmem:[%s1395 + $0xa8] sm:$0xff]
        %v1490 = vld [vmem:[%s1395 + $0xb0] sm:$0xff]
        %v1491 = vld [vmem:[%s1395 + $0xb8] sm:$0xff]
        %v1492 = vld [vmem:[%s1395 + $0xc0] sm:$0xff]
        %v1493 = vld [vmem:[%s1395 + $0xc8] sm:$0xff]
        %v1494 = vld [vmem:[%s1395 + $0xd0] sm:$0xff]
        %v1495 = vld [vmem:[%s1395 + $0xd8] sm:$0xff]
        %v1496 = vld [vmem:[%s1395 + $0xe0] sm:$0xff]
        %v1497 = vld [vmem:[%s1395 + $0xe8] sm:$0xff]
        %v1498 = vld [vmem:[%s1395 + $0xf0] sm:$0xff]
        %v1499 = vld [vmem:[%s1395 + $0xf8] sm:$0xff]
        %v1500 = vld [vmem:[%s1395 + $0x100] sm:$0xff]
        %v1501 = vld [vmem:[%s1395 + $0x108] sm:$0xff]
        %v1502 = vld [vmem:[%s1395 + $0x110] sm:$0xff]
        %v1503 = vld [vmem:[%s1395 + $0x118] sm:$0xff]
        %v1504 = vld [vmem:[%s1395 + $0x120] sm:$0xff]
        %v1505 = vld [vmem:[%s1395 + $0x128] sm:$0xff]
        %v1506 = vld [vmem:[%s1395 + $0x130] sm:$0xff]
        %v1507 = vld [vmem:[%s1395 + $0x138] sm:$0xff]
        %v1508 = vld [vmem:[%s1395 + $0x140] sm:$0xff]
        %v1509 = vld [vmem:[%s1395 + $0x148] sm:$0xff]
        %v1510 = vld [vmem:[%s1395 + $0x150] sm:$0xff]
        %v1511 = vld [vmem:[%s1395 + $0x158] sm:$0xff]
        %v1512 = vld [vmem:[%s1395 + $0x160] sm:$0xff]
        %v1513 = vld [vmem:[%s1395 + $0x168] sm:$0xff]
        %v1514 = vld [vmem:[%s1395 + $0x170] sm:$0xff]
        %v1515 = vld [vmem:[%s1395 + $0x178] sm:$0xff]
        %v1516 = vld [vmem:[%s1395 + $0x180] sm:$0xff]
        %v1517 = vld [vmem:[%s1395 + $0x188] sm:$0xff]
        %v1518 = vld [vmem:[%s1395 + $0x190] sm:$0xff]
        %v1519 = vld [vmem:[%s1395 + $0x198] sm:$0xff]
        %v1520 = vld [vmem:[%s1395 + $0x1a0] sm:$0xff]
        %v1521 = vld [vmem:[%s1395 + $0x1a8] sm:$0xff]
        %v1522 = vld [vmem:[%s1395 + $0x1b0] sm:$0xff]
        %v1523 = vld [vmem:[%s1395 + $0x1b8] sm:$0xff]
        %v1524 = vld [vmem:[%s1395 + $0x1c0] sm:$0xff]
        %v1525 = vld [vmem:[%s1395 + $0x1c8] sm:$0xff]
        %v1526 = vld [vmem:[%s1395 + $0x1d0] sm:$0xff]
        %v1527 = vld [vmem:[%s1395 + $0x1d8] sm:$0xff]
        %v1528 = vld [vmem:[%s1395 + $0x1e0] sm:$0xff]
        %v1529 = vld [vmem:[%s1395 + $0x1e8] sm:$0xff]
        %v1530 = vld [vmem:[%s1395 + $0x1f0] sm:$0xff]
        %v1531 = vld [vmem:[%s1395 + $0x1f8] sm:$0xff]
        %v1532 = vld [vmem:[%s1395 + $0x200] sm:$0xff]
        %v1533 = vld [vmem:[%s1395 + $0x208] sm:$0xff]
        %v1534 = vld [vmem:[%s1395 + $0x210] sm:$0xff]
        %v1535 = vld [vmem:[%s1395 + $0x218] sm:$0xff]
        %v1536 = vld [vmem:[%s1395 + $0x220] sm:$0xff]
        %v1537 = vld [vmem:[%s1395 + $0x228] sm:$0xff]
        %v1538 = vld [vmem:[%s1395 + $0x230] sm:$0xff]
        %v1539 = vld [vmem:[%s1395 + $0x238] sm:$0xff]
        %v1540 = vld [vmem:[%s1395 + $0x240] sm:$0xff]
        %v1541 = vld [vmem:[%s1395 + $0x248] sm:$0xff]
        %v1542 = vld [vmem:[%s1395 + $0x250] sm:$0xff]
        %v1543 = vld [vmem:[%s1395 + $0x258] sm:$0xff]
        %v1544 = vld [vmem:[%s1395 + $0x260] sm:$0xff]
        %v1545 = vld [vmem:[%s1395 + $0x268] sm:$0xff]
        %v1546 = vld [vmem:[%s1395 + $0x270] sm:$0xff]
        %v1547 = vld [vmem:[%s1395 + $0x278] sm:$0xff]
        %v1548 = vld [vmem:[%s1395 + $0x280] sm:$0xff]
        %v1549 = vld [vmem:[%s1395 + $0x288] sm:$0xff]
        %v1550 = vld [vmem:[%s1395 + $0x290] sm:$0xff]
        %v1551 = vld [vmem:[%s1395 + $0x298] sm:$0xff]
        %v1552 = vld [vmem:[%s1395 + $0x2a0] sm:$0xff]
        %v1553 = vld [vmem:[%s1395 + $0x2a8] sm:$0xff]
        %v1554 = vld [vmem:[%s1395 + $0x2b0] sm:$0xff]
        %v1555 = vld [vmem:[%s1395 + $0x2b8] sm:$0xff]
        %v1556 = vld [vmem:[%s1395 + $0x2c0] sm:$0xff]
        %v1557 = vld [vmem:[%s1395 + $0x2c8] sm:$0xff]
        %v1558 = vld [vmem:[%s1395 + $0x2d0] sm:$0xff]
        %v1559 = vld [vmem:[%s1395 + $0x2d8] sm:$0xff]
        %v1560 = vld [vmem:[%s1395 + $0x2e0] sm:$0xff]
        %v1561 = vld [vmem:[%s1395 + $0x2e8] sm:$0xff]
        %v1562 = vld [vmem:[%s1395 + $0x2f0] sm:$0xff]
        %v1563 = vld [vmem:[%s1395 + $0x2f8] sm:$0xff]
        %v1564 = vld [vmem:[%s1395 + $0x300] sm:$0xff]
        %v1565 = vld [vmem:[%s1395 + $0x308] sm:$0xff]
        %v1566 = vld [vmem:[%s1395 + $0x310] sm:$0xff]
        %v1567 = vld [vmem:[%s1395 + $0x318] sm:$0xff]
        %v1568 = vld [vmem:[%s1395 + $0x320] sm:$0xff]
        %v1569 = vld [vmem:[%s1395 + $0x328] sm:$0xff]
        %v1570 = vld [vmem:[%s1395 + $0x330] sm:$0xff]
        %v1571 = vld [vmem:[%s1395 + $0x338] sm:$0xff]
        %v1572 = vld [vmem:[%s1395 + $0x340] sm:$0xff]
        %v1573 = vld [vmem:[%s1395 + $0x348] sm:$0xff]
        %v1574 = vld [vmem:[%s1395 + $0x350] sm:$0xff]
        %v1575 = vld [vmem:[%s1395 + $0x358] sm:$0xff]
        %v1576 = vld [vmem:[%s1395 + $0x360] sm:$0xff]
        %v1577 = vld [vmem:[%s1395 + $0x368] sm:$0xff]
        %v1578 = vld [vmem:[%s1395 + $0x370] sm:$0xff]
        %v1579 = vld [vmem:[%s1395 + $0x378] sm:$0xff]
        %v1580 = vld [vmem:[%s1395 + $0x380] sm:$0xff]
        %v1581 = vld [vmem:[%s1395 + $0x388] sm:$0xff]
        %v1582 = vld [vmem:[%s1395 + $0x390] sm:$0xff]
        %v1583 = vld [vmem:[%s1395 + $0x398] sm:$0xff]
        %v1584 = vld [vmem:[%s1395 + $0x3a0] sm:$0xff]
        %v1585 = vld [vmem:[%s1395 + $0x3a8] sm:$0xff]
        %v1586 = vld [vmem:[%s1395 + $0x3b0] sm:$0xff]
        %v1587 = vld [vmem:[%s1395 + $0x3b8] sm:$0xff]
        %v1588 = vld [vmem:[%s1395 + $0x3c0] sm:$0xff]
        %v1589 = vld [vmem:[%s1395 + $0x3c8] sm:$0xff]
        %v1590 = vld [vmem:[%s1395 + $0x3d0] sm:$0xff]
        %v1591 = vld [vmem:[%s1395 + $0x3d8] sm:$0xff]
        %v1592 = vld [vmem:[%s1395 + $0x3e0] sm:$0xff]
        %v1593 = vld [vmem:[%s1395 + $0x3e8] sm:$0xff]
        %v1594 = vld [vmem:[%s1395 + $0x3f0] sm:$0xff]
        %v1595 = vld [vmem:[%s1395 + $0x3f8] sm:$0xff]
        %v1596 = vld [vmem:[%s1402] sm:$0xff]
        %v1597 = vld [vmem:[%s1402 + $0x8] sm:$0xff]
        %v1598 = vld [vmem:[%s1402 + $0x10] sm:$0xff]
        %v1599 = vld [vmem:[%s1402 + $0x18] sm:$0xff]
        %v1600 = vld [vmem:[%s1402 + $0x20] sm:$0xff]
        %v1601 = vld [vmem:[%s1402 + $0x28] sm:$0xff]
        %v1602 = vld [vmem:[%s1402 + $0x30] sm:$0xff]
        %v1603 = vld [vmem:[%s1402 + $0x38] sm:$0xff]
        %v1604 = vld [vmem:[%s1402 + $0x40] sm:$0xff]
        %v1605 = vld [vmem:[%s1402 + $0x48] sm:$0xff]
        %v1606 = vld [vmem:[%s1402 + $0x50] sm:$0xff]
        %v1607 = vld [vmem:[%s1402 + $0x58] sm:$0xff]
        %v1608 = vld [vmem:[%s1402 + $0x60] sm:$0xff]
        %v1609 = vld [vmem:[%s1402 + $0x68] sm:$0xff]
        %v1610 = vld [vmem:[%s1402 + $0x70] sm:$0xff]
        %v1611 = vld [vmem:[%s1402 + $0x78] sm:$0xff]
        %v1612 = vld [vmem:[%s1402 + $0x80] sm:$0xff]
        %v1613 = vld [vmem:[%s1402 + $0x88] sm:$0xff]
        %v1614 = vld [vmem:[%s1402 + $0x90] sm:$0xff]
        %v1615 = vld [vmem:[%s1402 + $0x98] sm:$0xff]
        %v1616 = vld [vmem:[%s1402 + $0xa0] sm:$0xff]
        %v1617 = vld [vmem:[%s1402 + $0xa8] sm:$0xff]
        %v1618 = vld [vmem:[%s1402 + $0xb0] sm:$0xff]
        %v1619 = vld [vmem:[%s1402 + $0xb8] sm:$0xff]
        %v1620 = vld [vmem:[%s1402 + $0xc0] sm:$0xff]
        %v1621 = vld [vmem:[%s1402 + $0xc8] sm:$0xff]
        %v1622 = vld [vmem:[%s1402 + $0xd0] sm:$0xff]
        %v1623 = vld [vmem:[%s1402 + $0xd8] sm:$0xff]
        %v1624 = vld [vmem:[%s1402 + $0xe0] sm:$0xff]
        %v1625 = vld [vmem:[%s1402 + $0xe8] sm:$0xff]
        %v1626 = vld [vmem:[%s1402 + $0xf0] sm:$0xff]
        %v1627 = vld [vmem:[%s1402 + $0xf8] sm:$0xff]
        %v1628 = vld [vmem:[%s1402 + $0x100] sm:$0xff]
        %v1629 = vld [vmem:[%s1402 + $0x108] sm:$0xff]
        %v1630 = vld [vmem:[%s1402 + $0x110] sm:$0xff]
        %v1631 = vld [vmem:[%s1402 + $0x118] sm:$0xff]
        %v1632 = vld [vmem:[%s1402 + $0x120] sm:$0xff]
        %v1633 = vld [vmem:[%s1402 + $0x128] sm:$0xff]
        %v1634 = vld [vmem:[%s1402 + $0x130] sm:$0xff]
        %v1635 = vld [vmem:[%s1402 + $0x138] sm:$0xff]
        %v1636 = vld [vmem:[%s1402 + $0x140] sm:$0xff]
        %v1637 = vld [vmem:[%s1402 + $0x148] sm:$0xff]
        %v1638 = vld [vmem:[%s1402 + $0x150] sm:$0xff]
        %v1639 = vld [vmem:[%s1402 + $0x158] sm:$0xff]
        %v1640 = vld [vmem:[%s1402 + $0x160] sm:$0xff]
        %v1641 = vld [vmem:[%s1402 + $0x168] sm:$0xff]
        %v1642 = vld [vmem:[%s1402 + $0x170] sm:$0xff]
        %v1643 = vld [vmem:[%s1402 + $0x178] sm:$0xff]
        %v1644 = vld [vmem:[%s1402 + $0x180] sm:$0xff]
        %v1645 = vld [vmem:[%s1402 + $0x188] sm:$0xff]
        %v1646 = vld [vmem:[%s1402 + $0x190] sm:$0xff]
        %v1647 = vld [vmem:[%s1402 + $0x198] sm:$0xff]
        %v1648 = vld [vmem:[%s1402 + $0x1a0] sm:$0xff]
        %v1649 = vld [vmem:[%s1402 + $0x1a8] sm:$0xff]
        %v1650 = vld [vmem:[%s1402 + $0x1b0] sm:$0xff]
        %v1651 = vld [vmem:[%s1402 + $0x1b8] sm:$0xff]
        %v1652 = vld [vmem:[%s1402 + $0x1c0] sm:$0xff]
        %v1653 = vld [vmem:[%s1402 + $0x1c8] sm:$0xff]
        %v1654 = vld [vmem:[%s1402 + $0x1d0] sm:$0xff]
        %v1655 = vld [vmem:[%s1402 + $0x1d8] sm:$0xff]
        %v1656 = vld [vmem:[%s1402 + $0x1e0] sm:$0xff]
        %v1657 = vld [vmem:[%s1402 + $0x1e8] sm:$0xff]
        %v1658 = vld [vmem:[%s1402 + $0x1f0] sm:$0xff]
        %v1659 = vld [vmem:[%s1402 + $0x1f8] sm:$0xff]
        %v1660 = vld [vmem:[%s1402 + $0x200] sm:$0xff]
        %v1661 = vld [vmem:[%s1402 + $0x208] sm:$0xff]
        %v1662 = vld [vmem:[%s1402 + $0x210] sm:$0xff]
        %v1663 = vld [vmem:[%s1402 + $0x218] sm:$0xff]
        %v1664 = vld [vmem:[%s1402 + $0x220] sm:$0xff]
        %v1665 = vld [vmem:[%s1402 + $0x228] sm:$0xff]
        %v1666 = vld [vmem:[%s1402 + $0x230] sm:$0xff]
        %v1667 = vld [vmem:[%s1402 + $0x238] sm:$0xff]
        %v1668 = vld [vmem:[%s1402 + $0x240] sm:$0xff]
        %v1669 = vld [vmem:[%s1402 + $0x248] sm:$0xff]
        %v1670 = vld [vmem:[%s1402 + $0x250] sm:$0xff]
        %v1671 = vld [vmem:[%s1402 + $0x258] sm:$0xff]
        %v1672 = vld [vmem:[%s1402 + $0x260] sm:$0xff]
        %v1673 = vld [vmem:[%s1402 + $0x268] sm:$0xff]
        %v1674 = vld [vmem:[%s1402 + $0x270] sm:$0xff]
        %v1675 = vld [vmem:[%s1402 + $0x278] sm:$0xff]
        %v1676 = vld [vmem:[%s1402 + $0x280] sm:$0xff]
        %v1677 = vld [vmem:[%s1402 + $0x288] sm:$0xff]
        %v1678 = vld [vmem:[%s1402 + $0x290] sm:$0xff]
        %v1679 = vld [vmem:[%s1402 + $0x298] sm:$0xff]
        %v1680 = vld [vmem:[%s1402 + $0x2a0] sm:$0xff]
        %v1681 = vld [vmem:[%s1402 + $0x2a8] sm:$0xff]
        %v1682 = vld [vmem:[%s1402 + $0x2b0] sm:$0xff]
        %v1683 = vld [vmem:[%s1402 + $0x2b8] sm:$0xff]
        %v1684 = vld [vmem:[%s1402 + $0x2c0] sm:$0xff]
        %v1685 = vld [vmem:[%s1402 + $0x2c8] sm:$0xff]
        %v1686 = vld [vmem:[%s1402 + $0x2d0] sm:$0xff]
        %v1687 = vld [vmem:[%s1402 + $0x2d8] sm:$0xff]
        %v1688 = vld [vmem:[%s1402 + $0x2e0] sm:$0xff]
        %v1689 = vld [vmem:[%s1402 + $0x2e8] sm:$0xff]
        %v1690 = vld [vmem:[%s1402 + $0x2f0] sm:$0xff]
        %v1691 = vld [vmem:[%s1402 + $0x2f8] sm:$0xff]
        %v1692 = vld [vmem:[%s1402 + $0x300] sm:$0xff]
        %v1693 = vld [vmem:[%s1402 + $0x308] sm:$0xff]
        %v1694 = vld [vmem:[%s1402 + $0x310] sm:$0xff]
        %v1695 = vld [vmem:[%s1402 + $0x318] sm:$0xff]
        %v1696 = vld [vmem:[%s1402 + $0x320] sm:$0xff]
        %v1697 = vld [vmem:[%s1402 + $0x328] sm:$0xff]
        %v1698 = vld [vmem:[%s1402 + $0x330] sm:$0xff]
        %v1699 = vld [vmem:[%s1402 + $0x338] sm:$0xff]
        %v1700 = vld [vmem:[%s1402 + $0x340] sm:$0xff]
        %v1701 = vld [vmem:[%s1402 + $0x348] sm:$0xff]
        %v1702 = vld [vmem:[%s1402 + $0x350] sm:$0xff]
        %v1703 = vld [vmem:[%s1402 + $0x358] sm:$0xff]
        %v1704 = vld [vmem:[%s1402 + $0x360] sm:$0xff]
        %v1705 = vld [vmem:[%s1402 + $0x368] sm:$0xff]
        %v1706 = vld [vmem:[%s1402 + $0x370] sm:$0xff]
        %v1707 = vld [vmem:[%s1402 + $0x378] sm:$0xff]
        %v1708 = vld [vmem:[%s1402 + $0x380] sm:$0xff]
        %v1709 = vld [vmem:[%s1402 + $0x388] sm:$0xff]
        %v1710 = vld [vmem:[%s1402 + $0x390] sm:$0xff]
        %v1711 = vld [vmem:[%s1402 + $0x398] sm:$0xff]
        %v1712 = vld [vmem:[%s1402 + $0x3a0] sm:$0xff]
        %v1713 = vld [vmem:[%s1402 + $0x3a8] sm:$0xff]
        %v1714 = vld [vmem:[%s1402 + $0x3b0] sm:$0xff]
        %v1715 = vld [vmem:[%s1402 + $0x3b8] sm:$0xff]
        %v1716 = vld [vmem:[%s1402 + $0x3c0] sm:$0xff]
        %v1717 = vld [vmem:[%s1402 + $0x3c8] sm:$0xff]
        %v1718 = vld [vmem:[%s1402 + $0x3d0] sm:$0xff]
        %v1719 = vld [vmem:[%s1402 + $0x3d8] sm:$0xff]
        %v1720 = vld [vmem:[%s1402 + $0x3e0] sm:$0xff]
        %v1721 = vld [vmem:[%s1402 + $0x3e8] sm:$0xff]
        %v1722 = vld [vmem:[%s1402 + $0x3f0] sm:$0xff]
        %v1723 = vld [vmem:[%s1402 + $0x3f8] sm:$0xff]
        %v1724 = vld [vmem:[#allocation2] sm:$0xff]
        %1726 = vset.pattern.permute.xlu0 0
        %1727 = vperm.xlu0 %1726, %v1596
        %v1728 = vpop.permute.xlu0 %1727
        %1731 = vset.pattern.permute.xlu0 0
        %1732 = vperm.xlu0 %1731, %v1597
        %v1733 = vpop.permute.xlu0 %1732
        %1736 = vset.pattern.permute.xlu0 0
        %1737 = vperm.xlu0 %1736, %v1598
        %v1738 = vpop.permute.xlu0 %1737
        %1741 = vset.pattern.permute.xlu0 0
        %1742 = vperm.xlu0 %1741, %v1599
        %v1743 = vpop.permute.xlu0 %1742
        %1746 = vset.pattern.permute.xlu0 0
        %1747 = vperm.xlu0 %1746, %v1600
        %v1748 = vpop.permute.xlu0 %1747
        %1751 = vset.pattern.permute.xlu0 0
        %1752 = vperm.xlu0 %1751, %v1601
        %v1753 = vpop.permute.xlu0 %1752
        %1756 = vset.pattern.permute.xlu0 0
        %1757 = vperm.xlu0 %1756, %v1602
        %v1758 = vpop.permute.xlu0 %1757
        %1761 = vset.pattern.permute.xlu0 0
        %1762 = vperm.xlu0 %1761, %v1603
        %v1763 = vpop.permute.xlu0 %1762
        %1766 = vset.pattern.permute.xlu0 0
        %1767 = vperm.xlu0 %1766, %v1604
        %v1768 = vpop.permute.xlu0 %1767
        %1771 = vset.pattern.permute.xlu0 0
        %1772 = vperm.xlu0 %1771, %v1605
        %v1773 = vpop.permute.xlu0 %1772
        %1776 = vset.pattern.permute.xlu0 0
        %1777 = vperm.xlu0 %1776, %v1606
        %v1778 = vpop.permute.xlu0 %1777
        %1781 = vset.pattern.permute.xlu0 0
        %1782 = vperm.xlu0 %1781, %v1607
        %v1783 = vpop.permute.xlu0 %1782
        %1786 = vset.pattern.permute.xlu0 0
        %1787 = vperm.xlu0 %1786, %v1608
        %v1788 = vpop.permute.xlu0 %1787
        %1791 = vset.pattern.permute.xlu0 0
        %1792 = vperm.xlu0 %1791, %v1609
        %v1793 = vpop.permute.xlu0 %1792
        %1796 = vset.pattern.permute.xlu0 0
        %1797 = vperm.xlu0 %1796, %v1610
        %v1798 = vpop.permute.xlu0 %1797
        %1801 = vset.pattern.permute.xlu0 0
        %1802 = vperm.xlu0 %1801, %v1611
        %v1803 = vpop.permute.xlu0 %1802
        %1806 = vset.pattern.permute.xlu0 0
        %1807 = vperm.xlu0 %1806, %v1612
        %v1808 = vpop.permute.xlu0 %1807
        %1811 = vset.pattern.permute.xlu0 0
        %1812 = vperm.xlu0 %1811, %v1613
        %v1813 = vpop.permute.xlu0 %1812
        %1816 = vset.pattern.permute.xlu0 0
        %1817 = vperm.xlu0 %1816, %v1614
        %v1818 = vpop.permute.xlu0 %1817
        %1821 = vset.pattern.permute.xlu0 0
        %1822 = vperm.xlu0 %1821, %v1615
        %v1823 = vpop.permute.xlu0 %1822
        %1826 = vset.pattern.permute.xlu0 0
        %1827 = vperm.xlu0 %1826, %v1616
        %v1828 = vpop.permute.xlu0 %1827
        %1831 = vset.pattern.permute.xlu0 0
        %1832 = vperm.xlu0 %1831, %v1617
        %v1833 = vpop.permute.xlu0 %1832
        %1836 = vset.pattern.permute.xlu0 0
        %1837 = vperm.xlu0 %1836, %v1618
        %v1838 = vpop.permute.xlu0 %1837
        %1841 = vset.pattern.permute.xlu0 0
        %1842 = vperm.xlu0 %1841, %v1619
        %v1843 = vpop.permute.xlu0 %1842
        %1846 = vset.pattern.permute.xlu0 0
        %1847 = vperm.xlu0 %1846, %v1620
        %v1848 = vpop.permute.xlu0 %1847
        %1851 = vset.pattern.permute.xlu0 0
        %1852 = vperm.xlu0 %1851, %v1621
        %v1853 = vpop.permute.xlu0 %1852
        %1856 = vset.pattern.permute.xlu0 0
        %1857 = vperm.xlu0 %1856, %v1622
        %v1858 = vpop.permute.xlu0 %1857
        %1861 = vset.pattern.permute.xlu0 0
        %1862 = vperm.xlu0 %1861, %v1623
        %v1863 = vpop.permute.xlu0 %1862
        %1866 = vset.pattern.permute.xlu0 0
        %1867 = vperm.xlu0 %1866, %v1624
        %v1868 = vpop.permute.xlu0 %1867
        %1871 = vset.pattern.permute.xlu0 0
        %1872 = vperm.xlu0 %1871, %v1625
        %v1873 = vpop.permute.xlu0 %1872
        %1876 = vset.pattern.permute.xlu0 0
        %1877 = vperm.xlu0 %1876, %v1626
        %v1878 = vpop.permute.xlu0 %1877
        %1881 = vset.pattern.permute.xlu0 0
        %1882 = vperm.xlu0 %1881, %v1627
        %v1883 = vpop.permute.xlu0 %1882
        %1886 = vset.pattern.permute.xlu0 0
        %1887 = vperm.xlu0 %1886, %v1628
        %v1888 = vpop.permute.xlu0 %1887
        %1891 = vset.pattern.permute.xlu0 0
        %1892 = vperm.xlu0 %1891, %v1629
        %v1893 = vpop.permute.xlu0 %1892
        %1896 = vset.pattern.permute.xlu0 0
        %1897 = vperm.xlu0 %1896, %v1630
        %v1898 = vpop.permute.xlu0 %1897
        %1901 = vset.pattern.permute.xlu0 0
        %1902 = vperm.xlu0 %1901, %v1631
        %v1903 = vpop.permute.xlu0 %1902
        %1906 = vset.pattern.permute.xlu0 0
        %1907 = vperm.xlu0 %1906, %v1632
        %v1908 = vpop.permute.xlu0 %1907
        %1911 = vset.pattern.permute.xlu0 0
        %1912 = vperm.xlu0 %1911, %v1633
        %v1913 = vpop.permute.xlu0 %1912
        %1916 = vset.pattern.permute.xlu0 0
        %1917 = vperm.xlu0 %1916, %v1634
        %v1918 = vpop.permute.xlu0 %1917
        %1921 = vset.pattern.permute.xlu0 0
        %1922 = vperm.xlu0 %1921, %v1635
        %v1923 = vpop.permute.xlu0 %1922
        %1926 = vset.pattern.permute.xlu0 0
        %1927 = vperm.xlu0 %1926, %v1636
        %v1928 = vpop.permute.xlu0 %1927
        %1931 = vset.pattern.permute.xlu0 0
        %1932 = vperm.xlu0 %1931, %v1637
        %v1933 = vpop.permute.xlu0 %1932
        %1936 = vset.pattern.permute.xlu0 0
        %1937 = vperm.xlu0 %1936, %v1638
        %v1938 = vpop.permute.xlu0 %1937
        %1941 = vset.pattern.permute.xlu0 0
        %1942 = vperm.xlu0 %1941, %v1639
        %v1943 = vpop.permute.xlu0 %1942
        %1946 = vset.pattern.permute.xlu0 0
        %1947 = vperm.xlu0 %1946, %v1640
        %v1948 = vpop.permute.xlu0 %1947
        %1951 = vset.pattern.permute.xlu0 0
        %1952 = vperm.xlu0 %1951, %v1641
        %v1953 = vpop.permute.xlu0 %1952
        %1956 = vset.pattern.permute.xlu0 0
        %1957 = vperm.xlu0 %1956, %v1642
        %v1958 = vpop.permute.xlu0 %1957
        %1961 = vset.pattern.permute.xlu0 0
        %1962 = vperm.xlu0 %1961, %v1643
        %v1963 = vpop.permute.xlu0 %1962
        %1966 = vset.pattern.permute.xlu0 0
        %1967 = vperm.xlu0 %1966, %v1644
        %v1968 = vpop.permute.xlu0 %1967
        %1971 = vset.pattern.permute.xlu0 0
        %1972 = vperm.xlu0 %1971, %v1645
        %v1973 = vpop.permute.xlu0 %1972
        %1976 = vset.pattern.permute.xlu0 0
        %1977 = vperm.xlu0 %1976, %v1646
        %v1978 = vpop.permute.xlu0 %1977
        %1981 = vset.pattern.permute.xlu0 0
        %1982 = vperm.xlu0 %1981, %v1647
        %v1983 = vpop.permute.xlu0 %1982
        %1986 = vset.pattern.permute.xlu0 0
        %1987 = vperm.xlu0 %1986, %v1648
        %v1988 = vpop.permute.xlu0 %1987
        %1991 = vset.pattern.permute.xlu0 0
        %1992 = vperm.xlu0 %1991, %v1649
        %v1993 = vpop.permute.xlu0 %1992
        %1996 = vset.pattern.permute.xlu0 0
        %1997 = vperm.xlu0 %1996, %v1650
        %v1998 = vpop.permute.xlu0 %1997
        %2001 = vset.pattern.permute.xlu0 0
        %2002 = vperm.xlu0 %2001, %v1651
        %v2003 = vpop.permute.xlu0 %2002
        %2006 = vset.pattern.permute.xlu0 0
        %2007 = vperm.xlu0 %2006, %v1652
        %v2008 = vpop.permute.xlu0 %2007
        %2011 = vset.pattern.permute.xlu0 0
        %2012 = vperm.xlu0 %2011, %v1653
        %v2013 = vpop.permute.xlu0 %2012
        %2016 = vset.pattern.permute.xlu0 0
        %2017 = vperm.xlu0 %2016, %v1654
        %v2018 = vpop.permute.xlu0 %2017
        %2021 = vset.pattern.permute.xlu0 0
        %2022 = vperm.xlu0 %2021, %v1655
        %v2023 = vpop.permute.xlu0 %2022
        %2026 = vset.pattern.permute.xlu0 0
        %2027 = vperm.xlu0 %2026, %v1656
        %v2028 = vpop.permute.xlu0 %2027
        %2031 = vset.pattern.permute.xlu0 0
        %2032 = vperm.xlu0 %2031, %v1657
        %v2033 = vpop.permute.xlu0 %2032
        %2036 = vset.pattern.permute.xlu0 0
        %2037 = vperm.xlu0 %2036, %v1658
        %v2038 = vpop.permute.xlu0 %2037
        %2041 = vset.pattern.permute.xlu0 0
        %2042 = vperm.xlu0 %2041, %v1659
        %v2043 = vpop.permute.xlu0 %2042
        %2046 = vset.pattern.permute.xlu0 0
        %2047 = vperm.xlu0 %2046, %v1660
        %v2048 = vpop.permute.xlu0 %2047
        %2051 = vset.pattern.permute.xlu0 0
        %2052 = vperm.xlu0 %2051, %v1661
        %v2053 = vpop.permute.xlu0 %2052
        %2056 = vset.pattern.permute.xlu0 0
        %2057 = vperm.xlu0 %2056, %v1662
        %v2058 = vpop.permute.xlu0 %2057
        %2061 = vset.pattern.permute.xlu0 0
        %2062 = vperm.xlu0 %2061, %v1663
        %v2063 = vpop.permute.xlu0 %2062
        %2066 = vset.pattern.permute.xlu0 0
        %2067 = vperm.xlu0 %2066, %v1664
        %v2068 = vpop.permute.xlu0 %2067
        %2071 = vset.pattern.permute.xlu0 0
        %2072 = vperm.xlu0 %2071, %v1665
        %v2073 = vpop.permute.xlu0 %2072
        %2076 = vset.pattern.permute.xlu0 0
        %2077 = vperm.xlu0 %2076, %v1666
        %v2078 = vpop.permute.xlu0 %2077
        %2081 = vset.pattern.permute.xlu0 0
        %2082 = vperm.xlu0 %2081, %v1667
        %v2083 = vpop.permute.xlu0 %2082
        %2086 = vset.pattern.permute.xlu0 0
        %2087 = vperm.xlu0 %2086, %v1668
        %v2088 = vpop.permute.xlu0 %2087
        %2091 = vset.pattern.permute.xlu0 0
        %2092 = vperm.xlu0 %2091, %v1669
        %v2093 = vpop.permute.xlu0 %2092
        %2096 = vset.pattern.permute.xlu0 0
        %2097 = vperm.xlu0 %2096, %v1670
        %v2098 = vpop.permute.xlu0 %2097
        %2101 = vset.pattern.permute.xlu0 0
        %2102 = vperm.xlu0 %2101, %v1671
        %v2103 = vpop.permute.xlu0 %2102
        %2106 = vset.pattern.permute.xlu0 0
        %2107 = vperm.xlu0 %2106, %v1672
        %v2108 = vpop.permute.xlu0 %2107
        %2111 = vset.pattern.permute.xlu0 0
        %2112 = vperm.xlu0 %2111, %v1673
        %v2113 = vpop.permute.xlu0 %2112
        %2116 = vset.pattern.permute.xlu0 0
        %2117 = vperm.xlu0 %2116, %v1674
        %v2118 = vpop.permute.xlu0 %2117
        %2121 = vset.pattern.permute.xlu0 0
        %2122 = vperm.xlu0 %2121, %v1675
        %v2123 = vpop.permute.xlu0 %2122
        %2126 = vset.pattern.permute.xlu0 0
        %2127 = vperm.xlu0 %2126, %v1676
        %v2128 = vpop.permute.xlu0 %2127
        %2131 = vset.pattern.permute.xlu0 0
        %2132 = vperm.xlu0 %2131, %v1677
        %v2133 = vpop.permute.xlu0 %2132
        %2136 = vset.pattern.permute.xlu0 0
        %2137 = vperm.xlu0 %2136, %v1678
        %v2138 = vpop.permute.xlu0 %2137
        %2141 = vset.pattern.permute.xlu0 0
        %2142 = vperm.xlu0 %2141, %v1679
        %v2143 = vpop.permute.xlu0 %2142
        %2146 = vset.pattern.permute.xlu0 0
        %2147 = vperm.xlu0 %2146, %v1680
        %v2148 = vpop.permute.xlu0 %2147
        %2151 = vset.pattern.permute.xlu0 0
        %2152 = vperm.xlu0 %2151, %v1681
        %v2153 = vpop.permute.xlu0 %2152
        %2156 = vset.pattern.permute.xlu0 0
        %2157 = vperm.xlu0 %2156, %v1682
        %v2158 = vpop.permute.xlu0 %2157
        %2161 = vset.pattern.permute.xlu0 0
        %2162 = vperm.xlu0 %2161, %v1683
        %v2163 = vpop.permute.xlu0 %2162
        %2166 = vset.pattern.permute.xlu0 0
        %2167 = vperm.xlu0 %2166, %v1684
        %v2168 = vpop.permute.xlu0 %2167
        %2171 = vset.pattern.permute.xlu0 0
        %2172 = vperm.xlu0 %2171, %v1685
        %v2173 = vpop.permute.xlu0 %2172
        %2176 = vset.pattern.permute.xlu0 0
        %2177 = vperm.xlu0 %2176, %v1686
        %v2178 = vpop.permute.xlu0 %2177
        %2181 = vset.pattern.permute.xlu0 0
        %2182 = vperm.xlu0 %2181, %v1687
        %v2183 = vpop.permute.xlu0 %2182
        %2186 = vset.pattern.permute.xlu0 0
        %2187 = vperm.xlu0 %2186, %v1688
        %v2188 = vpop.permute.xlu0 %2187
        %2191 = vset.pattern.permute.xlu0 0
        %2192 = vperm.xlu0 %2191, %v1689
        %v2193 = vpop.permute.xlu0 %2192
        %2196 = vset.pattern.permute.xlu0 0
        %2197 = vperm.xlu0 %2196, %v1690
        %v2198 = vpop.permute.xlu0 %2197
        %2201 = vset.pattern.permute.xlu0 0
        %2202 = vperm.xlu0 %2201, %v1691
        %v2203 = vpop.permute.xlu0 %2202
        %2206 = vset.pattern.permute.xlu0 0
        %2207 = vperm.xlu0 %2206, %v1692
        %v2208 = vpop.permute.xlu0 %2207
        %2211 = vset.pattern.permute.xlu0 0
        %2212 = vperm.xlu0 %2211, %v1693
        %v2213 = vpop.permute.xlu0 %2212
        %2216 = vset.pattern.permute.xlu0 0
        %2217 = vperm.xlu0 %2216, %v1694
        %v2218 = vpop.permute.xlu0 %2217
        %2221 = vset.pattern.permute.xlu0 0
        %2222 = vperm.xlu0 %2221, %v1695
        %v2223 = vpop.permute.xlu0 %2222
        %2226 = vset.pattern.permute.xlu0 0
        %2227 = vperm.xlu0 %2226, %v1696
        %v2228 = vpop.permute.xlu0 %2227
        %2231 = vset.pattern.permute.xlu0 0
        %2232 = vperm.xlu0 %2231, %v1697
        %v2233 = vpop.permute.xlu0 %2232
        %2236 = vset.pattern.permute.xlu0 0
        %2237 = vperm.xlu0 %2236, %v1698
        %v2238 = vpop.permute.xlu0 %2237
        %2241 = vset.pattern.permute.xlu0 0
        %2242 = vperm.xlu0 %2241, %v1699
        %v2243 = vpop.permute.xlu0 %2242
        %2246 = vset.pattern.permute.xlu0 0
        %2247 = vperm.xlu0 %2246, %v1700
        %v2248 = vpop.permute.xlu0 %2247
        %2251 = vset.pattern.permute.xlu0 0
        %2252 = vperm.xlu0 %2251, %v1701
        %v2253 = vpop.permute.xlu0 %2252
        %2256 = vset.pattern.permute.xlu0 0
        %2257 = vperm.xlu0 %2256, %v1702
        %v2258 = vpop.permute.xlu0 %2257
        %2261 = vset.pattern.permute.xlu0 0
        %2262 = vperm.xlu0 %2261, %v1703
        %v2263 = vpop.permute.xlu0 %2262
        %2266 = vset.pattern.permute.xlu0 0
        %2267 = vperm.xlu0 %2266, %v1704
        %v2268 = vpop.permute.xlu0 %2267
        %2271 = vset.pattern.permute.xlu0 0
        %2272 = vperm.xlu0 %2271, %v1705
        %v2273 = vpop.permute.xlu0 %2272
        %2276 = vset.pattern.permute.xlu0 0
        %2277 = vperm.xlu0 %2276, %v1706
        %v2278 = vpop.permute.xlu0 %2277
        %2281 = vset.pattern.permute.xlu0 0
        %2282 = vperm.xlu0 %2281, %v1707
        %v2283 = vpop.permute.xlu0 %2282
        %2286 = vset.pattern.permute.xlu0 0
        %2287 = vperm.xlu0 %2286, %v1708
        %v2288 = vpop.permute.xlu0 %2287
        %2291 = vset.pattern.permute.xlu0 0
        %2292 = vperm.xlu0 %2291, %v1709
        %v2293 = vpop.permute.xlu0 %2292
        %2296 = vset.pattern.permute.xlu0 0
        %2297 = vperm.xlu0 %2296, %v1710
        %v2298 = vpop.permute.xlu0 %2297
        %2301 = vset.pattern.permute.xlu0 0
        %2302 = vperm.xlu0 %2301, %v1711
        %v2303 = vpop.permute.xlu0 %2302
        %2306 = vset.pattern.permute.xlu0 0
        %2307 = vperm.xlu0 %2306, %v1712
        %v2308 = vpop.permute.xlu0 %2307
        %2311 = vset.pattern.permute.xlu0 0
        %2312 = vperm.xlu0 %2311, %v1713
        %v2313 = vpop.permute.xlu0 %2312
        %2316 = vset.pattern.permute.xlu0 0
        %2317 = vperm.xlu0 %2316, %v1714
        %v2318 = vpop.permute.xlu0 %2317
        %2321 = vset.pattern.permute.xlu0 0
        %2322 = vperm.xlu0 %2321, %v1715
        %v2323 = vpop.permute.xlu0 %2322
        %2326 = vset.pattern.permute.xlu0 0
        %2327 = vperm.xlu0 %2326, %v1716
        %v2328 = vpop.permute.xlu0 %2327
        %2331 = vset.pattern.permute.xlu0 0
        %2332 = vperm.xlu0 %2331, %v1717
        %v2333 = vpop.permute.xlu0 %2332
        %2336 = vset.pattern.permute.xlu0 0
        %2337 = vperm.xlu0 %2336, %v1718
        %v2338 = vpop.permute.xlu0 %2337
        %2341 = vset.pattern.permute.xlu0 0
        %2342 = vperm.xlu0 %2341, %v1719
        %v2343 = vpop.permute.xlu0 %2342
        %2346 = vset.pattern.permute.xlu0 0
        %2347 = vperm.xlu0 %2346, %v1720
        %v2348 = vpop.permute.xlu0 %2347
        %2351 = vset.pattern.permute.xlu0 0
        %2352 = vperm.xlu0 %2351, %v1721
        %v2353 = vpop.permute.xlu0 %2352
        %2356 = vset.pattern.permute.xlu0 0
        %2357 = vperm.xlu0 %2356, %v1722
        %v2358 = vpop.permute.xlu0 %2357
        %2361 = vset.pattern.permute.xlu0 0
        %2362 = vperm.xlu0 %2361, %v1723
        %v2363 = vpop.permute.xlu0 %2362
        %v2365 = vmul.f32 %v1468, %v1728
        %v2366 = vmul.f32 %v1469, %v1733
        %v2367 = vmul.f32 %v1470, %v1738
        %v2368 = vmul.f32 %v1471, %v1743
        %v2369 = vmul.f32 %v1472, %v1748
        %v2370 = vmul.f32 %v1473, %v1753
        %v2371 = vmul.f32 %v1474, %v1758
        %v2372 = vmul.f32 %v1475, %v1763
        %v2373 = vmul.f32 %v1476, %v1768
        %v2374 = vmul.f32 %v1477, %v1773
        %v2375 = vmul.f32 %v1478, %v1778
        %v2376 = vmul.f32 %v1479, %v1783
        %v2377 = vmul.f32 %v1480, %v1788
        %v2378 = vmul.f32 %v1481, %v1793
        %v2379 = vmul.f32 %v1482, %v1798
        %v2380 = vmul.f32 %v1483, %v1803
        %v2381 = vmul.f32 %v1484, %v1808
        %v2382 = vmul.f32 %v1485, %v1813
        %v2383 = vmul.f32 %v1486, %v1818
        %v2384 = vmul.f32 %v1487, %v1823
        %v2385 = vmul.f32 %v1488, %v1828
        %v2386 = vmul.f32 %v1489, %v1833
        %v2387 = vmul.f32 %v1490, %v1838
        %v2388 = vmul.f32 %v1491, %v1843
        %v2389 = vmul.f32 %v1492, %v1848
        %v2390 = vmul.f32 %v1493, %v1853
        %v2391 = vmul.f32 %v1494, %v1858
        %v2392 = vmul.f32 %v1495, %v1863
        %v2393 = vmul.f32 %v1496, %v1868
        %v2394 = vmul.f32 %v1497, %v1873
        %v2395 = vmul.f32 %v1498, %v1878
        %v2396 = vmul.f32 %v1499, %v1883
        %v2397 = vmul.f32 %v1500, %v1888
        %v2398 = vmul.f32 %v1501, %v1893
        %v2399 = vmul.f32 %v1502, %v1898
        %v2400 = vmul.f32 %v1503, %v1903
        %v2401 = vmul.f32 %v1504, %v1908
        %v2402 = vmul.f32 %v1505, %v1913
        %v2403 = vmul.f32 %v1506, %v1918
        %v2404 = vmul.f32 %v1507, %v1923
        %v2405 = vmul.f32 %v1508, %v1928
        %v2406 = vmul.f32 %v1509, %v1933
        %v2407 = vmul.f32 %v1510, %v1938
        %v2408 = vmul.f32 %v1511, %v1943
        %v2409 = vmul.f32 %v1512, %v1948
        %v2410 = vmul.f32 %v1513, %v1953
        %v2411 = vmul.f32 %v1514, %v1958
        %v2412 = vmul.f32 %v1515, %v1963
        %v2413 = vmul.f32 %v1516, %v1968
        %v2414 = vmul.f32 %v1517, %v1973
        %v2415 = vmul.f32 %v1518, %v1978
        %v2416 = vmul.f32 %v1519, %v1983
        %v2417 = vmul.f32 %v1520, %v1988
        %v2418 = vmul.f32 %v1521, %v1993
        %v2419 = vmul.f32 %v1522, %v1998
        %v2420 = vmul.f32 %v1523, %v2003
        %v2421 = vmul.f32 %v1524, %v2008
        %v2422 = vmul.f32 %v1525, %v2013
        %v2423 = vmul.f32 %v1526, %v2018
        %v2424 = vmul.f32 %v1527, %v2023
        %v2425 = vmul.f32 %v1528, %v2028
        %v2426 = vmul.f32 %v1529, %v2033
        %v2427 = vmul.f32 %v1530, %v2038
        %v2428 = vmul.f32 %v1531, %v2043
        %v2429 = vmul.f32 %v1532, %v2048
        %v2430 = vmul.f32 %v1533, %v2053
        %v2431 = vmul.f32 %v1534, %v2058
        %v2432 = vmul.f32 %v1535, %v2063
        %v2433 = vmul.f32 %v1536, %v2068
        %v2434 = vmul.f32 %v1537, %v2073
        %v2435 = vmul.f32 %v1538, %v2078
        %v2436 = vmul.f32 %v1539, %v2083
        %v2437 = vmul.f32 %v1540, %v2088
        %v2438 = vmul.f32 %v1541, %v2093
        %v2439 = vmul.f32 %v1542, %v2098
        %v2440 = vmul.f32 %v1543, %v2103
        %v2441 = vmul.f32 %v1544, %v2108
        %v2442 = vmul.f32 %v1545, %v2113
        %v2443 = vmul.f32 %v1546, %v2118
        %v2444 = vmul.f32 %v1547, %v2123
        %v2445 = vmul.f32 %v1548, %v2128
        %v2446 = vmul.f32 %v1549, %v2133
        %v2447 = vmul.f32 %v1550, %v2138
        %v2448 = vmul.f32 %v1551, %v2143
        %v2449 = vmul.f32 %v1552, %v2148
        %v2450 = vmul.f32 %v1553, %v2153
        %v2451 = vmul.f32 %v1554, %v2158
        %v2452 = vmul.f32 %v1555, %v2163
        %v2453 = vmul.f32 %v1556, %v2168
        %v2454 = vmul.f32 %v1557, %v2173
        %v2455 = vmul.f32 %v1558, %v2178
        %v2456 = vmul.f32 %v1559, %v2183
        %v2457 = vmul.f32 %v1560, %v2188
        %v2458 = vmul.f32 %v1561, %v2193
        %v2459 = vmul.f32 %v1562, %v2198
        %v2460 = vmul.f32 %v1563, %v2203
        %v2461 = vmul.f32 %v1564, %v2208
        %v2462 = vmul.f32 %v1565, %v2213
        %v2463 = vmul.f32 %v1566, %v2218
        %v2464 = vmul.f32 %v1567, %v2223
        %v2465 = vmul.f32 %v1568, %v2228
        %v2466 = vmul.f32 %v1569, %v2233
        %v2467 = vmul.f32 %v1570, %v2238
        %v2468 = vmul.f32 %v1571, %v2243
        %v2469 = vmul.f32 %v1572, %v2248
        %v2470 = vmul.f32 %v1573, %v2253
        %v2471 = vmul.f32 %v1574, %v2258
        %v2472 = vmul.f32 %v1575, %v2263
        %v2473 = vmul.f32 %v1576, %v2268
        %v2474 = vmul.f32 %v1577, %v2273
        %v2475 = vmul.f32 %v1578, %v2278
        %v2476 = vmul.f32 %v1579, %v2283
        %v2477 = vmul.f32 %v1580, %v2288
        %v2478 = vmul.f32 %v1581, %v2293
        %v2479 = vmul.f32 %v1582, %v2298
        %v2480 = vmul.f32 %v1583, %v2303
        %v2481 = vmul.f32 %v1584, %v2308
        %v2482 = vmul.f32 %v1585, %v2313
        %v2483 = vmul.f32 %v1586, %v2318
        %v2484 = vmul.f32 %v1587, %v2323
        %v2485 = vmul.f32 %v1588, %v2328
        %v2486 = vmul.f32 %v1589, %v2333
        %v2487 = vmul.f32 %v1590, %v2338
        %v2488 = vmul.f32 %v1591, %v2343
        %v2489 = vmul.f32 %v1592, %v2348
        %v2490 = vmul.f32 %v1593, %v2353
        %v2491 = vmul.f32 %v1594, %v2358
        %v2492 = vmul.f32 %v1595, %v2363
        %v2493 = vadd.f32 %v2365, %v2366
        %v2494 = vadd.f32 %v2493, %v2367
        %v2495 = vadd.f32 %v2494, %v2368
        %v2496 = vadd.f32 %v2495, %v2369
        %v2497 = vadd.f32 %v2496, %v2370
        %v2498 = vadd.f32 %v2497, %v2371
        %v2499 = vadd.f32 %v2498, %v2372
        %v2500 = vadd.f32 %v2499, %v2373
        %v2501 = vadd.f32 %v2500, %v2374
        %v2502 = vadd.f32 %v2501, %v2375
        %v2503 = vadd.f32 %v2502, %v2376
        %v2504 = vadd.f32 %v2503, %v2377
        %v2505 = vadd.f32 %v2504, %v2378
        %v2506 = vadd.f32 %v2505, %v2379
        %v2507 = vadd.f32 %v2506, %v2380
        %v2508 = vrot.slane %v2507, 4
        %v2509 = vadd.f32 %v2507, %v2508
        %v2510 = vrot.slane %v2509, 2
        %v2511 = vadd.f32 %v2509, %v2510
        %v2512 = vrot.slane %v2511, 1
        %v2513 = vadd.f32 %v2511, %v2512
        %v2514 = vadd.f32 %v2381, %v2382
        %v2515 = vadd.f32 %v2514, %v2383
        %v2516 = vadd.f32 %v2515, %v2384
        %v2517 = vadd.f32 %v2516, %v2385
        %v2518 = vadd.f32 %v2517, %v2386
        %v2519 = vadd.f32 %v2518, %v2387
        %v2520 = vadd.f32 %v2519, %v2388
        %v2521 = vadd.f32 %v2520, %v2389
        %v2522 = vadd.f32 %v2521, %v2390
        %v2523 = vadd.f32 %v2522, %v2391
        %v2524 = vadd.f32 %v2523, %v2392
        %v2525 = vadd.f32 %v2524, %v2393
        %v2526 = vadd.f32 %v2525, %v2394
        %v2527 = vadd.f32 %v2526, %v2395
        %v2528 = vadd.f32 %v2527, %v2396
        %v2529 = vrot.slane %v2528, 4
        %v2530 = vadd.f32 %v2528, %v2529
        %v2531 = vrot.slane %v2530, 2
        %v2532 = vadd.f32 %v2530, %v2531
        %v2533 = vrot.slane %v2532, 1
        %v2534 = vadd.f32 %v2532, %v2533
        %v2535 = vadd.f32 %v2397, %v2398
        %v2536 = vadd.f32 %v2535, %v2399
        %v2537 = vadd.f32 %v2536, %v2400
        %v2538 = vadd.f32 %v2537, %v2401
        %v2539 = vadd.f32 %v2538, %v2402
        %v2540 = vadd.f32 %v2539, %v2403
        %v2541 = vadd.f32 %v2540, %v2404
        %v2542 = vadd.f32 %v2541, %v2405
        %v2543 = vadd.f32 %v2542, %v2406
        %v2544 = vadd.f32 %v2543, %v2407
        %v2545 = vadd.f32 %v2544, %v2408
        %v2546 = vadd.f32 %v2545, %v2409
        %v2547 = vadd.f32 %v2546, %v2410
        %v2548 = vadd.f32 %v2547, %v2411
        %v2549 = vadd.f32 %v2548, %v2412
        %v2550 = vrot.slane %v2549, 4
        %v2551 = vadd.f32 %v2549, %v2550
        %v2552 = vrot.slane %v2551, 2
        %v2553 = vadd.f32 %v2551, %v2552
        %v2554 = vrot.slane %v2553, 1
        %v2555 = vadd.f32 %v2553, %v2554
        %v2556 = vadd.f32 %v2413, %v2414
        %v2557 = vadd.f32 %v2556, %v2415
        %v2558 = vadd.f32 %v2557, %v2416
        %v2559 = vadd.f32 %v2558, %v2417
        %v2560 = vadd.f32 %v2559, %v2418
        %v2561 = vadd.f32 %v2560, %v2419
        %v2562 = vadd.f32 %v2561, %v2420
        %v2563 = vadd.f32 %v2562, %v2421
        %v2564 = vadd.f32 %v2563, %v2422
        %v2565 = vadd.f32 %v2564, %v2423
        %v2566 = vadd.f32 %v2565, %v2424
        %v2567 = vadd.f32 %v2566, %v2425
        %v2568 = vadd.f32 %v2567, %v2426
        %v2569 = vadd.f32 %v2568, %v2427
        %v2570 = vadd.f32 %v2569, %v2428
        %v2571 = vrot.slane %v2570, 4
        %v2572 = vadd.f32 %v2570, %v2571
        %v2573 = vrot.slane %v2572, 2
        %v2574 = vadd.f32 %v2572, %v2573
        %v2575 = vrot.slane %v2574, 1
        %v2576 = vadd.f32 %v2574, %v2575
        %v2577 = vadd.f32 %v2429, %v2430
        %v2578 = vadd.f32 %v2577, %v2431
        %v2579 = vadd.f32 %v2578, %v2432
        %v2580 = vadd.f32 %v2579, %v2433
        %v2581 = vadd.f32 %v2580, %v2434
        %v2582 = vadd.f32 %v2581, %v2435
        %v2583 = vadd.f32 %v2582, %v2436
        %v2584 = vadd.f32 %v2583, %v2437
        %v2585 = vadd.f32 %v2584, %v2438
        %v2586 = vadd.f32 %v2585, %v2439
        %v2587 = vadd.f32 %v2586, %v2440
        %v2588 = vadd.f32 %v2587, %v2441
        %v2589 = vadd.f32 %v2588, %v2442
        %v2590 = vadd.f32 %v2589, %v2443
        %v2591 = vadd.f32 %v2590, %v2444
        %v2592 = vrot.slane %v2591, 4
        %v2593 = vadd.f32 %v2591, %v2592
        %v2594 = vrot.slane %v2593, 2
        %v2595 = vadd.f32 %v2593, %v2594
        %v2596 = vrot.slane %v2595, 1
        %v2597 = vadd.f32 %v2595, %v2596
        %v2598 = vadd.f32 %v2445, %v2446
        %v2599 = vadd.f32 %v2598, %v2447
        %v2600 = vadd.f32 %v2599, %v2448
        %v2601 = vadd.f32 %v2600, %v2449
        %v2602 = vadd.f32 %v2601, %v2450
        %v2603 = vadd.f32 %v2602, %v2451
        %v2604 = vadd.f32 %v2603, %v2452
        %v2605 = vadd.f32 %v2604, %v2453
        %v2606 = vadd.f32 %v2605, %v2454
        %v2607 = vadd.f32 %v2606, %v2455
        %v2608 = vadd.f32 %v2607, %v2456
        %v2609 = vadd.f32 %v2608, %v2457
        %v2610 = vadd.f32 %v2609, %v2458
        %v2611 = vadd.f32 %v2610, %v2459
        %v2612 = vadd.f32 %v2611, %v2460
        %v2613 = vrot.slane %v2612, 4
        %v2614 = vadd.f32 %v2612, %v2613
        %v2615 = vrot.slane %v2614, 2
        %v2616 = vadd.f32 %v2614, %v2615
        %v2617 = vrot.slane %v2616, 1
        %v2618 = vadd.f32 %v2616, %v2617
        %v2619 = vadd.f32 %v2461, %v2462
        %v2620 = vadd.f32 %v2619, %v2463
        %v2621 = vadd.f32 %v2620, %v2464
        %v2622 = vadd.f32 %v2621, %v2465
        %v2623 = vadd.f32 %v2622, %v2466
        %v2624 = vadd.f32 %v2623, %v2467
        %v2625 = vadd.f32 %v2624, %v2468
        %v2626 = vadd.f32 %v2625, %v2469
        %v2627 = vadd.f32 %v2626, %v2470
        %v2628 = vadd.f32 %v2627, %v2471
        %v2629 = vadd.f32 %v2628, %v2472
        %v2630 = vadd.f32 %v2629, %v2473
        %v2631 = vadd.f32 %v2630, %v2474
        %v2632 = vadd.f32 %v2631, %v2475
        %v2633 = vadd.f32 %v2632, %v2476
        %v2634 = vrot.slane %v2633, 4
        %v2635 = vadd.f32 %v2633, %v2634
        %v2636 = vrot.slane %v2635, 2
        %v2637 = vadd.f32 %v2635, %v2636
        %v2638 = vrot.slane %v2637, 1
        %v2639 = vadd.f32 %v2637, %v2638
        %v2640 = vadd.f32 %v2477, %v2478
        %v2641 = vadd.f32 %v2640, %v2479
        %v2642 = vadd.f32 %v2641, %v2480
        %v2643 = vadd.f32 %v2642, %v2481
        %v2644 = vadd.f32 %v2643, %v2482
        %v2645 = vadd.f32 %v2644, %v2483
        %v2646 = vadd.f32 %v2645, %v2484
        %v2647 = vadd.f32 %v2646, %v2485
        %v2648 = vadd.f32 %v2647, %v2486
        %v2649 = vadd.f32 %v2648, %v2487
        %v2650 = vadd.f32 %v2649, %v2488
        %v2651 = vadd.f32 %v2650, %v2489
        %v2652 = vadd.f32 %v2651, %v2490
        %v2653 = vadd.f32 %v2652, %v2491
        %v2654 = vadd.f32 %v2653, %v2492
        %v2655 = vrot.slane %v2654, 4
        %v2656 = vadd.f32 %v2654, %v2655
        %v2657 = vrot.slane %v2656, 2
        %v2658 = vadd.f32 %v2656, %v2657
        %v2659 = vrot.slane %v2658, 1
        %v2660 = vadd.f32 %v2658, %v2659
        %vm2669 = vcmask 1041409
        %v2670 = vsel %vm2669, %v2534, %v2513
        %vm2671 = vcmask 1042434
        %v2672 = vsel %vm2671, %v2555, %v2670
        %vm2673 = vcmask 1043459
        %v2674 = vsel %vm2673, %v2576, %v2672
        %vm2675 = vcmask 1044484
        %v2676 = vsel %vm2675, %v2597, %v2674
        %vm2677 = vcmask 1045509
        %v2678 = vsel %vm2677, %v2618, %v2676
        %vm2679 = vcmask 1046534
        %v2680 = vsel %vm2679, %v2639, %v2678
        %vm2681 = vcmask 1047559
        %v2682 = vsel %vm2681, %v2660, %v2680
        %v2684 = vadd.f32 %v1724, %v2682
        %2685 = vst [vmem:[#allocation2] sm:$0xff] %v2684
        %v2686 = vld [vmem:[#allocation3] sm:$0xff]
        %vm2687 = vcmask 7168
        %v2688 = vsel %vm2687, %v1596, 0.0
        %v2689 = vsel %vm2687, %v1597, 0.0
        %v2690 = vadd.f32 %v2688, %v2689
        %v2691 = vsel %vm2687, %v1598, 0.0
        %v2692 = vadd.f32 %v2690, %v2691
        %v2693 = vsel %vm2687, %v1599, 0.0
        %v2694 = vadd.f32 %v2692, %v2693
        %v2695 = vsel %vm2687, %v1600, 0.0
        %v2696 = vadd.f32 %v2694, %v2695
        %v2697 = vsel %vm2687, %v1601, 0.0
        %v2698 = vadd.f32 %v2696, %v2697
        %v2699 = vsel %vm2687, %v1602, 0.0
        %v2700 = vadd.f32 %v2698, %v2699
        %v2701 = vsel %vm2687, %v1603, 0.0
        %v2702 = vadd.f32 %v2700, %v2701
        %v2703 = vsel %vm2687, %v1604, 0.0
        %v2704 = vadd.f32 %v2702, %v2703
        %v2705 = vsel %vm2687, %v1605, 0.0
        %v2706 = vadd.f32 %v2704, %v2705
        %v2707 = vsel %vm2687, %v1606, 0.0
        %v2708 = vadd.f32 %v2706, %v2707
        %v2709 = vsel %vm2687, %v1607, 0.0
        %v2710 = vadd.f32 %v2708, %v2709
        %v2711 = vsel %vm2687, %v1608, 0.0
        %v2712 = vadd.f32 %v2710, %v2711
        %v2713 = vsel %vm2687, %v1609, 0.0
        %v2714 = vadd.f32 %v2712, %v2713
        %v2715 = vsel %vm2687, %v1610, 0.0
        %v2716 = vadd.f32 %v2714, %v2715
        %v2717 = vsel %vm2687, %v1611, 0.0
        %v2718 = vadd.f32 %v2716, %v2717
        %v2719 = vrot.slane %v2718, 4
        %v2720 = vadd.f32 %v2718, %v2719
        %v2721 = vrot.slane %v2720, 2
        %v2722 = vadd.f32 %v2720, %v2721
        %v2723 = vrot.slane %v2722, 1
        %v2724 = vadd.f32 %v2722, %v2723
        %v2725 = vsel %vm2687, %v1612, 0.0
        %v2726 = vsel %vm2687, %v1613, 0.0
        %v2727 = vadd.f32 %v2725, %v2726
        %v2728 = vsel %vm2687, %v1614, 0.0
        %v2729 = vadd.f32 %v2727, %v2728
        %v2730 = vsel %vm2687, %v1615, 0.0
        %v2731 = vadd.f32 %v2729, %v2730
        %v2732 = vsel %vm2687, %v1616, 0.0
        %v2733 = vadd.f32 %v2731, %v2732
        %v2734 = vsel %vm2687, %v1617, 0.0
        %v2735 = vadd.f32 %v2733, %v2734
        %v2736 = vsel %vm2687, %v1618, 0.0
        %v2737 = vadd.f32 %v2735, %v2736
        %v2738 = vsel %vm2687, %v1619, 0.0
        %v2739 = vadd.f32 %v2737, %v2738
        %v2740 = vsel %vm2687, %v1620, 0.0
        %v2741 = vadd.f32 %v2739, %v2740
        %v2742 = vsel %vm2687, %v1621, 0.0
        %v2743 = vadd.f32 %v2741, %v2742
        %v2744 = vsel %vm2687, %v1622, 0.0
        %v2745 = vadd.f32 %v2743, %v2744
        %v2746 = vsel %vm2687, %v1623, 0.0
        %v2747 = vadd.f32 %v2745, %v2746
        %v2748 = vsel %vm2687, %v1624, 0.0
        %v2749 = vadd.f32 %v2747, %v2748
        %v2750 = vsel %vm2687, %v1625, 0.0
        %v2751 = vadd.f32 %v2749, %v2750
        %v2752 = vsel %vm2687, %v1626, 0.0
        %v2753 = vadd.f32 %v2751, %v2752
        %v2754 = vsel %vm2687, %v1627, 0.0
        %v2755 = vadd.f32 %v2753, %v2754
        %v2756 = vrot.slane %v2755, 4
        %v2757 = vadd.f32 %v2755, %v2756
        %v2758 = vrot.slane %v2757, 2
        %v2759 = vadd.f32 %v2757, %v2758
        %v2760 = vrot.slane %v2759, 1
        %v2761 = vadd.f32 %v2759, %v2760
        %v2762 = vsel %vm2687, %v1628, 0.0
        %v2763 = vsel %vm2687, %v1629, 0.0
        %v2764 = vadd.f32 %v2762, %v2763
        %v2765 = vsel %vm2687, %v1630, 0.0
        %v2766 = vadd.f32 %v2764, %v2765
        %v2767 = vsel %vm2687, %v1631, 0.0
        %v2768 = vadd.f32 %v2766, %v2767
        %v2769 = vsel %vm2687, %v1632, 0.0
        %v2770 = vadd.f32 %v2768, %v2769
        %v2771 = vsel %vm2687, %v1633, 0.0
        %v2772 = vadd.f32 %v2770, %v2771
        %v2773 = vsel %vm2687, %v1634, 0.0
        %v2774 = vadd.f32 %v2772, %v2773
        %v2775 = vsel %vm2687, %v1635, 0.0
        %v2776 = vadd.f32 %v2774, %v2775
        %v2777 = vsel %vm2687, %v1636, 0.0
        %v2778 = vadd.f32 %v2776, %v2777
        %v2779 = vsel %vm2687, %v1637, 0.0
        %v2780 = vadd.f32 %v2778, %v2779
        %v2781 = vsel %vm2687, %v1638, 0.0
        %v2782 = vadd.f32 %v2780, %v2781
        %v2783 = vsel %vm2687, %v1639, 0.0
        %v2784 = vadd.f32 %v2782, %v2783
        %v2785 = vsel %vm2687, %v1640, 0.0
        %v2786 = vadd.f32 %v2784, %v2785
        %v2787 = vsel %vm2687, %v1641, 0.0
        %v2788 = vadd.f32 %v2786, %v2787
        %v2789 = vsel %vm2687, %v1642, 0.0
        %v2790 = vadd.f32 %v2788, %v2789
        %v2791 = vsel %vm2687, %v1643, 0.0
        %v2792 = vadd.f32 %v2790, %v2791
        %v2793 = vrot.slane %v2792, 4
        %v2794 = vadd.f32 %v2792, %v2793
        %v2795 = vrot.slane %v2794, 2
        %v2796 = vadd.f32 %v2794, %v2795
        %v2797 = vrot.slane %v2796, 1
        %v2798 = vadd.f32 %v2796, %v2797
        %v2799 = vsel %vm2687, %v1644, 0.0
        %v2800 = vsel %vm2687, %v1645, 0.0
        %v2801 = vadd.f32 %v2799, %v2800
        %v2802 = vsel %vm2687, %v1646, 0.0
        %v2803 = vadd.f32 %v2801, %v2802
        %v2804 = vsel %vm2687, %v1647, 0.0
        %v2805 = vadd.f32 %v2803, %v2804
        %v2806 = vsel %vm2687, %v1648, 0.0
        %v2807 = vadd.f32 %v2805, %v2806
        %v2808 = vsel %vm2687, %v1649, 0.0
        %v2809 = vadd.f32 %v2807, %v2808
        %v2810 = vsel %vm2687, %v1650, 0.0
        %v2811 = vadd.f32 %v2809, %v2810
        %v2812 = vsel %vm2687, %v1651, 0.0
        %v2813 = vadd.f32 %v2811, %v2812
        %v2814 = vsel %vm2687, %v1652, 0.0
        %v2815 = vadd.f32 %v2813, %v2814
        %v2816 = vsel %vm2687, %v1653, 0.0
        %v2817 = vadd.f32 %v2815, %v2816
        %v2818 = vsel %vm2687, %v1654, 0.0
        %v2819 = vadd.f32 %v2817, %v2818
        %v2820 = vsel %vm2687, %v1655, 0.0
        %v2821 = vadd.f32 %v2819, %v2820
        %v2822 = vsel %vm2687, %v1656, 0.0
        %v2823 = vadd.f32 %v2821, %v2822
        %v2824 = vsel %vm2687, %v1657, 0.0
        %v2825 = vadd.f32 %v2823, %v2824
        %v2826 = vsel %vm2687, %v1658, 0.0
        %v2827 = vadd.f32 %v2825, %v2826
        %v2828 = vsel %vm2687, %v1659, 0.0
        %v2829 = vadd.f32 %v2827, %v2828
        %v2830 = vrot.slane %v2829, 4
        %v2831 = vadd.f32 %v2829, %v2830
        %v2832 = vrot.slane %v2831, 2
        %v2833 = vadd.f32 %v2831, %v2832
        %v2834 = vrot.slane %v2833, 1
        %v2835 = vadd.f32 %v2833, %v2834
        %v2836 = vsel %vm2687, %v1660, 0.0
        %v2837 = vsel %vm2687, %v1661, 0.0
        %v2838 = vadd.f32 %v2836, %v2837
        %v2839 = vsel %vm2687, %v1662, 0.0
        %v2840 = vadd.f32 %v2838, %v2839
        %v2841 = vsel %vm2687, %v1663, 0.0
        %v2842 = vadd.f32 %v2840, %v2841
        %v2843 = vsel %vm2687, %v1664, 0.0
        %v2844 = vadd.f32 %v2842, %v2843
        %v2845 = vsel %vm2687, %v1665, 0.0
        %v2846 = vadd.f32 %v2844, %v2845
        %v2847 = vsel %vm2687, %v1666, 0.0
        %v2848 = vadd.f32 %v2846, %v2847
        %v2849 = vsel %vm2687, %v1667, 0.0
        %v2850 = vadd.f32 %v2848, %v2849
        %v2851 = vsel %vm2687, %v1668, 0.0
        %v2852 = vadd.f32 %v2850, %v2851
        %v2853 = vsel %vm2687, %v1669, 0.0
        %v2854 = vadd.f32 %v2852, %v2853
        %v2855 = vsel %vm2687, %v1670, 0.0
        %v2856 = vadd.f32 %v2854, %v2855
        %v2857 = vsel %vm2687, %v1671, 0.0
        %v2858 = vadd.f32 %v2856, %v2857
        %v2859 = vsel %vm2687, %v1672, 0.0
        %v2860 = vadd.f32 %v2858, %v2859
        %v2861 = vsel %vm2687, %v1673, 0.0
        %v2862 = vadd.f32 %v2860, %v2861
        %v2863 = vsel %vm2687, %v1674, 0.0
        %v2864 = vadd.f32 %v2862, %v2863
        %v2865 = vsel %vm2687, %v1675, 0.0
        %v2866 = vadd.f32 %v2864, %v2865
        %v2867 = vrot.slane %v2866, 4
        %v2868 = vadd.f32 %v2866, %v2867
        %v2869 = vrot.slane %v2868, 2
        %v2870 = vadd.f32 %v2868, %v2869
        %v2871 = vrot.slane %v2870, 1
        %v2872 = vadd.f32 %v2870, %v2871
        %v2873 = vsel %vm2687, %v1676, 0.0
        %v2874 = vsel %vm2687, %v1677, 0.0
        %v2875 = vadd.f32 %v2873, %v2874
        %v2876 = vsel %vm2687, %v1678, 0.0
        %v2877 = vadd.f32 %v2875, %v2876
        %v2878 = vsel %vm2687, %v1679, 0.0
        %v2879 = vadd.f32 %v2877, %v2878
        %v2880 = vsel %vm2687, %v1680, 0.0
        %v2881 = vadd.f32 %v2879, %v2880
        %v2882 = vsel %vm2687, %v1681, 0.0
        %v2883 = vadd.f32 %v2881, %v2882
        %v2884 = vsel %vm2687, %v1682, 0.0
        %v2885 = vadd.f32 %v2883, %v2884
        %v2886 = vsel %vm2687, %v1683, 0.0
        %v2887 = vadd.f32 %v2885, %v2886
        %v2888 = vsel %vm2687, %v1684, 0.0
        %v2889 = vadd.f32 %v2887, %v2888
        %v2890 = vsel %vm2687, %v1685, 0.0
        %v2891 = vadd.f32 %v2889, %v2890
        %v2892 = vsel %vm2687, %v1686, 0.0
        %v2893 = vadd.f32 %v2891, %v2892
        %v2894 = vsel %vm2687, %v1687, 0.0
        %v2895 = vadd.f32 %v2893, %v2894
        %v2896 = vsel %vm2687, %v1688, 0.0
        %v2897 = vadd.f32 %v2895, %v2896
        %v2898 = vsel %vm2687, %v1689, 0.0
        %v2899 = vadd.f32 %v2897, %v2898
        %v2900 = vsel %vm2687, %v1690, 0.0
        %v2901 = vadd.f32 %v2899, %v2900
        %v2902 = vsel %vm2687, %v1691, 0.0
        %v2903 = vadd.f32 %v2901, %v2902
        %v2904 = vrot.slane %v2903, 4
        %v2905 = vadd.f32 %v2903, %v2904
        %v2906 = vrot.slane %v2905, 2
        %v2907 = vadd.f32 %v2905, %v2906
        %v2908 = vrot.slane %v2907, 1
        %v2909 = vadd.f32 %v2907, %v2908
        %v2910 = vsel %vm2687, %v1692, 0.0
        %v2911 = vsel %vm2687, %v1693, 0.0
        %v2912 = vadd.f32 %v2910, %v2911
        %v2913 = vsel %vm2687, %v1694, 0.0
        %v2914 = vadd.f32 %v2912, %v2913
        %v2915 = vsel %vm2687, %v1695, 0.0
        %v2916 = vadd.f32 %v2914, %v2915
        %v2917 = vsel %vm2687, %v1696, 0.0
        %v2918 = vadd.f32 %v2916, %v2917
        %v2919 = vsel %vm2687, %v1697, 0.0
        %v2920 = vadd.f32 %v2918, %v2919
        %v2921 = vsel %vm2687, %v1698, 0.0
        %v2922 = vadd.f32 %v2920, %v2921
        %v2923 = vsel %vm2687, %v1699, 0.0
        %v2924 = vadd.f32 %v2922, %v2923
        %v2925 = vsel %vm2687, %v1700, 0.0
        %v2926 = vadd.f32 %v2924, %v2925
        %v2927 = vsel %vm2687, %v1701, 0.0
        %v2928 = vadd.f32 %v2926, %v2927
        %v2929 = vsel %vm2687, %v1702, 0.0
        %v2930 = vadd.f32 %v2928, %v2929
        %v2931 = vsel %vm2687, %v1703, 0.0
        %v2932 = vadd.f32 %v2930, %v2931
        %v2933 = vsel %vm2687, %v1704, 0.0
        %v2934 = vadd.f32 %v2932, %v2933
        %v2935 = vsel %vm2687, %v1705, 0.0
        %v2936 = vadd.f32 %v2934, %v2935
        %v2937 = vsel %vm2687, %v1706, 0.0
        %v2938 = vadd.f32 %v2936, %v2937
        %v2939 = vsel %vm2687, %v1707, 0.0
        %v2940 = vadd.f32 %v2938, %v2939
        %v2941 = vrot.slane %v2940, 4
        %v2942 = vadd.f32 %v2940, %v2941
        %v2943 = vrot.slane %v2942, 2
        %v2944 = vadd.f32 %v2942, %v2943
        %v2945 = vrot.slane %v2944, 1
        %v2946 = vadd.f32 %v2944, %v2945
        %v2947 = vsel %vm2687, %v1708, 0.0
        %v2948 = vsel %vm2687, %v1709, 0.0
        %v2949 = vadd.f32 %v2947, %v2948
        %v2950 = vsel %vm2687, %v1710, 0.0
        %v2951 = vadd.f32 %v2949, %v2950
        %v2952 = vsel %vm2687, %v1711, 0.0
        %v2953 = vadd.f32 %v2951, %v2952
        %v2954 = vsel %vm2687, %v1712, 0.0
        %v2955 = vadd.f32 %v2953, %v2954
        %v2956 = vsel %vm2687, %v1713, 0.0
        %v2957 = vadd.f32 %v2955, %v2956
        %v2958 = vsel %vm2687, %v1714, 0.0
        %v2959 = vadd.f32 %v2957, %v2958
        %v2960 = vsel %vm2687, %v1715, 0.0
        %v2961 = vadd.f32 %v2959, %v2960
        %v2962 = vsel %vm2687, %v1716, 0.0
        %v2963 = vadd.f32 %v2961, %v2962
        %v2964 = vsel %vm2687, %v1717, 0.0
        %v2965 = vadd.f32 %v2963, %v2964
        %v2966 = vsel %vm2687, %v1718, 0.0
        %v2967 = vadd.f32 %v2965, %v2966
        %v2968 = vsel %vm2687, %v1719, 0.0
        %v2969 = vadd.f32 %v2967, %v2968
        %v2970 = vsel %vm2687, %v1720, 0.0
        %v2971 = vadd.f32 %v2969, %v2970
        %v2972 = vsel %vm2687, %v1721, 0.0
        %v2973 = vadd.f32 %v2971, %v2972
        %v2974 = vsel %vm2687, %v1722, 0.0
        %v2975 = vadd.f32 %v2973, %v2974
        %v2976 = vsel %vm2687, %v1723, 0.0
        %v2977 = vadd.f32 %v2975, %v2976
        %v2978 = vrot.slane %v2977, 4
        %v2979 = vadd.f32 %v2977, %v2978
        %v2980 = vrot.slane %v2979, 2
        %v2981 = vadd.f32 %v2979, %v2980
        %v2982 = vrot.slane %v2981, 1
        %v2983 = vadd.f32 %v2981, %v2982
        %v2992 = vsel %vm2669, %v2761, %v2724
        %v2993 = vsel %vm2671, %v2798, %v2992
        %v2994 = vsel %vm2673, %v2835, %v2993
        %v2995 = vsel %vm2675, %v2872, %v2994
        %v2996 = vsel %vm2677, %v2909, %v2995
        %v2997 = vsel %vm2679, %v2946, %v2996
        %v2998 = vsel %vm2681, %v2983, %v2997
        %v3000 = vadd.f32 %v2686, %v2998
        %3001 = vst.msk [vmem:[#allocation3] sm:$0xff] %vm2687, %v3000
        %p3002 = scmp.eq.s32.totalorder %s31, 1
        // Predicated region
        $region125: #{tpu_custom_call.1} parent=107 // pred_check
          %p3003 = pneg %p3002
        $region126: #{tpu_custom_call.1} parent=107 // pred_check_branch
          %3005 = sbr.rel (%p3003) target = $region128
        $region127: #{tpu_custom_call.1} parent=107 // pred_region
          %v3006 = vld [vmem:[#allocation3] sm:$0xff]
          %v3007 = vmax.f32 %v3006, 1e-09
          %v3008 = vrcp.pop %v3007
          %v3009 = vld [vmem:[#allocation2] sm:$0xff]
          %3011 = vset.pattern.permute.xlu0 0
          %3012 = vperm.xlu0 %3011, %v3008
          %v3013 = vpop.permute.xlu0 %3012
          %v3015 = vmul.f32 %v3009, %v3013
          %v3016 = vmul.f32 %v3015, %v3015
          %3017 = vadd.xlane.f32.xlu0 %v3016
          %v3018 = vpop.xlane.xlu0 %3017
          %v3019 = vmax.f32 %v3018, 1e-24
          %v3020 = vrsqrt.pop %v3019
          %v3021 = vmul.f32 %v3015, %v3020
          %3022 = vst [vmem:[%s1445] sm:$0xff] %v3021
          %v3023 = vld [vmem:[#allocation6] sm:$0xff]
          %v3024 = vld [vmem:[#allocation6 + $0x8] sm:$0xff]
          %v3025 = vld [vmem:[#allocation6 + $0x10] sm:$0xff]
          %v3026 = vld [vmem:[#allocation6 + $0x18] sm:$0xff]
          %v3027 = vld [vmem:[#allocation6 + $0x20] sm:$0xff]
          %v3028 = vld [vmem:[#allocation6 + $0x28] sm:$0xff]
          %v3029 = vld [vmem:[#allocation6 + $0x30] sm:$0xff]
          %v3030 = vld [vmem:[#allocation6 + $0x38] sm:$0xff]
          %v3031 = vld [vmem:[#allocation6 + $0x40] sm:$0xff]
          %v3032 = vld [vmem:[#allocation6 + $0x48] sm:$0xff]
          %v3033 = vld [vmem:[#allocation6 + $0x50] sm:$0xff]
          %v3034 = vld [vmem:[#allocation6 + $0x58] sm:$0xff]
          %v3035 = vld [vmem:[#allocation6 + $0x60] sm:$0xff]
          %v3036 = vld [vmem:[#allocation6 + $0x68] sm:$0xff]
          %v3037 = vld [vmem:[#allocation6 + $0x70] sm:$0xff]
          %v3038 = vld [vmem:[#allocation6 + $0x78] sm:$0xff]
          %v3039 = vld [vmem:[%s4] sm:$0x1]
          %v3041 = vlaneseq
          %v3042 = vshrl.u32 %v3041, 7
          %v3043 = vsub.s32 0, %v3042
          %v3044 = vrot.slane %v3039, %v3043
          %3046 = vmatprep.subr.mxu0 0.0
          %3047 = vmatpush1.msra.mxu0 %v3038
          %3048 = vmatprep.subr.mxu0 0.0
          %3049 = vmatpush1.msra.mxu0 %v3037
          %3050 = vmatprep.subr.mxu0 0.0
          %3051 = vmatpush1.msra.mxu0 %v3036
          %3052 = vmatprep.subr.mxu0 0.0
          %3053 = vmatpush1.msra.mxu0 %v3035
          %3054 = vmatprep.subr.mxu0 0.0
          %3055 = vmatpush1.msra.mxu0 %v3034
          %3056 = vmatprep.subr.mxu0 0.0
          %3057 = vmatpush1.msra.mxu0 %v3033
          %3058 = vmatprep.subr.mxu0 0.0
          %3059 = vmatpush1.msra.mxu0 %v3032
          %3060 = vmatprep.subr.mxu0 0.0
          %3061 = vmatpush1.msra.mxu0 %v3031
          %3062 = vmatprep.subr.mxu0 0.0
          %3063 = vmatpush1.msra.mxu0 %v3030
          %3064 = vmatprep.subr.mxu0 0.0
          %3065 = vmatpush1.msra.mxu0 %v3029
          %3066 = vmatprep.subr.mxu0 0.0
          %3067 = vmatpush1.msra.mxu0 %v3028
          %3068 = vmatprep.subr.mxu0 0.0
          %3069 = vmatpush1.msra.mxu0 %v3027
          %3070 = vmatprep.subr.mxu0 0.0
          %3071 = vmatpush1.msra.mxu0 %v3026
          %3072 = vmatprep.subr.mxu0 0.0
          %3073 = vmatpush1.msra.mxu0 %v3025
          %3074 = vmatprep.subr.mxu0 0.0
          %3075 = vmatpush1.msra.mxu0 %v3024
          %3076 = vmatprep.subr.mxu0 0.0
          %3077 = vmatpush1.msra.mxu0 %v3023
          %3078 = vmatprep.subr.mxu0 0.0
          %3079 = vmatpush2.msra.mxu0 0.0
          %3080 = vmatprep.subr.mxu0 0.0
          %3081 = vmatpush2.msra.mxu0 0.0
          %3082 = vmatprep.subr.mxu0 0.0
          %3083 = vmatpush2.msra.mxu0 0.0
          %3084 = vmatprep.subr.mxu0 0.0
          %3085 = vmatpush2.msra.mxu0 0.0
          %3086 = vmatprep.subr.mxu0 0.0
          %3087 = vmatpush2.msra.mxu0 0.0
          %3088 = vmatprep.subr.mxu0 0.0
          %3089 = vmatpush2.msra.mxu0 0.0
          %3090 = vmatprep.subr.mxu0 0.0
          %3091 = vmatpush2.msra.mxu0 0.0
          %3092 = vmatprep.subr.mxu0 0.0
          %3093 = vmatpush2.msra.mxu0 0.0
          %3094 = vmatprep.subr.mxu0 0.0
          %3095 = vmatpush2.msra.mxu0 0.0
          %3096 = vmatprep.subr.mxu0 0.0
          %3097 = vmatpush2.msra.mxu0 0.0
          %3098 = vmatprep.subr.mxu0 0.0
          %3099 = vmatpush2.msra.mxu0 0.0
          %3100 = vmatprep.subr.mxu0 0.0
          %3101 = vmatpush2.msra.mxu0 0.0
          %3102 = vmatprep.subr.mxu0 0.0
          %3103 = vmatpush2.msra.mxu0 0.0
          %3104 = vmatprep.subr.mxu0 0.0
          %3105 = vmatpush2.msra.mxu0 0.0
          %3106 = vmatprep.subr.mxu0 0.0
          %3107 = vmatpush2.msra.mxu0 0.0
          %3108 = vmatprep.subr.mxu0 0.0
          %3109 = vmatpush2.msra.mxu0 0.0
          %3110 = vmatprep.mubr.f32.mxu0 0.0
          %3111 = vmatmul.mubr.f32.gmra.mxu0 %v3021
          %v3112 = vpop.f32.mrf.mxu0
          %v3113 = vadd.f32 %v3044, %v3112
          %v3114 = vpop.f32.mrf.mxu0
          %3115 = vdwg.mxu0
          %3116 = vst [vmem:[%s1438] sm:$0xff] %v3113
          %v3117 = vld [vmem:[%s1460] sm:$0xff]
          %v3118 = vlaneseq
          %v3119 = vand.u32 %v3118, 127
          %3120 = vset.pattern.permute.xlu0 0
          %3121 = vperm.xlu0 %3120, %v3117
          %v3122 = vpop.permute.xlu0 %3121
          %vm3123 = vcmp.eq.s32.totalorder %v3122, %v3119
          %v3124 = vsel %vm3123, 1, 0
          %v3125 = vcvt.s32.f32 %v3124
          %3126 = vmax.xlane.f32.xlu0 %v3113
          %v3127 = vpop.xlane.xlu0 %3126
          %v3128 = vsub.f32 %v3113, %v3127
          %v3129 = vmul.f32 %v3128, 1.442695
          %v3130 = vpow.pop %v3129
          %3131 = vadd.xlane.f32.xlu0 %v3130
          %v3132 = vpop.xlane.xlu0 %3131
          %v3133 = vlog2.pop %v3132
          %v3134 = vmul.f32 %v3133, 0.6931472
          %v3135 = vadd.f32 %v3127, %v3134
          %v3136 = vmul.f32 %v3125, %v3113
          %3137 = vadd.xlane.f32.xlu0 %v3136
          %v3138 = vpop.xlane.xlu0 %3137
          %v3139 = vsub.f32 %v3135, %v3138
          %3140 = vst [vmem:[%s1452] sm:$0xff] %v3139
        $region128: #{tpu_custom_call.1} parent=107 // pred_fallthru
          _
        %s3141 = sand.u32 %s170, 1
        %s3142 = scalar_lea.sflag [#allocation8], %s3141
        %s3143 = sand.u32 %s170, 1
        %s3144 = smul.addr %s3143, 8
        %s3145 = scalar_lea.vmem [#allocation9], %s3144
        %s3146 = sand.u32 %s26, 1
        %s3147 = scalar_lea.sflag [#allocation11], %s3146
        %s3148 = sand.u32 %s196, 1
        %s3149 = smul.addr %s3148, 8
        %s3150 = scalar_lea.vmem [#allocation10], %s3149
        %s3151 = sand.u32 %s26, 1
        %s3152 = scalar_lea.sflag [#allocation11], %s3151
        %s3153 = sand.u32 %s222, 1
        %s3154 = smul.addr %s3153, 8
        %s3155 = scalar_lea.vmem [#allocation12], %s3154
        // Predicated region
        $region129: #{tpu_custom_call.1} parent=107 // pred_check
          %p3156 = pneg %p180
        $region130: #{tpu_custom_call.1} parent=107 // pred_check_branch
          %3158 = sbr.rel (%p3156) target = $region132
        $region131: #{tpu_custom_call.1} parent=107 // pred_region
          %s3160 = ssub.s32 128, 128
          %3161 = vsyncadd %s3142, %s3160
          %s3162 = smul.addr %s30, 128
          %s3163 = scalar_lea.hbm %s5, %s3162
          %s3165 = sshll.u32 %s3145, 4
          %s3166 = int_to_ptr.vmem [resolvable:$true] %s3165
          %3168 = dma.vmem_to_hbm [thread:$0]  %s3166, 128, %s3163, %s3142
        $region132: #{tpu_custom_call.1} parent=107 // pred_fallthru
          _
        // Predicated region
        $region133: #{tpu_custom_call.1} parent=107 // pred_check
          %p3169 = pneg %p206
        $region134: #{tpu_custom_call.1} parent=107 // pred_check_branch
          %3171 = sbr.rel (%p3169) target = $region136
        $region135: #{tpu_custom_call.1} parent=107 // pred_region
          %s3173 = ssub.s32 128, 128
          %3174 = vsyncadd %s3147, %s3173
          %s3175 = smul.addr %s30, 128
          %s3176 = scalar_lea.hbm %s6, %s3175
          %s3178 = sshll.u32 %s3150, 4
          %s3179 = int_to_ptr.vmem [resolvable:$true] %s3178
          %3181 = dma.vmem_to_hbm [thread:$0]  %s3179, 128, %s3176, %s3147
        $region136: #{tpu_custom_call.1} parent=107 // pred_fallthru
          _
        // Predicated region
        $region137: #{tpu_custom_call.1} parent=107 // pred_check
          %p3182 = pneg %p232
        $region138: #{tpu_custom_call.1} parent=107 // pred_check_branch
          %3184 = sbr.rel (%p3182) target = $region140
        $region139: #{tpu_custom_call.1} parent=107 // pred_region
          %s3186 = ssub.s32 128, 128
          %3187 = vsyncadd %s3152, %s3186
          %s3188 = smul.addr %s30, 128
          %s3189 = scalar_lea.hbm %s7, %s3188
          %s3191 = sshll.u32 %s3155, 4
          %s3192 = int_to_ptr.vmem [resolvable:$true] %s3191
          %3194 = dma.vmem_to_hbm [thread:$0]  %s3192, 128, %s3189, %s3152
        $region140: #{tpu_custom_call.1} parent=107 // pred_fallthru
          _
      $region108: #{tpu_custom_call.1} parent=5 // pred_fallthru
        _
      %p3195 = scmp.le.s32.totalorder 2, %s21
      // Predicated region
      $region141: #{tpu_custom_call.1} parent=5 // pred_check
        %p3196 = pneg %p3195
      $region142: #{tpu_custom_call.1} parent=5 // pred_check_branch
        %3198 = sbr.rel (%p3196) target = $region144
      $region143: #{tpu_custom_call.1} parent=5 // pred_region
        %s3199 = ssub.s32 %s21, 2
        // Predicated region
        $region145: #{tpu_custom_call.1} parent=143 // pred_check
          %p3200 = pneg %p186
        $region146: #{tpu_custom_call.1} parent=143 // pred_check_branch
          %3202 = sbr.rel (%p3200) target = $region148
        $region147: #{tpu_custom_call.1} parent=143 // pred_region
          %s3203 = sand.u32 %s171, 1
          %s3204 = scalar_lea.sflag [#allocation8], %s3203
          %s3205 = sand.u32 %s171, 1
          %s3206 = smul.addr %s3205, 8
          %s3207 = scalar_lea.vmem [#allocation9], %s3206
          %3208 = dma.done %s3204, 128
        $region148: #{tpu_custom_call.1} parent=143 // pred_fallthru
          _
        // Predicated region
        $region149: #{tpu_custom_call.1} parent=143 // pred_check
          %p3209 = pneg %p212
        $region150: #{tpu_custom_call.1} parent=143 // pred_check_branch
          %3211 = sbr.rel (%p3209) target = $region152
        $region151: #{tpu_custom_call.1} parent=143 // pred_region
          %s3212 = sand.u32 %s27, 1
          %s3213 = scalar_lea.sflag [#allocation11], %s3212
          %s3214 = sand.u32 %s197, 1
          %s3215 = smul.addr %s3214, 8
          %s3216 = scalar_lea.vmem [#allocation10], %s3215
          %3217 = dma.done %s3213, 128
        $region152: #{tpu_custom_call.1} parent=143 // pred_fallthru
          _
        // Predicated region
        $region153: #{tpu_custom_call.1} parent=143 // pred_check
          %p3218 = pneg %p238
        $region154: #{tpu_custom_call.1} parent=143 // pred_check_branch
          %3220 = sbr.rel (%p3218) target = $region156
        $region155: #{tpu_custom_call.1} parent=143 // pred_region
          %s3221 = sand.u32 %s27, 1
          %s3222 = scalar_lea.sflag [#allocation11], %s3221
          %s3223 = sand.u32 %s223, 1
          %s3224 = smul.addr %s3223, 8
          %s3225 = scalar_lea.vmem [#allocation12], %s3224
          %3226 = dma.done %s3222, 128
        $region156: #{tpu_custom_call.1} parent=143 // pred_fallthru
          _
      $region144: #{tpu_custom_call.1} parent=5 // pred_fallthru
        _
    $region6: #{tpu_custom_call.1} parent=1 // loop_footer
      %s25 = sadd.s32 1, %s21
    $region7: #{tpu_custom_call.1} parent=1 // loop_footer_branch
      %20 = sbr.rel target = $region3
    $region8: #{tpu_custom_call.1} parent=1 // loop_exit
      _
    %3227 = vsyncpa [#allocation7], 1
    %s3228 = scalar_lea.sflag [#allocation7], 1
    %3229 = vsyncpa %s3228, 1
    %3230 = vsyncpa [#allocation8], 1
    %s3231 = scalar_lea.sflag [#allocation8], 1
    %3232 = vsyncpa %s3231, 1
    %3233 = vsyncpa [#allocation11], 1
    %s3234 = scalar_lea.sflag [#allocation11], 1
    %3235 = vsyncpa %s3234, 1

</llo_original>
